<compile_context>
chip_gen: v7x
topology: tpu7x:2x2x1
jax: 0.10.0
libtpu: 0.0.40
codegen_flags: <defaults>
</compile_context>

<pallas_src>
import jax
import jax.numpy as jnp
from jax.experimental import pallas as pl
from jax.experimental.pallas import tpu as pltpu


def _round_up(v, m):
    return ((v + m - 1) // m) * m


# ----------------------------------------------------------------------------
# Pallas kernel:  out = finalize( dinv ⊙ ( (A+I) @ (dinv ⊙ X W^T) ) + b )
# ----------------------------------------------------------------------------
def _graph_embedder_kernel(hs_ref, adj_ref, dinv_ref, b_ref, wp_ref, out_ref):
    # hs_ref:   (TK, Dp)  bf16  dinv[src]-scaled projected features (dinv * X@W.T)
    # adj_ref:  (TM, TK)  bf16  raw (A + I)[target, source] tile (dominant stream)
    # dinv_ref: (TM, 1)   f32   D^-1/2 for the destination rows of this tile
    # b_ref:    (1, Dp)   f32   GCN bias (zero padded)
    # wp_ref:   (1, Dp)   f32   pooling weight / ||weight|| (zero padded)
    # out_ref:  (TM, Dp)  f32   output slab; doubles as the accumulator (its
    #                           index_map ignores k, so it stays resident)
    k = pl.program_id(1)

    @pl.when(k == 0)
    def _():
        out_ref[...] = jnp.zeros_like(out_ref)

    # bf16 x bf16 on the MXU, f32 accumulation directly into the output block.
    out_ref[...] += jnp.dot(adj_ref[...], hs_ref[...],
                            preferred_element_type=jnp.float32)

    @pl.when(k == pl.num_programs(1) - 1)
    def _():
        m = dinv_ref[...] * out_ref[...] + b_ref[...]     # finish A_hat @ h + b
        r = jnp.maximum(m, 0.0)                           # ReLU(GCN)
        s = jnp.tanh(jnp.sum(r * wp_ref[...], axis=-1, keepdims=True))  # score
        lane = jax.lax.broadcasted_iota(jnp.int32, r.shape, 1)
        # lane-dense store: feature columns scaled by score, score in last lane
        out_ref[...] = jnp.where(lane == r.shape[-1] - 1, s, r * s)


def _pick_tiles(n_pad):
    # n_pad is always a multiple of 1024, so TM=512 divides evenly and the
    # number of row tiles is even (v7x megacore balance).
    tm = 512
    tk = next(c for c in (4096, 2048, 1024) if n_pad % c == 0)
    return min(tm, n_pad), min(tk, n_pad)


def _run_kernel(h_scaled, adj_bf16, dinv, b, wp, tm, tk):
    n_pad = adj_bf16.shape[0]
    d_pad = h_scaled.shape[1]
    grid = (n_pad // tm, n_pad // tk)

    cost = pl.CostEstimate(
        flops=2 * n_pad * n_pad * d_pad,
        transcendentals=n_pad,
        bytes_accessed=n_pad * n_pad * 2                      # adj stream (bf16)
        + grid[0] * n_pad * d_pad * 2                         # h stream per row tile
        + n_pad * d_pad * 4,                                  # output slab
    )

    return pl.pallas_call(
        _graph_embedder_kernel,
        out_shape=jax.ShapeDtypeStruct((n_pad, d_pad), jnp.float32),
        grid_spec=pltpu.PrefetchScalarGridSpec(
            num_scalar_prefetch=0,
            grid=grid,
            in_specs=[
                pl.BlockSpec((tk, d_pad), lambda i, k: (k, 0)),   # dinv-scaled h
                pl.BlockSpec((tm, tk), lambda i, k: (i, k)),      # raw (A+I) bf16
                pl.BlockSpec((tm, 1), lambda i, k: (i, 0)),       # dinv (dst rows)
                pl.BlockSpec((1, d_pad), lambda i, k: (0, 0)),    # bias (resident)
                pl.BlockSpec((1, d_pad), lambda i, k: (0, 0)),    # w_pool (resident)
            ],
            out_specs=pl.BlockSpec((tm, d_pad), lambda i, k: (i, 0)),
        ),
        compiler_params=pltpu.CompilerParams(
            dimension_semantics=("parallel", "arbitrary"),
            vmem_limit_bytes=32 * 1024 * 1024,
        ),
        cost_estimate=cost,
    )(h_scaled, adj_bf16, dinv, b, wp)


# ----------------------------------------------------------------------------
# JAX glue: O(E) degrees, raw dense (A+I) scatter (bf16), tiny projection,
# padding, and the data-dependent top-k selection.
# ----------------------------------------------------------------------------
def _edge_glue(edge_index, edge_weight, num_nodes, n_pad):
    """O(E) degree/loop weights + dense RAW (A+I)[dst, src] scattered in bf16."""
    src = edge_index[0]
    dst = edge_index[1]
    ew = edge_weight.astype(jnp.float32)
    is_loop = src == dst
    nonloop_w = jnp.where(is_loop, 0.0, ew)

    # add_remaining_self_loops: ALL existing self-loop edges are kept (their
    # weights sum in propagate); nodes without one get a weight-1.0 loop.
    loop_sum = jnp.zeros((num_nodes,), jnp.float32).at[src].add(
        jnp.where(is_loop, ew, 0.0))
    has_loop = jnp.zeros((num_nodes,), jnp.float32).at[src].add(
        jnp.where(is_loop, 1.0, 0.0)) > 0
    loop_w = jnp.where(has_loop, loop_sum, 1.0)

    # Degrees in O(E) (no dense N^2 reduction pass).
    deg = jnp.zeros((num_nodes,), jnp.float32).at[dst].add(nonloop_w) + loop_w
    dinv = jnp.where(deg > 0, jax.lax.rsqrt(deg), 0.0)
    dinv_pad = jnp.zeros((n_pad, 1), jnp.float32).at[:num_nodes, 0].set(dinv)

    # Single N^2 HBM pass: scatter the raw (A+I) directly as bf16; the D^-1/2
    # normalization happens inside the Pallas kernel.
    # TODO(synk): on v7x/v5e the dominant stream could further drop to fp8/int8
    # with a per-row scale in the finalize; kept bf16 to stay within tolerance.
    adj = jnp.zeros((n_pad, n_pad), jnp.bfloat16)
    adj = adj.at[dst, src].add(nonloop_w.astype(jnp.bfloat16))
    diag = jnp.arange(num_nodes)
    adj = adj.at[diag, diag].add(loop_w.astype(jnp.bfloat16))
    return adj, dinv_pad


def _embed(x, edge_index, edge_attr, params):
    """Returns (scaled_nodes, score) in original node order (before top-k perm)."""
    x = x.astype(jnp.float32)
    n, f = x.shape
    d = params["gcn_weight"].shape[0]
    # Pad N to a multiple of 1024: TM=512 / TK>=1024 always divide (no 128-tile
    # DMA-efficiency fallback) and #row-tiles is even (v7x megacore balance).
    n_pad = _round_up(max(n, 1), 1024)
    d_pad = _round_up(d + 1, 128)        # +1: spare lane stashes the pooling score
    tm, tk = _pick_tiles(n_pad)

    adj, dinv = _edge_glue(edge_index, edge_attr, n, n_pad)

    wt = jnp.zeros((f, d_pad), jnp.float32).at[:, :d].set(
        params["gcn_weight"].T.astype(jnp.float32))
    b = jnp.zeros((1, d_pad), jnp.float32).at[0, :d].set(
        params["gcn_bias"].astype(jnp.float32))
    w_pool = params["pool_weight"].astype(jnp.float32)        # (1, D)
    wp = jnp.zeros((1, d_pad), jnp.float32).at[0, :d].set(
        (w_pool / jnp.linalg.norm(w_pool))[0])

    # Tiny O(N*F*D) projection done ONCE outside the kernel; fold the src-side
    # D^-1/2 factor in here so the kernel only scales destination rows.
    x_pad = jnp.zeros((n_pad, f), jnp.float32).at[:n].set(x)
    h_scaled = (dinv * (x_pad @ wt)).astype(jnp.bfloat16)     # (n_pad, d_pad)

    slab = _run_kernel(h_scaled, adj, dinv, b, wp, tm, tk)
    return slab[:n, :d], slab[:n, d_pad - 1]


def graph_embedder_forward(x, edge_index, edge_attr, params, num_nodes):
    """Mirrors GraphEmbedder.forward(x, edge_list, edge_attr, batch=None)."""
    scaled, score = _embed(x, edge_index, edge_attr, params)
    k = min(num_nodes, x.shape[0])
    # TODO(synk): data-dependent top-k argsort/gather stays in plain JAX (no
    # clean Pallas equivalent on TPU); k == num_nodes so all nodes are kept.
    perm = jnp.argsort(-score)[:k]
    return scaled[perm]


# ----------------------------------------------------------------------------
# Plain-JAX f32 reference (for validation of the fused kernel path)
# ----------------------------------------------------------------------------
def _reference_parts(x, edge_index, edge_attr, params):
    x = x.astype(jnp.float32)
    n = x.shape[0]
    src, dst = edge_index[0], edge_index[1]
    ew = edge_attr.astype(jnp.float32)
    is_loop = src == dst
    adj = jnp.zeros((n, n), jnp.float32).at[dst, src].add(
        jnp.where(is_loop, 0.0, ew))
    loop_sum = jnp.zeros((n,), jnp.float32).at[src].add(jnp.where(is_loop, ew, 0.0))
    has_loop = jnp.zeros((n,), jnp.float32).at[src].add(
        jnp.where(is_loop, 1.0, 0.0)) > 0
    loop_w = jnp.where(has_loop, loop_sum, 1.0)
    diag = jnp.arange(n)
    adj = adj.at[diag, diag].add(loop_w)
    deg = adj.sum(axis=1)
    dinv = jnp.where(deg > 0, jax.lax.rsqrt(deg), 0.0)
    a_hat = adj * dinv[:, None] * dinv[None, :]
    h = x @ params["gcn_weight"].T
    m = a_hat @ h + params["gcn_bias"][None, :]
    r = jnp.maximum(m, 0.0)
    w = params["pool_weight"].astype(jnp.float32)
    s = jnp.tanh(r @ (w / jnp.linalg.norm(w)).T)[:, 0]
    return r * s[:, None], s


# ----------------------------------------------------------------------------
# Deterministic parameter init (shapes from GraphEmbedder.__init__)
# ----------------------------------------------------------------------------
def init_params(key, node_feature_dim, dim):
    k1, k2 = jax.random.split(key)
    # GCNConv linear: glorot-uniform, shape (dim, node_feature_dim); bias zeros.
    a = (6.0 / (node_feature_dim + dim)) ** 0.5
    gcn_w = jax.random.uniform(k1, (dim, node_feature_dim), jnp.float32, -a, a)
    gcn_b = jnp.zeros((dim,), jnp.float32)
    # TopKPooling weight: uniform(-1/sqrt(dim), 1/sqrt(dim)), shape (1, dim).
    bnd = 1.0 / (dim ** 0.5)
    pool_w = jax.random.uniform(k2, (1, dim), jnp.float32, -bnd, bnd)
    return {"gcn_weight": gcn_w, "gcn_bias": gcn_b, "pool_weight": pool_w}


if __name__ == "__main__":
    num_nodes = 8
    node_feature_dim = 16
    dim = 2
    num_edges = 24

    key = jax.random.PRNGKey(0)
    kx, ke, kw, kp = jax.random.split(key, 4)

    x = jax.random.normal(kx, (num_nodes, node_feature_dim), jnp.float32)
    edge_index = jax.random.randint(ke, (2, num_edges), 0, num_nodes, jnp.int32)
    edge_attr = jax.random.uniform(kw, (num_edges,), jnp.float32, 0.1, 1.0)

    params = init_params(kp, node_feature_dim, dim)

    out = graph_embedder_forward(x, edge_index, edge_attr, params, num_nodes)
    out = jax.block_until_ready(out)
    assert out.shape == (num_nodes, dim)
    assert bool(jnp.all(jnp.isfinite(out)))

    # Validate the fused kernel (bf16 adjacency / bf16 h stream, in-kernel
    # normalization) against the f32 reference on unpermuted quantities to
    # avoid tie-order sensitivity.
    scaled, score = _embed(x, edge_index, edge_attr, params)
    ref_scaled, ref_score = _reference_parts(x, edge_index, edge_attr, params)
    assert bool(jnp.allclose(scaled, ref_scaled, rtol=5e-2, atol=5e-2))
    assert bool(jnp.allclose(score, ref_score, rtol=5e-2, atol=5e-2))

    print("KERNEL_OK")
</pallas_src>

<mosaic_0001>
module attributes {stable_mosaic.version = 11 : i64} {
  func.func @_graph_embedder_kernel(%arg0: i32, %arg1: i32, %arg2: memref<1024x128xbf16, #tpu.memory_space<vmem>>, %arg3: memref<512x1024xbf16, #tpu.memory_space<vmem>>, %arg4: memref<512x1xf32, #tpu.memory_space<vmem>>, %arg5: memref<1x128xf32, #tpu.memory_space<vmem>>, %arg6: memref<1x128xf32, #tpu.memory_space<vmem>>, %arg7: memref<512x128xf32, #tpu.memory_space<vmem>>) attributes {dimension_semantics = [#tpu.dimension_semantics<parallel>, #tpu.dimension_semantics<arbitrary>], iteration_bounds = array<i64: 2, 1>, scalar_prefetch = 0 : i64, scratch_operands = 0 : i64, tpu.core_type = #tpu.core_type<tc>, window_params = [{transform_indices = @transform_0, window_bounds = array<i64: 1024, 128>}, {transform_indices = @transform_1, window_bounds = array<i64: 512, 1024>}, {transform_indices = @transform_2, window_bounds = array<i64: 512, 1>}, {pipeline_mode = #tpu.pipeline_mode<synchronous>, transform_indices = @transform_3, window_bounds = array<i64: 1, 128>}, {pipeline_mode = #tpu.pipeline_mode<synchronous>, transform_indices = @transform_4, window_bounds = array<i64: 1, 128>}, {transform_indices = @transform_5, window_bounds = array<i64: 512, 128>}]} {
    %c0_i32 = arith.constant 0 : i32
    %0 = arith.cmpi eq, %arg1, %c0_i32 : i32
    %1 = arith.extui %0 : i1 to i32
    %c0_i32_0 = arith.constant 0 : i32
    %2 = arith.cmpi ne, %1, %c0_i32_0 : i32
    scf.if %2 {
      %cst_10 = arith.constant 0.000000e+00 : f32
      %12 = vector.broadcast %cst_10 : f32 to vector<512x128xf32>
      %c0_11 = arith.constant 0 : index
      %c0_12 = arith.constant 0 : index
      %13 = vector.load %arg7[%c0_11, %c0_12] : memref<512x128xf32, #tpu.memory_space<vmem>>, vector<512x128xf32>
      tpu.vector_store %arg7[%c0_11, %c0_12], %12 {strides = array<i32>} : memref<512x128xf32, #tpu.memory_space<vmem>>, vector<512x128xf32>,
    } else {
    }
    %c0 = arith.constant 0 : index
    %c0_1 = arith.constant 0 : index
    %3 = vector.load %arg7[%c0, %c0_1] : memref<512x128xf32, #tpu.memory_space<vmem>>, vector<512x128xf32>
    %c0_2 = arith.constant 0 : index
    %c0_3 = arith.constant 0 : index
    %4 = vector.load %arg3[%c0_2, %c0_3] : memref<512x1024xbf16, #tpu.memory_space<vmem>>, vector<512x1024xbf16>
    %c0_4 = arith.constant 0 : index
    %c0_5 = arith.constant 0 : index
    %5 = vector.load %arg2[%c0_4, %c0_5] : memref<1024x128xbf16, #tpu.memory_space<vmem>>, vector<1024x128xbf16>
    %cst = arith.constant dense<0.000000e+00> : vector<512x128xf32>
    %6 = tpu.matmul %4, %5, %cst {dimension_numbers = #tpu.dot_dimension_numbers<[1], [0], [0], [1], [0, 0, 1, 1], [], []>} : vector<512x1024xbf16>, vector<1024x128xbf16>, vector<512x128xf32> -> vector<512x128xf32>
    %7 = arith.addf %3, %6 : vector<512x128xf32>
    %c0_6 = arith.constant 0 : index
    %c0_7 = arith.constant 0 : index
    %8 = vector.load %arg7[%c0_6, %c0_7] : memref<512x128xf32, #tpu.memory_space<vmem>>, vector<512x128xf32>
    tpu.vector_store %arg7[%c0_6, %c0_7], %7 {strides = array<i32>} : memref<512x128xf32, #tpu.memory_space<vmem>>, vector<512x128xf32>,
    %c0_i32_8 = arith.constant 0 : i32
    %9 = arith.cmpi eq, %arg1, %c0_i32_8 : i32
    %10 = arith.extui %9 : i1 to i32
    %c0_i32_9 = arith.constant 0 : i32
    %11 = arith.cmpi ne, %10, %c0_i32_9 : i32
    scf.if %11 {
      %c0_10 = arith.constant 0 : index
      %c0_11 = arith.constant 0 : index
      %12 = vector.load %arg4[%c0_10, %c0_11] : memref<512x1xf32, #tpu.memory_space<vmem>>, vector<512x1xf32>
      %c0_12 = arith.constant 0 : index
      %c0_13 = arith.constant 0 : index
      %13 = vector.load %arg7[%c0_12, %c0_13] : memref<512x128xf32, #tpu.memory_space<vmem>>, vector<512x128xf32>
      %14 = vector.broadcast %12 : vector<512x1xf32> to vector<512x128xf32>
      %15 = arith.mulf %14, %13 : vector<512x128xf32>
      %c0_14 = arith.constant 0 : index
      %c0_15 = arith.constant 0 : index
      %16 = vector.load %arg5[%c0_14, %c0_15] : memref<1x128xf32, #tpu.memory_space<vmem>>, vector<1x128xf32>
      %17 = vector.broadcast %16 : vector<1x128xf32> to vector<512x128xf32>
      %18 = arith.addf %15, %17 : vector<512x128xf32>
      %cst_16 = arith.constant 0.000000e+00 : f32
      %19 = vector.broadcast %cst_16 : f32 to vector<512x128xf32>
      %20 = arith.maximumf %18, %19 : vector<512x128xf32>
      %c0_17 = arith.constant 0 : index
      %c0_18 = arith.constant 0 : index
      %21 = vector.load %arg6[%c0_17, %c0_18] : memref<1x128xf32, #tpu.memory_space<vmem>>, vector<1x128xf32>
      %22 = vector.broadcast %21 : vector<1x128xf32> to vector<512x128xf32>
      %23 = arith.mulf %20, %22 : vector<512x128xf32>
      %cst_19 = arith.constant dense<0.000000e+00> : vector<512xf32>
      %24 = vector.multi_reduction <add>, %23, %cst_19 [1] : vector<512x128xf32> to vector<512xf32>
      %25 = vector.shape_cast %24 : vector<512xf32> to vector<512x1xf32>
      %26 = math.tanh %25 : vector<512x1xf32>
      %27 = tpu.iota {dimensions = array<i32: 1>} : vector<512x128xi32>
      %c127_i32 = arith.constant 127 : i32
      %28 = vector.broadcast %c127_i32 : i32 to vector<512x128xi32>
      %29 = arith.cmpi eq, %27, %28 : vector<512x128xi32>
      %30 = vector.broadcast %26 : vector<512x1xf32> to vector<512x128xf32>
      %31 = arith.mulf %20, %30 : vector<512x128xf32>
      %32 = vector.shape_cast %26 : vector<512x1xf32> to vector<512x1xf32>
      %33 = vector.broadcast %32 : vector<512x1xf32> to vector<512x128xf32>
      %34 = arith.select %29, %33, %31 : vector<512x128xi1>, vector<512x128xf32>
      %c0_20 = arith.constant 0 : index
      %c0_21 = arith.constant 0 : index
      %35 = vector.load %arg7[%c0_20, %c0_21] : memref<512x128xf32, #tpu.memory_space<vmem>>, vector<512x128xf32>
      tpu.vector_store %arg7[%c0_20, %c0_21], %34 {strides = array<i32>} : memref<512x128xf32, #tpu.memory_space<vmem>>, vector<512x128xf32>,
    } else {
    }
    return
  }
  func.func @transform_0(%arg0: i32, %arg1: i32) -> (i32, i32) {
    %c0_i32 = arith.constant 0 : i32
    %c0_i32_0 = arith.constant 0 : i32
    return %arg1, %c0_i32 : i32, i32
  }
  func.func @transform_1(%arg0: i32, %arg1: i32) -> (i32, i32) {
    %c0_i32 = arith.constant 0 : i32
    return %arg0, %arg1 : i32, i32
  }
  func.func @transform_2(%arg0: i32, %arg1: i32) -> (i32, i32) {
    %c0_i32 = arith.constant 0 : i32
    %c0_i32_0 = arith.constant 0 : i32
    return %arg0, %c0_i32 : i32, i32
  }
  func.func @transform_3(%arg0: i32, %arg1: i32) -> (i32, i32) {
    %c0_i32 = arith.constant 0 : i32
    %c0_i32_0 = arith.constant 0 : i32
    %c0_i32_1 = arith.constant 0 : i32
    return %c0_i32, %c0_i32_0 : i32, i32
  }
  func.func @transform_4(%arg0: i32, %arg1: i32) -> (i32, i32) {
    %c0_i32 = arith.constant 0 : i32
    %c0_i32_0 = arith.constant 0 : i32
    %c0_i32_1 = arith.constant 0 : i32
    return %c0_i32, %c0_i32_0 : i32, i32
  }
  func.func @transform_5(%arg0: i32, %arg1: i32) -> (i32, i32) {
    %c0_i32 = arith.constant 0 : i32
    %c0_i32_0 = arith.constant 0 : i32
    return %arg0, %c0_i32 : i32, i32
  }
}

</mosaic_0001>

<llo_original>
// kernel: tpu_custom_call.1
$region0: #{tpu_custom_call.1}
  #allocation0 [shape = 'u32[]', space=smem, size = 0x4, offset = 0x4, fixed_abs, tag = 'smem constant byte address 0x4 - core index']
  #allocation1 [shape = 'u32[144,128]{1,0:T(1,128)}', space=vmem, size = 0x12000, scoped, tag = 'internal scratch']
  %s0 = inlined_call_operand.hbm [shape: bf16[1024,128], index: 0, kind: input, shape index: {}]
  %s1 = inlined_call_operand.hbm [shape: bf16[1024,1024], index: 1, kind: input, shape index: {}]
  %s2 = inlined_call_operand.vmem [shape: f32[1024,1], index: 2, kind: input, shape index: {}]
  %s3 = inlined_call_operand.hbm [shape: f32[1,128], index: 3, kind: input, shape index: {}]
  %s4 = inlined_call_operand.hbm [shape: f32[1,128], index: 4, kind: input, shape index: {}]
  %s5 = inlined_call_operand.hbm [shape: f32[1024,128], index: 5, kind: output, shape index: {}]
  %s6 = sld [smem:[#allocation0]]
  $region77: #{tpu_custom_call.1} parent=0
    _
  %s8 = ssub.s32 1, %s6
  %s9 = scalar_select 0, %s8, %s6
  $region1: #{tpu_custom_call.1} parent=0
    #allocation2 [shape = 'u8[262144]{0}', space=vmem, size = 0x40000, scoped, tag = 'input window, operand 0, single buffered']
    #allocation3 [shape = 's32[2]{0}', space=sflag, size = 0x8, scoped, tag = 'scoped memory for tpu_custom_call.1']
    #allocation4 [shape = 's32[2]{0}', space=sflag, size = 0x8, scoped, tag = 'scoped memory for tpu_custom_call.1']
    #allocation5 [shape = 'u8[2097152]{0}', space=vmem, size = 0x200000, scoped, tag = 'input window, operand 1']
    #allocation6 [shape = 's32[2]{0}', space=sflag, size = 0x8, scoped, tag = 'scoped memory for tpu_custom_call.1']
    #allocation7 [shape = 'u8[512]{0}', space=vmem, size = 0x400, scoped, tag = 'input window, operand 3, single buffered']
    #allocation8 [shape = 'u8[512]{0}', space=vmem, size = 0x400, scoped, tag = 'input window, operand 4, single buffered']
    #allocation9 [shape = 's32[1]{0}', space=sflag, size = 0x4, scoped, tag = 'scoped memory for tpu_custom_call.1']
    #allocation10 [shape = 'u8[524288]{0}', space=vmem, size = 0x80000, scoped, tag = 'output window, operand 0']
    %10 = vsyncpa [#allocation3], 0
    %11 = vsyncpa [#allocation6], 0
    %s12 = scalar_lea.sflag [#allocation6], 1
    %13 = vsyncpa %s12, 0
    %14 = vsyncpa [#allocation9], 0
    %15 = vsyncpa [#allocation4], 0
    %s16 = scalar_lea.sflag [#allocation4], 1
    %17 = vsyncpa %s16, 0
    loop: start=0, step=1, limit=4
    $region2: #{tpu_custom_call.1} parent=1 // loop_pre_header
      _
    $region3: #{tpu_custom_call.1} parent=1 // loop_header
      %s19 = sphi 0, %s23
      %p20 = scmp.ge.s32.totalorder %s19, 4
      %s26 = sphi 0, %s38
      %s27 = sphi 0, %s34
      %s28 = sphi 0, %s26
      %s29 = sphi 0, %s27
      %s30 = sphi 0, %s28
      %s31 = sphi 0, %s29
      %s41 = sphi 0, %s43
      %s44 = sphi 0, %s41
      %s45 = sphi 0, %s44
      %s61 = sphi 0, %s45
      %s69 = sphi 0, %s71
      %s72 = sphi 0, %s69
      %s73 = sphi 0, %s72
      %s89 = sphi 0, %s73
      %s95 = sphi 0, %s97
      %s98 = sphi 0, %s95
      %s99 = sphi 0, %s98
      %s115 = sphi 0, %s99
      %s119 = sphi 0, %s119
      %s121 = sphi 0, %s119
      %s122 = sphi 0, %s121
      %s136 = sphi 0, %s122
      %s140 = sphi 0, %s140
      %s142 = sphi 0, %s140
      %s143 = sphi 0, %s142
      %s157 = sphi 0, %s143
      %s163 = sphi 0, %s165
      %s166 = sphi 0, %s163
      %s167 = sphi 0, %s166
      %s183 = sphi 0, %s167
    $region4: #{tpu_custom_call.1} parent=1 // loop_header_branch
      %22 = sbr.rel (%p20) target = $region8
    $region5: #{tpu_custom_call.1} parent=1 // loop_body
      %s24 = ssub.s32 %s19, 1
      %s25 = ssub.s32 %s19, 2
      %s32 = sadd.s32 1, %s27
      %p33 = scmp.ge.s32.totalorder %s32, 1
      %s34 = scalar_select %p33, 0, %s32
      %s35 = sadd.s32 1, %s26
      %s36 = scalar_select %p33, %s35, %s26
      %p37 = scmp.ge.s32.totalorder %s36, 2
      %s38 = scalar_select %p37, 0, %s36
      %s39 = ssub.s32 %s27, %s34
      %p40 = scmp.eq.s32.totalorder %s39, 0
      %s42 = sadd.s32 %s41, 1
      %s43 = scalar_select %p40, %s41, %s42
      %p46 = pneg %p40
      %p47 = scmp.eq.s32.totalorder %s19, 1
      %p48 = por %p46, %p47
      %p49 = scmp.ne.s32.totalorder %s41, %s44
      %p50 = scmp.eq.s32.totalorder %s19, 0
      %p51 = por %p49, %p50
      %p52 = scmp.ne.s32.totalorder %s41, %s44
      %p53 = scmp.eq.s32.totalorder %s24, 1
      %p54 = por %p52, %p53
      %p55 = scmp.ne.s32.totalorder %s44, %s45
      %p56 = scmp.eq.s32.totalorder %s24, 0
      %p57 = por %p55, %p56
      %p58 = scmp.ne.s32.totalorder %s44, %s45
      %p59 = scmp.eq.s32.totalorder %s25, 1
      %p60 = por %p58, %p59
      %p62 = scmp.ne.s32.totalorder %s45, %s61
      %p63 = scmp.eq.s32.totalorder %s25, 0
      %p64 = por %p62, %p63
      %s65 = ssub.s32 %s26, %s38
      %s66 = ssub.s32 %s27, %s34
      %s67 = sor.u32 %s65, %s66
      %p68 = scmp.eq.s32.totalorder %s67, 0
      %s70 = sadd.s32 %s69, 1
      %s71 = scalar_select %p68, %s69, %s70
      %p74 = pneg %p68
      %p75 = scmp.eq.s32.totalorder %s19, 1
      %p76 = por %p74, %p75
      %p77 = scmp.ne.s32.totalorder %s69, %s72
      %p78 = scmp.eq.s32.totalorder %s19, 0
      %p79 = por %p77, %p78
      %p80 = scmp.ne.s32.totalorder %s69, %s72
      %p81 = scmp.eq.s32.totalorder %s24, 1
      %p82 = por %p80, %p81
      %p83 = scmp.ne.s32.totalorder %s72, %s73
      %p84 = scmp.eq.s32.totalorder %s24, 0
      %p85 = por %p83, %p84
      %p86 = scmp.ne.s32.totalorder %s72, %s73
      %p87 = scmp.eq.s32.totalorder %s25, 1
      %p88 = por %p86, %p87
      %p90 = scmp.ne.s32.totalorder %s73, %s89
      %p91 = scmp.eq.s32.totalorder %s25, 0
      %p92 = por %p90, %p91
      %s93 = ssub.s32 %s26, %s38
      %p94 = scmp.eq.s32.totalorder %s93, 0
      %s96 = sadd.s32 %s95, 1
      %s97 = scalar_select %p94, %s95, %s96
      %p100 = pneg %p94
      %p101 = scmp.eq.s32.totalorder %s19, 1
      %p102 = por %p100, %p101
      %p103 = scmp.ne.s32.totalorder %s95, %s98
      %p104 = scmp.eq.s32.totalorder %s19, 0
      %p105 = por %p103, %p104
      %p106 = scmp.ne.s32.totalorder %s95, %s98
      %p107 = scmp.eq.s32.totalorder %s24, 1
      %p108 = por %p106, %p107
      %p109 = scmp.ne.s32.totalorder %s98, %s99
      %p110 = scmp.eq.s32.totalorder %s24, 0
      %p111 = por %p109, %p110
      %p112 = scmp.ne.s32.totalorder %s98, %s99
      %p113 = scmp.eq.s32.totalorder %s25, 1
      %p114 = por %p112, %p113
      %p116 = scmp.ne.s32.totalorder %s99, %s115
      %p117 = scmp.eq.s32.totalorder %s25, 0
      %p118 = por %p116, %p117
      %s120 = sadd.s32 %s119, 1
      %p123 = scmp.eq.s32.totalorder %s19, 1
      %p124 = scmp.ne.s32.totalorder %s119, %s121
      %p125 = scmp.eq.s32.totalorder %s19, 0
      %p126 = por %p124, %p125
      %p127 = scmp.ne.s32.totalorder %s119, %s121
      %p128 = scmp.eq.s32.totalorder %s24, 1
      %p129 = por %p127, %p128
      %p130 = scmp.ne.s32.totalorder %s121, %s122
      %p131 = scmp.eq.s32.totalorder %s24, 0
      %p132 = por %p130, %p131
      %p133 = scmp.ne.s32.totalorder %s121, %s122
      %p134 = scmp.eq.s32.totalorder %s25, 1
      %p135 = por %p133, %p134
      %p137 = scmp.ne.s32.totalorder %s122, %s136
      %p138 = scmp.eq.s32.totalorder %s25, 0
      %p139 = por %p137, %p138
      %s141 = sadd.s32 %s140, 1
      %p144 = scmp.eq.s32.totalorder %s19, 1
      %p145 = scmp.ne.s32.totalorder %s140, %s142
      %p146 = scmp.eq.s32.totalorder %s19, 0
      %p147 = por %p145, %p146
      %p148 = scmp.ne.s32.totalorder %s140, %s142
      %p149 = scmp.eq.s32.totalorder %s24, 1
      %p150 = por %p148, %p149
      %p151 = scmp.ne.s32.totalorder %s142, %s143
      %p152 = scmp.eq.s32.totalorder %s24, 0
      %p153 = por %p151, %p152
      %p154 = scmp.ne.s32.totalorder %s142, %s143
      %p155 = scmp.eq.s32.totalorder %s25, 1
      %p156 = por %p154, %p155
      %p158 = scmp.ne.s32.totalorder %s143, %s157
      %p159 = scmp.eq.s32.totalorder %s25, 0
      %p160 = por %p158, %p159
      %s161 = ssub.s32 %s26, %s38
      %p162 = scmp.eq.s32.totalorder %s161, 0
      %s164 = sadd.s32 %s163, 1
      %s165 = scalar_select %p162, %s163, %s164
      %p168 = pneg %p162
      %p169 = scmp.eq.s32.totalorder %s19, 1
      %p170 = por %p168, %p169
      %p171 = scmp.ne.s32.totalorder %s163, %s166
      %p172 = scmp.eq.s32.totalorder %s19, 0
      %p173 = por %p171, %p172
      %p174 = scmp.ne.s32.totalorder %s163, %s166
      %p175 = scmp.eq.s32.totalorder %s24, 1
      %p176 = por %p174, %p175
      %p177 = scmp.ne.s32.totalorder %s166, %s167
      %p178 = scmp.eq.s32.totalorder %s24, 0
      %p179 = por %p177, %p178
      %p180 = scmp.ne.s32.totalorder %s166, %s167
      %p181 = scmp.eq.s32.totalorder %s25, 1
      %p182 = por %p180, %p181
      %p184 = scmp.ne.s32.totalorder %s167, %s183
      %p185 = scmp.eq.s32.totalorder %s25, 0
      %p186 = por %p184, %p185
      %p187 = scmp.le.s32.totalorder 1, %s19
      %p188 = scmp.lt.s32.totalorder %s19, 3
      %p189 = pnand %p187, %p188
      %p190 = pneg %p189
      // Predicated region
      $region9: #{tpu_custom_call.1} parent=5 // pred_check
        _
      $region10: #{tpu_custom_call.1} parent=5 // pred_check_branch
        %192 = sbr.rel (%p189) target = $region12
      $region11: #{tpu_custom_call.1} parent=5 // pred_region
        %s193 = ssub.s32 %s19, 1
        // Predicated region
        $region13: #{tpu_custom_call.1} parent=11 // pred_check
          %p194 = pneg %p57
        $region14: #{tpu_custom_call.1} parent=11 // pred_check_branch
          %196 = sbr.rel (%p194) target = $region16
        $region15: #{tpu_custom_call.1} parent=11 // pred_region
          %s197 = smul.u32 128, %s29
          %s199 = ssub.s32 8192, 8192
          %200 = vsyncadd [#allocation3], %s199
          %s201 = smul.addr %s197, 64
          %s202 = scalar_lea.hbm %s0, %s201
          %s203 = sshll.u32 [#allocation2], 4
          %s204 = int_to_ptr.vmem [resolvable:$true] %s203
          %209 = dma.hbm_to_vmem [thread:$0]  %s202, 8192, %s204, [#allocation3], 64, 64, 4
        $region16: #{tpu_custom_call.1} parent=11 // pred_fallthru
          _
        // Predicated region
        $region17: #{tpu_custom_call.1} parent=11 // pred_check
          %p210 = pneg %p132
        $region18: #{tpu_custom_call.1} parent=11 // pred_check_branch
          %212 = sbr.rel (%p210) target = $region20
        $region19: #{tpu_custom_call.1} parent=11 // pred_region
          %s214 = ssub.s32 16, 16
          %215 = vsyncadd [#allocation6], %s214
          %s217 = sshll.u32 [#allocation7], 4
          %s218 = int_to_ptr.vmem [resolvable:$true] %s217
          %220 = dma.hbm_to_vmem [thread:$0]  %s3, 16, %s218, [#allocation6]
        $region20: #{tpu_custom_call.1} parent=11 // pred_fallthru
          _
        // Predicated region
        $region21: #{tpu_custom_call.1} parent=11 // pred_check
          %p221 = pneg %p153
        $region22: #{tpu_custom_call.1} parent=11 // pred_check_branch
          %223 = sbr.rel (%p221) target = $region24
        $region23: #{tpu_custom_call.1} parent=11 // pred_region
          %s225 = ssub.s32 16, 16
          %226 = vsyncadd [#allocation9], %s225
          %s228 = sshll.u32 [#allocation8], 4
          %s229 = int_to_ptr.vmem [resolvable:$true] %s228
          %231 = dma.hbm_to_vmem [thread:$0]  %s4, 16, %s229, [#allocation9]
        $region24: #{tpu_custom_call.1} parent=11 // pred_fallthru
          _
      $region12: #{tpu_custom_call.1} parent=5 // pred_fallthru
        _
      %p232 = scmp.lt.s32.totalorder %s19, 2
      // Predicated region
      $region25: #{tpu_custom_call.1} parent=5 // pred_check
        %p233 = pneg %p232
      $region26: #{tpu_custom_call.1} parent=5 // pred_check_branch
        %235 = sbr.rel (%p233) target = $region28
      $region27: #{tpu_custom_call.1} parent=5 // pred_region
        // Predicated region
        $region29: #{tpu_custom_call.1} parent=27 // pred_check
          %p236 = pneg %p79
        $region30: #{tpu_custom_call.1} parent=27 // pred_check_branch
          %238 = sbr.rel (%p236) target = $region32
        $region31: #{tpu_custom_call.1} parent=27 // pred_region
          %s239 = sand.u32 %s19, 1
          %s240 = scalar_lea.sflag [#allocation6], %s239
          %s241 = sand.u32 %s69, 1
          %s242 = smul.addr %s241, 2048
          %s243 = scalar_lea.vmem [#allocation5], %s242
          %s244 = smul.u32 64, %s26
          %s245 = smul.u32 8, %s27
          %s247 = ssub.s32 32768, 32768
          %248 = vsyncadd %s240, %s247
          %s249 = smul.addr %s244, 8
          %s250 = sadd.s32 %s245, %s249
          %s251 = smul.addr %s250, 64
          %s252 = scalar_lea.hbm %s1, %s251
          %s253 = sshll.u32 %s243, 4
          %s254 = int_to_ptr.vmem [resolvable:$true] %s253
          %259 = dma.hbm_to_vmem [thread:$0]  %s252, 32768, %s254, %s240, 512, 512, 32
        $region32: #{tpu_custom_call.1} parent=27 // pred_fallthru
          _
        // Predicated region
        $region33: #{tpu_custom_call.1} parent=27 // pred_check
          %p260 = pneg %p105
        $region34: #{tpu_custom_call.1} parent=27 // pred_check_branch
          %262 = sbr.rel (%p260) target = $region36
        $region35: #{tpu_custom_call.1} parent=27 // pred_region
          %s263 = smul.u32 64, %s26
          %p264 = scmp.lt.s32.totalorder %s263, 127
          %s265 = scalar_select %p264, %s263, 127
          %s266 = smul.addr %s265, 8
          %s267 = scalar_lea.vmem %s2, %s266
          %s268 = smul.u32 64, %s26
        $region36: #{tpu_custom_call.1} parent=27 // pred_fallthru
          _
      $region28: #{tpu_custom_call.1} parent=5 // pred_fallthru
        _
      %p269 = scmp.le.s32.totalorder 1, %s19
      %p270 = scmp.lt.s32.totalorder %s19, 3
      %p271 = pnand %p269, %p270
      %p272 = pneg %p271
      // Predicated region
      $region37: #{tpu_custom_call.1} parent=5 // pred_check
        _
      $region38: #{tpu_custom_call.1} parent=5 // pred_check_branch
        %274 = sbr.rel (%p271) target = $region40
      $region39: #{tpu_custom_call.1} parent=5 // pred_region
        %s275 = ssub.s32 %s19, 1
        // Predicated region
        $region41: #{tpu_custom_call.1} parent=39 // pred_check
          %p276 = pneg %p57
        $region42: #{tpu_custom_call.1} parent=39 // pred_check_branch
          %278 = sbr.rel (%p276) target = $region44
        $region43: #{tpu_custom_call.1} parent=39 // pred_region
          %279 = dma.done [#allocation3], 8192
        $region44: #{tpu_custom_call.1} parent=39 // pred_fallthru
          _
        %s280 = sand.u32 %s24, 1
        %s281 = scalar_lea.sflag [#allocation6], %s280
        %s282 = sand.u32 %s72, 1
        %s283 = smul.addr %s282, 2048
        %s284 = scalar_lea.vmem [#allocation5], %s283
        // Predicated region
        $region45: #{tpu_custom_call.1} parent=39 // pred_check
          %p285 = pneg %p85
        $region46: #{tpu_custom_call.1} parent=39 // pred_check_branch
          %287 = sbr.rel (%p285) target = $region48
        $region47: #{tpu_custom_call.1} parent=39 // pred_region
          %288 = dma.done %s281, 32768
        $region48: #{tpu_custom_call.1} parent=39 // pred_fallthru
          _
        // Predicated region
        $region49: #{tpu_custom_call.1} parent=39 // pred_check
          %p289 = pneg %p132
        $region50: #{tpu_custom_call.1} parent=39 // pred_check_branch
          %291 = sbr.rel (%p289) target = $region52
        $region51: #{tpu_custom_call.1} parent=39 // pred_region
          %292 = dma.done [#allocation6], 16
        $region52: #{tpu_custom_call.1} parent=39 // pred_fallthru
          _
        // Predicated region
        $region53: #{tpu_custom_call.1} parent=39 // pred_check
          %p293 = pneg %p153
        $region54: #{tpu_custom_call.1} parent=39 // pred_check_branch
          %295 = sbr.rel (%p293) target = $region56
        $region55: #{tpu_custom_call.1} parent=39 // pred_region
          %296 = dma.done [#allocation9], 16
        $region56: #{tpu_custom_call.1} parent=39 // pred_fallthru
          _
        %p297 = pneg %p57
        %p298 = pneg %p54
        %s299 = sand.u32 %s24, 1
        %s300 = scalar_lea.sflag [#allocation6], %s299
        %s301 = sand.u32 %s72, 1
        %s302 = smul.addr %s301, 2048
        %s303 = scalar_lea.vmem [#allocation5], %s302
        %p304 = pneg %p85
        %p305 = pneg %p82
        %s306 = smul.u32 64, %s28
        %p307 = scmp.lt.s32.totalorder %s306, 127
        %s308 = scalar_select %p307, %s306, 127
        %s309 = smul.addr %s308, 8
        %s310 = scalar_lea.vmem %s2, %s309
        %p311 = pneg %p111
        %p312 = pneg %p108
        %p313 = pneg %p132
        %p314 = pneg %p129
        %p315 = pneg %p153
        %p316 = pneg %p150
        %p317 = pneg %p179
        %p318 = pneg %p176
        %s319 = sand.u32 %s166, 1
        %s320 = scalar_lea.sflag [#allocation4], %s319
        %s321 = sand.u32 %s166, 1
        %s322 = smul.addr %s321, 512
        %s323 = scalar_lea.vmem [#allocation10], %s322
        %s324 = smul.u32 128, %s29
        %s325 = smul.u32 64, %s28
        %s326 = smul.u32 8, %s29
        %s327 = smul.u32 64, %s28
        %p328 = scmp.lt.s32.totalorder %s327, 127
        %s329 = scalar_select %p328, %s327, 127
        %s330 = smul.addr %s329, 8
        %s331 = scalar_lea.vmem %s2, %s330
        %s332 = smul.u32 64, %s28
        %s333 = smul.u32 64, %s28
        %p335 = scmp.eq.s32.totalorder %s29, 0
        // Predicated region
        $region57: #{tpu_custom_call.1} parent=39 // pred_check
          %p336 = pneg %p335
        $region58: #{tpu_custom_call.1} parent=39 // pred_check_branch
          %338 = sbr.rel (%p336) target = $region60
        $region59: #{tpu_custom_call.1} parent=39 // pred_region
          %339 = vst [vmem:[%s323] sm:$0xff] 0.0
          %340 = vst [vmem:[%s323 + $0x8] sm:$0xff] 0.0
          %341 = vst [vmem:[%s323 + $0x10] sm:$0xff] 0.0
          %342 = vst [vmem:[%s323 + $0x18] sm:$0xff] 0.0
          %343 = vst [vmem:[%s323 + $0x20] sm:$0xff] 0.0
          %344 = vst [vmem:[%s323 + $0x28] sm:$0xff] 0.0
          %345 = vst [vmem:[%s323 + $0x30] sm:$0xff] 0.0
          %346 = vst [vmem:[%s323 + $0x38] sm:$0xff] 0.0
          %347 = vst [vmem:[%s323 + $0x40] sm:$0xff] 0.0
          %348 = vst [vmem:[%s323 + $0x48] sm:$0xff] 0.0
          %349 = vst [vmem:[%s323 + $0x50] sm:$0xff] 0.0
          %350 = vst [vmem:[%s323 + $0x58] sm:$0xff] 0.0
          %351 = vst [vmem:[%s323 + $0x60] sm:$0xff] 0.0
          %352 = vst [vmem:[%s323 + $0x68] sm:$0xff] 0.0
          %353 = vst [vmem:[%s323 + $0x70] sm:$0xff] 0.0
          %354 = vst [vmem:[%s323 + $0x78] sm:$0xff] 0.0
          %355 = vst [vmem:[%s323 + $0x80] sm:$0xff] 0.0
          %356 = vst [vmem:[%s323 + $0x88] sm:$0xff] 0.0
          %357 = vst [vmem:[%s323 + $0x90] sm:$0xff] 0.0
          %358 = vst [vmem:[%s323 + $0x98] sm:$0xff] 0.0
          %359 = vst [vmem:[%s323 + $0xa0] sm:$0xff] 0.0
          %360 = vst [vmem:[%s323 + $0xa8] sm:$0xff] 0.0
          %361 = vst [vmem:[%s323 + $0xb0] sm:$0xff] 0.0
          %362 = vst [vmem:[%s323 + $0xb8] sm:$0xff] 0.0
          %363 = vst [vmem:[%s323 + $0xc0] sm:$0xff] 0.0
          %364 = vst [vmem:[%s323 + $0xc8] sm:$0xff] 0.0
          %365 = vst [vmem:[%s323 + $0xd0] sm:$0xff] 0.0
          %366 = vst [vmem:[%s323 + $0xd8] sm:$0xff] 0.0
          %367 = vst [vmem:[%s323 + $0xe0] sm:$0xff] 0.0
          %368 = vst [vmem:[%s323 + $0xe8] sm:$0xff] 0.0
          %369 = vst [vmem:[%s323 + $0xf0] sm:$0xff] 0.0
          %370 = vst [vmem:[%s323 + $0xf8] sm:$0xff] 0.0
          %371 = vst [vmem:[%s323 + $0x100] sm:$0xff] 0.0
          %372 = vst [vmem:[%s323 + $0x108] sm:$0xff] 0.0
          %373 = vst [vmem:[%s323 + $0x110] sm:$0xff] 0.0
          %374 = vst [vmem:[%s323 + $0x118] sm:$0xff] 0.0
          %375 = vst [vmem:[%s323 + $0x120] sm:$0xff] 0.0
          %376 = vst [vmem:[%s323 + $0x128] sm:$0xff] 0.0
          %377 = vst [vmem:[%s323 + $0x130] sm:$0xff] 0.0
          %378 = vst [vmem:[%s323 + $0x138] sm:$0xff] 0.0
          %379 = vst [vmem:[%s323 + $0x140] sm:$0xff] 0.0
          %380 = vst [vmem:[%s323 + $0x148] sm:$0xff] 0.0
          %381 = vst [vmem:[%s323 + $0x150] sm:$0xff] 0.0
          %382 = vst [vmem:[%s323 + $0x158] sm:$0xff] 0.0
          %383 = vst [vmem:[%s323 + $0x160] sm:$0xff] 0.0
          %384 = vst [vmem:[%s323 + $0x168] sm:$0xff] 0.0
          %385 = vst [vmem:[%s323 + $0x170] sm:$0xff] 0.0
          %386 = vst [vmem:[%s323 + $0x178] sm:$0xff] 0.0
          %387 = vst [vmem:[%s323 + $0x180] sm:$0xff] 0.0
          %388 = vst [vmem:[%s323 + $0x188] sm:$0xff] 0.0
          %389 = vst [vmem:[%s323 + $0x190] sm:$0xff] 0.0
          %390 = vst [vmem:[%s323 + $0x198] sm:$0xff] 0.0
          %391 = vst [vmem:[%s323 + $0x1a0] sm:$0xff] 0.0
          %392 = vst [vmem:[%s323 + $0x1a8] sm:$0xff] 0.0
          %393 = vst [vmem:[%s323 + $0x1b0] sm:$0xff] 0.0
          %394 = vst [vmem:[%s323 + $0x1b8] sm:$0xff] 0.0
          %395 = vst [vmem:[%s323 + $0x1c0] sm:$0xff] 0.0
          %396 = vst [vmem:[%s323 + $0x1c8] sm:$0xff] 0.0
          %397 = vst [vmem:[%s323 + $0x1d0] sm:$0xff] 0.0
          %398 = vst [vmem:[%s323 + $0x1d8] sm:$0xff] 0.0
          %399 = vst [vmem:[%s323 + $0x1e0] sm:$0xff] 0.0
          %400 = vst [vmem:[%s323 + $0x1e8] sm:$0xff] 0.0
          %401 = vst [vmem:[%s323 + $0x1f0] sm:$0xff] 0.0
          %402 = vst [vmem:[%s323 + $0x1f8] sm:$0xff] 0.0
        $region60: #{tpu_custom_call.1} parent=39 // pred_fallthru
          _
        %v403 = vld [vmem:[%s323] sm:$0xff]
        %v404 = vld [vmem:[%s323 + $0x8] sm:$0xff]
        %v405 = vld [vmem:[%s323 + $0x10] sm:$0xff]
        %v406 = vld [vmem:[%s323 + $0x18] sm:$0xff]
        %v407 = vld [vmem:[%s323 + $0x20] sm:$0xff]
        %v408 = vld [vmem:[%s323 + $0x28] sm:$0xff]
        %v409 = vld [vmem:[%s323 + $0x30] sm:$0xff]
        %v410 = vld [vmem:[%s323 + $0x38] sm:$0xff]
        %v411 = vld [vmem:[%s323 + $0x40] sm:$0xff]
        %v412 = vld [vmem:[%s323 + $0x48] sm:$0xff]
        %v413 = vld [vmem:[%s323 + $0x50] sm:$0xff]
        %v414 = vld [vmem:[%s323 + $0x58] sm:$0xff]
        %v415 = vld [vmem:[%s323 + $0x60] sm:$0xff]
        %v416 = vld [vmem:[%s323 + $0x68] sm:$0xff]
        %v417 = vld [vmem:[%s323 + $0x70] sm:$0xff]
        %v418 = vld [vmem:[%s323 + $0x78] sm:$0xff]
        %v419 = vld [vmem:[%s323 + $0x80] sm:$0xff]
        %v420 = vld [vmem:[%s323 + $0x88] sm:$0xff]
        %v421 = vld [vmem:[%s323 + $0x90] sm:$0xff]
        %v422 = vld [vmem:[%s323 + $0x98] sm:$0xff]
        %v423 = vld [vmem:[%s323 + $0xa0] sm:$0xff]
        %v424 = vld [vmem:[%s323 + $0xa8] sm:$0xff]
        %v425 = vld [vmem:[%s323 + $0xb0] sm:$0xff]
        %v426 = vld [vmem:[%s323 + $0xb8] sm:$0xff]
        %v427 = vld [vmem:[%s323 + $0xc0] sm:$0xff]
        %v428 = vld [vmem:[%s323 + $0xc8] sm:$0xff]
        %v429 = vld [vmem:[%s323 + $0xd0] sm:$0xff]
        %v430 = vld [vmem:[%s323 + $0xd8] sm:$0xff]
        %v431 = vld [vmem:[%s323 + $0xe0] sm:$0xff]
        %v432 = vld [vmem:[%s323 + $0xe8] sm:$0xff]
        %v433 = vld [vmem:[%s323 + $0xf0] sm:$0xff]
        %v434 = vld [vmem:[%s323 + $0xf8] sm:$0xff]
        %v435 = vld [vmem:[%s323 + $0x100] sm:$0xff]
        %v436 = vld [vmem:[%s323 + $0x108] sm:$0xff]
        %v437 = vld [vmem:[%s323 + $0x110] sm:$0xff]
        %v438 = vld [vmem:[%s323 + $0x118] sm:$0xff]
        %v439 = vld [vmem:[%s323 + $0x120] sm:$0xff]
        %v440 = vld [vmem:[%s323 + $0x128] sm:$0xff]
        %v441 = vld [vmem:[%s323 + $0x130] sm:$0xff]
        %v442 = vld [vmem:[%s323 + $0x138] sm:$0xff]
        %v443 = vld [vmem:[%s323 + $0x140] sm:$0xff]
        %v444 = vld [vmem:[%s323 + $0x148] sm:$0xff]
        %v445 = vld [vmem:[%s323 + $0x150] sm:$0xff]
        %v446 = vld [vmem:[%s323 + $0x158] sm:$0xff]
        %v447 = vld [vmem:[%s323 + $0x160] sm:$0xff]
        %v448 = vld [vmem:[%s323 + $0x168] sm:$0xff]
        %v449 = vld [vmem:[%s323 + $0x170] sm:$0xff]
        %v450 = vld [vmem:[%s323 + $0x178] sm:$0xff]
        %v451 = vld [vmem:[%s323 + $0x180] sm:$0xff]
        %v452 = vld [vmem:[%s323 + $0x188] sm:$0xff]
        %v453 = vld [vmem:[%s323 + $0x190] sm:$0xff]
        %v454 = vld [vmem:[%s323 + $0x198] sm:$0xff]
        %v455 = vld [vmem:[%s323 + $0x1a0] sm:$0xff]
        %v456 = vld [vmem:[%s323 + $0x1a8] sm:$0xff]
        %v457 = vld [vmem:[%s323 + $0x1b0] sm:$0xff]
        %v458 = vld [vmem:[%s323 + $0x1b8] sm:$0xff]
        %v459 = vld [vmem:[%s323 + $0x1c0] sm:$0xff]
        %v460 = vld [vmem:[%s323 + $0x1c8] sm:$0xff]
        %v461 = vld [vmem:[%s323 + $0x1d0] sm:$0xff]
        %v462 = vld [vmem:[%s323 + $0x1d8] sm:$0xff]
        %v463 = vld [vmem:[%s323 + $0x1e0] sm:$0xff]
        %v464 = vld [vmem:[%s323 + $0x1e8] sm:$0xff]
        %v465 = vld [vmem:[%s323 + $0x1f0] sm:$0xff]
        %v466 = vld [vmem:[%s323 + $0x1f8] sm:$0xff]
        %v467 = vld [vmem:[%s284] sm:$0xff]
        %v468 = vld [vmem:[%s284 + $0x8] sm:$0xff]
        %v469 = vld [vmem:[%s284 + $0x10] sm:$0xff]
        %v470 = vld [vmem:[%s284 + $0x18] sm:$0xff]
        %v471 = vld [vmem:[%s284 + $0x20] sm:$0xff]
        %v472 = vld [vmem:[%s284 + $0x28] sm:$0xff]
        %v473 = vld [vmem:[%s284 + $0x30] sm:$0xff]
        %v474 = vld [vmem:[%s284 + $0x38] sm:$0xff]
        %v475 = vld [vmem:[%s284 + $0x40] sm:$0xff]
        %v476 = vld [vmem:[%s284 + $0x48] sm:$0xff]
        %v477 = vld [vmem:[%s284 + $0x50] sm:$0xff]
        %v478 = vld [vmem:[%s284 + $0x58] sm:$0xff]
        %v479 = vld [vmem:[%s284 + $0x60] sm:$0xff]
        %v480 = vld [vmem:[%s284 + $0x68] sm:$0xff]
        %v481 = vld [vmem:[%s284 + $0x70] sm:$0xff]
        %v482 = vld [vmem:[%s284 + $0x78] sm:$0xff]
        %v483 = vld [vmem:[%s284 + $0x80] sm:$0xff]
        %v484 = vld [vmem:[%s284 + $0x88] sm:$0xff]
        %v485 = vld [vmem:[%s284 + $0x90] sm:$0xff]
        %v486 = vld [vmem:[%s284 + $0x98] sm:$0xff]
        %v487 = vld [vmem:[%s284 + $0xa0] sm:$0xff]
        %v488 = vld [vmem:[%s284 + $0xa8] sm:$0xff]
        %v489 = vld [vmem:[%s284 + $0xb0] sm:$0xff]
        %v490 = vld [vmem:[%s284 + $0xb8] sm:$0xff]
        %v491 = vld [vmem:[%s284 + $0xc0] sm:$0xff]
        %v492 = vld [vmem:[%s284 + $0xc8] sm:$0xff]
        %v493 = vld [vmem:[%s284 + $0xd0] sm:$0xff]
        %v494 = vld [vmem:[%s284 + $0xd8] sm:$0xff]
        %v495 = vld [vmem:[%s284 + $0xe0] sm:$0xff]
        %v496 = vld [vmem:[%s284 + $0xe8] sm:$0xff]
        %v497 = vld [vmem:[%s284 + $0xf0] sm:$0xff]
        %v498 = vld [vmem:[%s284 + $0xf8] sm:$0xff]
        %v499 = vld [vmem:[%s284 + $0x100] sm:$0xff]
        %v500 = vld [vmem:[%s284 + $0x108] sm:$0xff]
        %v501 = vld [vmem:[%s284 + $0x110] sm:$0xff]
        %v502 = vld [vmem:[%s284 + $0x118] sm:$0xff]
        %v503 = vld [vmem:[%s284 + $0x120] sm:$0xff]
        %v504 = vld [vmem:[%s284 + $0x128] sm:$0xff]
        %v505 = vld [vmem:[%s284 + $0x130] sm:$0xff]
        %v506 = vld [vmem:[%s284 + $0x138] sm:$0xff]
        %v507 = vld [vmem:[%s284 + $0x140] sm:$0xff]
        %v508 = vld [vmem:[%s284 + $0x148] sm:$0xff]
        %v509 = vld [vmem:[%s284 + $0x150] sm:$0xff]
        %v510 = vld [vmem:[%s284 + $0x158] sm:$0xff]
        %v511 = vld [vmem:[%s284 + $0x160] sm:$0xff]
        %v512 = vld [vmem:[%s284 + $0x168] sm:$0xff]
        %v513 = vld [vmem:[%s284 + $0x170] sm:$0xff]
        %v514 = vld [vmem:[%s284 + $0x178] sm:$0xff]
        %v515 = vld [vmem:[%s284 + $0x180] sm:$0xff]
        %v516 = vld [vmem:[%s284 + $0x188] sm:$0xff]
        %v517 = vld [vmem:[%s284 + $0x190] sm:$0xff]
        %v518 = vld [vmem:[%s284 + $0x198] sm:$0xff]
        %v519 = vld [vmem:[%s284 + $0x1a0] sm:$0xff]
        %v520 = vld [vmem:[%s284 + $0x1a8] sm:$0xff]
        %v521 = vld [vmem:[%s284 + $0x1b0] sm:$0xff]
        %v522 = vld [vmem:[%s284 + $0x1b8] sm:$0xff]
        %v523 = vld [vmem:[%s284 + $0x1c0] sm:$0xff]
        %v524 = vld [vmem:[%s284 + $0x1c8] sm:$0xff]
        %v525 = vld [vmem:[%s284 + $0x1d0] sm:$0xff]
        %v526 = vld [vmem:[%s284 + $0x1d8] sm:$0xff]
        %v527 = vld [vmem:[%s284 + $0x1e0] sm:$0xff]
        %v528 = vld [vmem:[%s284 + $0x1e8] sm:$0xff]
        %v529 = vld [vmem:[%s284 + $0x1f0] sm:$0xff]
        %v530 = vld [vmem:[%s284 + $0x1f8] sm:$0xff]
        %v531 = vld [vmem:[%s284 + $0x200] sm:$0xff]
        %v532 = vld [vmem:[%s284 + $0x208] sm:$0xff]
        %v533 = vld [vmem:[%s284 + $0x210] sm:$0xff]
        %v534 = vld [vmem:[%s284 + $0x218] sm:$0xff]
        %v535 = vld [vmem:[%s284 + $0x220] sm:$0xff]
        %v536 = vld [vmem:[%s284 + $0x228] sm:$0xff]
        %v537 = vld [vmem:[%s284 + $0x230] sm:$0xff]
        %v538 = vld [vmem:[%s284 + $0x238] sm:$0xff]
        %v539 = vld [vmem:[%s284 + $0x240] sm:$0xff]
        %v540 = vld [vmem:[%s284 + $0x248] sm:$0xff]
        %v541 = vld [vmem:[%s284 + $0x250] sm:$0xff]
        %v542 = vld [vmem:[%s284 + $0x258] sm:$0xff]
        %v543 = vld [vmem:[%s284 + $0x260] sm:$0xff]
        %v544 = vld [vmem:[%s284 + $0x268] sm:$0xff]
        %v545 = vld [vmem:[%s284 + $0x270] sm:$0xff]
        %v546 = vld [vmem:[%s284 + $0x278] sm:$0xff]
        %v547 = vld [vmem:[%s284 + $0x280] sm:$0xff]
        %v548 = vld [vmem:[%s284 + $0x288] sm:$0xff]
        %v549 = vld [vmem:[%s284 + $0x290] sm:$0xff]
        %v550 = vld [vmem:[%s284 + $0x298] sm:$0xff]
        %v551 = vld [vmem:[%s284 + $0x2a0] sm:$0xff]
        %v552 = vld [vmem:[%s284 + $0x2a8] sm:$0xff]
        %v553 = vld [vmem:[%s284 + $0x2b0] sm:$0xff]
        %v554 = vld [vmem:[%s284 + $0x2b8] sm:$0xff]
        %v555 = vld [vmem:[%s284 + $0x2c0] sm:$0xff]
        %v556 = vld [vmem:[%s284 + $0x2c8] sm:$0xff]
        %v557 = vld [vmem:[%s284 + $0x2d0] sm:$0xff]
        %v558 = vld [vmem:[%s284 + $0x2d8] sm:$0xff]
        %v559 = vld [vmem:[%s284 + $0x2e0] sm:$0xff]
        %v560 = vld [vmem:[%s284 + $0x2e8] sm:$0xff]
        %v561 = vld [vmem:[%s284 + $0x2f0] sm:$0xff]
        %v562 = vld [vmem:[%s284 + $0x2f8] sm:$0xff]
        %v563 = vld [vmem:[%s284 + $0x300] sm:$0xff]
        %v564 = vld [vmem:[%s284 + $0x308] sm:$0xff]
        %v565 = vld [vmem:[%s284 + $0x310] sm:$0xff]
        %v566 = vld [vmem:[%s284 + $0x318] sm:$0xff]
        %v567 = vld [vmem:[%s284 + $0x320] sm:$0xff]
        %v568 = vld [vmem:[%s284 + $0x328] sm:$0xff]
        %v569 = vld [vmem:[%s284 + $0x330] sm:$0xff]
        %v570 = vld [vmem:[%s284 + $0x338] sm:$0xff]
        %v571 = vld [vmem:[%s284 + $0x340] sm:$0xff]
        %v572 = vld [vmem:[%s284 + $0x348] sm:$0xff]
        %v573 = vld [vmem:[%s284 + $0x350] sm:$0xff]
        %v574 = vld [vmem:[%s284 + $0x358] sm:$0xff]
        %v575 = vld [vmem:[%s284 + $0x360] sm:$0xff]
        %v576 = vld [vmem:[%s284 + $0x368] sm:$0xff]
        %v577 = vld [vmem:[%s284 + $0x370] sm:$0xff]
        %v578 = vld [vmem:[%s284 + $0x378] sm:$0xff]
        %v579 = vld [vmem:[%s284 + $0x380] sm:$0xff]
        %v580 = vld [vmem:[%s284 + $0x388] sm:$0xff]
        %v581 = vld [vmem:[%s284 + $0x390] sm:$0xff]
        %v582 = vld [vmem:[%s284 + $0x398] sm:$0xff]
        %v583 = vld [vmem:[%s284 + $0x3a0] sm:$0xff]
        %v584 = vld [vmem:[%s284 + $0x3a8] sm:$0xff]
        %v585 = vld [vmem:[%s284 + $0x3b0] sm:$0xff]
        %v586 = vld [vmem:[%s284 + $0x3b8] sm:$0xff]
        %v587 = vld [vmem:[%s284 + $0x3c0] sm:$0xff]
        %v588 = vld [vmem:[%s284 + $0x3c8] sm:$0xff]
        %v589 = vld [vmem:[%s284 + $0x3d0] sm:$0xff]
        %v590 = vld [vmem:[%s284 + $0x3d8] sm:$0xff]
        %v591 = vld [vmem:[%s284 + $0x3e0] sm:$0xff]
        %v592 = vld [vmem:[%s284 + $0x3e8] sm:$0xff]
        %v593 = vld [vmem:[%s284 + $0x3f0] sm:$0xff]
        %v594 = vld [vmem:[%s284 + $0x3f8] sm:$0xff]
        %v595 = vld [vmem:[%s284 + $0x400] sm:$0xff]
        %v596 = vld [vmem:[%s284 + $0x408] sm:$0xff]
        %v597 = vld [vmem:[%s284 + $0x410] sm:$0xff]
        %v598 = vld [vmem:[%s284 + $0x418] sm:$0xff]
        %v599 = vld [vmem:[%s284 + $0x420] sm:$0xff]
        %v600 = vld [vmem:[%s284 + $0x428] sm:$0xff]
        %v601 = vld [vmem:[%s284 + $0x430] sm:$0xff]
        %v602 = vld [vmem:[%s284 + $0x438] sm:$0xff]
        %v603 = vld [vmem:[%s284 + $0x440] sm:$0xff]
        %v604 = vld [vmem:[%s284 + $0x448] sm:$0xff]
        %v605 = vld [vmem:[%s284 + $0x450] sm:$0xff]
        %v606 = vld [vmem:[%s284 + $0x458] sm:$0xff]
        %v607 = vld [vmem:[%s284 + $0x460] sm:$0xff]
        %v608 = vld [vmem:[%s284 + $0x468] sm:$0xff]
        %v609 = vld [vmem:[%s284 + $0x470] sm:$0xff]
        %v610 = vld [vmem:[%s284 + $0x478] sm:$0xff]
        %v611 = vld [vmem:[%s284 + $0x480] sm:$0xff]
        %v612 = vld [vmem:[%s284 + $0x488] sm:$0xff]
        %v613 = vld [vmem:[%s284 + $0x490] sm:$0xff]
        %v614 = vld [vmem:[%s284 + $0x498] sm:$0xff]
        %v615 = vld [vmem:[%s284 + $0x4a0] sm:$0xff]
        %v616 = vld [vmem:[%s284 + $0x4a8] sm:$0xff]
        %v617 = vld [vmem:[%s284 + $0x4b0] sm:$0xff]
        %v618 = vld [vmem:[%s284 + $0x4b8] sm:$0xff]
        %v619 = vld [vmem:[%s284 + $0x4c0] sm:$0xff]
        %v620 = vld [vmem:[%s284 + $0x4c8] sm:$0xff]
        %v621 = vld [vmem:[%s284 + $0x4d0] sm:$0xff]
        %v622 = vld [vmem:[%s284 + $0x4d8] sm:$0xff]
        %v623 = vld [vmem:[%s284 + $0x4e0] sm:$0xff]
        %v624 = vld [vmem:[%s284 + $0x4e8] sm:$0xff]
        %v625 = vld [vmem:[%s284 + $0x4f0] sm:$0xff]
        %v626 = vld [vmem:[%s284 + $0x4f8] sm:$0xff]
        %v627 = vld [vmem:[%s284 + $0x500] sm:$0xff]
        %v628 = vld [vmem:[%s284 + $0x508] sm:$0xff]
        %v629 = vld [vmem:[%s284 + $0x510] sm:$0xff]
        %v630 = vld [vmem:[%s284 + $0x518] sm:$0xff]
        %v631 = vld [vmem:[%s284 + $0x520] sm:$0xff]
        %v632 = vld [vmem:[%s284 + $0x528] sm:$0xff]
        %v633 = vld [vmem:[%s284 + $0x530] sm:$0xff]
        %v634 = vld [vmem:[%s284 + $0x538] sm:$0xff]
        %v635 = vld [vmem:[%s284 + $0x540] sm:$0xff]
        %v636 = vld [vmem:[%s284 + $0x548] sm:$0xff]
        %v637 = vld [vmem:[%s284 + $0x550] sm:$0xff]
        %v638 = vld [vmem:[%s284 + $0x558] sm:$0xff]
        %v639 = vld [vmem:[%s284 + $0x560] sm:$0xff]
        %v640 = vld [vmem:[%s284 + $0x568] sm:$0xff]
        %v641 = vld [vmem:[%s284 + $0x570] sm:$0xff]
        %v642 = vld [vmem:[%s284 + $0x578] sm:$0xff]
        %v643 = vld [vmem:[%s284 + $0x580] sm:$0xff]
        %v644 = vld [vmem:[%s284 + $0x588] sm:$0xff]
        %v645 = vld [vmem:[%s284 + $0x590] sm:$0xff]
        %v646 = vld [vmem:[%s284 + $0x598] sm:$0xff]
        %v647 = vld [vmem:[%s284 + $0x5a0] sm:$0xff]
        %v648 = vld [vmem:[%s284 + $0x5a8] sm:$0xff]
        %v649 = vld [vmem:[%s284 + $0x5b0] sm:$0xff]
        %v650 = vld [vmem:[%s284 + $0x5b8] sm:$0xff]
        %v651 = vld [vmem:[%s284 + $0x5c0] sm:$0xff]
        %v652 = vld [vmem:[%s284 + $0x5c8] sm:$0xff]
        %v653 = vld [vmem:[%s284 + $0x5d0] sm:$0xff]
        %v654 = vld [vmem:[%s284 + $0x5d8] sm:$0xff]
        %v655 = vld [vmem:[%s284 + $0x5e0] sm:$0xff]
        %v656 = vld [vmem:[%s284 + $0x5e8] sm:$0xff]
        %v657 = vld [vmem:[%s284 + $0x5f0] sm:$0xff]
        %v658 = vld [vmem:[%s284 + $0x5f8] sm:$0xff]
        %v659 = vld [vmem:[%s284 + $0x600] sm:$0xff]
        %v660 = vld [vmem:[%s284 + $0x608] sm:$0xff]
        %v661 = vld [vmem:[%s284 + $0x610] sm:$0xff]
        %v662 = vld [vmem:[%s284 + $0x618] sm:$0xff]
        %v663 = vld [vmem:[%s284 + $0x620] sm:$0xff]
        %v664 = vld [vmem:[%s284 + $0x628] sm:$0xff]
        %v665 = vld [vmem:[%s284 + $0x630] sm:$0xff]
        %v666 = vld [vmem:[%s284 + $0x638] sm:$0xff]
        %v667 = vld [vmem:[%s284 + $0x640] sm:$0xff]
        %v668 = vld [vmem:[%s284 + $0x648] sm:$0xff]
        %v669 = vld [vmem:[%s284 + $0x650] sm:$0xff]
        %v670 = vld [vmem:[%s284 + $0x658] sm:$0xff]
        %v671 = vld [vmem:[%s284 + $0x660] sm:$0xff]
        %v672 = vld [vmem:[%s284 + $0x668] sm:$0xff]
        %v673 = vld [vmem:[%s284 + $0x670] sm:$0xff]
        %v674 = vld [vmem:[%s284 + $0x678] sm:$0xff]
        %v675 = vld [vmem:[%s284 + $0x680] sm:$0xff]
        %v676 = vld [vmem:[%s284 + $0x688] sm:$0xff]
        %v677 = vld [vmem:[%s284 + $0x690] sm:$0xff]
        %v678 = vld [vmem:[%s284 + $0x698] sm:$0xff]
        %v679 = vld [vmem:[%s284 + $0x6a0] sm:$0xff]
        %v680 = vld [vmem:[%s284 + $0x6a8] sm:$0xff]
        %v681 = vld [vmem:[%s284 + $0x6b0] sm:$0xff]
        %v682 = vld [vmem:[%s284 + $0x6b8] sm:$0xff]
        %v683 = vld [vmem:[%s284 + $0x6c0] sm:$0xff]
        %v684 = vld [vmem:[%s284 + $0x6c8] sm:$0xff]
        %v685 = vld [vmem:[%s284 + $0x6d0] sm:$0xff]
        %v686 = vld [vmem:[%s284 + $0x6d8] sm:$0xff]
        %v687 = vld [vmem:[%s284 + $0x6e0] sm:$0xff]
        %v688 = vld [vmem:[%s284 + $0x6e8] sm:$0xff]
        %v689 = vld [vmem:[%s284 + $0x6f0] sm:$0xff]
        %v690 = vld [vmem:[%s284 + $0x6f8] sm:$0xff]
        %v691 = vld [vmem:[%s284 + $0x700] sm:$0xff]
        %v692 = vld [vmem:[%s284 + $0x708] sm:$0xff]
        %v693 = vld [vmem:[%s284 + $0x710] sm:$0xff]
        %v694 = vld [vmem:[%s284 + $0x718] sm:$0xff]
        %v695 = vld [vmem:[%s284 + $0x720] sm:$0xff]
        %v696 = vld [vmem:[%s284 + $0x728] sm:$0xff]
        %v697 = vld [vmem:[%s284 + $0x730] sm:$0xff]
        %v698 = vld [vmem:[%s284 + $0x738] sm:$0xff]
        %v699 = vld [vmem:[%s284 + $0x740] sm:$0xff]
        %v700 = vld [vmem:[%s284 + $0x748] sm:$0xff]
        %v701 = vld [vmem:[%s284 + $0x750] sm:$0xff]
        %v702 = vld [vmem:[%s284 + $0x758] sm:$0xff]
        %v703 = vld [vmem:[%s284 + $0x760] sm:$0xff]
        %v704 = vld [vmem:[%s284 + $0x768] sm:$0xff]
        %v705 = vld [vmem:[%s284 + $0x770] sm:$0xff]
        %v706 = vld [vmem:[%s284 + $0x778] sm:$0xff]
        %v707 = vld [vmem:[%s284 + $0x780] sm:$0xff]
        %v708 = vld [vmem:[%s284 + $0x788] sm:$0xff]
        %v709 = vld [vmem:[%s284 + $0x790] sm:$0xff]
        %v710 = vld [vmem:[%s284 + $0x798] sm:$0xff]
        %v711 = vld [vmem:[%s284 + $0x7a0] sm:$0xff]
        %v712 = vld [vmem:[%s284 + $0x7a8] sm:$0xff]
        %v713 = vld [vmem:[%s284 + $0x7b0] sm:$0xff]
        %v714 = vld [vmem:[%s284 + $0x7b8] sm:$0xff]
        %v715 = vld [vmem:[%s284 + $0x7c0] sm:$0xff]
        %v716 = vld [vmem:[%s284 + $0x7c8] sm:$0xff]
        %v717 = vld [vmem:[%s284 + $0x7d0] sm:$0xff]
        %v718 = vld [vmem:[%s284 + $0x7d8] sm:$0xff]
        %v719 = vld [vmem:[%s284 + $0x7e0] sm:$0xff]
        %v720 = vld [vmem:[%s284 + $0x7e8] sm:$0xff]
        %v721 = vld [vmem:[%s284 + $0x7f0] sm:$0xff]
        %v722 = vld [vmem:[%s284 + $0x7f8] sm:$0xff]
        %v723 = vld [vmem:[#allocation2] sm:$0xf]
        %v724 = vld [vmem:[#allocation2 + $0x4] sm:$0xf]
        %v725 = vld [vmem:[#allocation2 + $0x8] sm:$0xf]
        %v726 = vld [vmem:[#allocation2 + $0xc] sm:$0xf]
        %v727 = vld [vmem:[#allocation2 + $0x10] sm:$0xf]
        %v728 = vld [vmem:[#allocation2 + $0x14] sm:$0xf]
        %v729 = vld [vmem:[#allocation2 + $0x18] sm:$0xf]
        %v730 = vld [vmem:[#allocation2 + $0x1c] sm:$0xf]
        %v731 = vld [vmem:[#allocation2 + $0x20] sm:$0xf]
        %v732 = vld [vmem:[#allocation2 + $0x24] sm:$0xf]
        %v733 = vld [vmem:[#allocation2 + $0x28] sm:$0xf]
        %v734 = vld [vmem:[#allocation2 + $0x2c] sm:$0xf]
        %v735 = vld [vmem:[#allocation2 + $0x30] sm:$0xf]
        %v736 = vld [vmem:[#allocation2 + $0x34] sm:$0xf]
        %v737 = vld [vmem:[#allocation2 + $0x38] sm:$0xf]
        %v738 = vld [vmem:[#allocation2 + $0x3c] sm:$0xf]
        %v739 = vld [vmem:[#allocation2 + $0x40] sm:$0xf]
        %v740 = vld [vmem:[#allocation2 + $0x44] sm:$0xf]
        %v741 = vld [vmem:[#allocation2 + $0x48] sm:$0xf]
        %v742 = vld [vmem:[#allocation2 + $0x4c] sm:$0xf]
        %v743 = vld [vmem:[#allocation2 + $0x50] sm:$0xf]
        %v744 = vld [vmem:[#allocation2 + $0x54] sm:$0xf]
        %v745 = vld [vmem:[#allocation2 + $0x58] sm:$0xf]
        %v746 = vld [vmem:[#allocation2 + $0x5c] sm:$0xf]
        %v747 = vld [vmem:[#allocation2 + $0x60] sm:$0xf]
        %v748 = vld [vmem:[#allocation2 + $0x64] sm:$0xf]
        %v749 = vld [vmem:[#allocation2 + $0x68] sm:$0xf]
        %v750 = vld [vmem:[#allocation2 + $0x6c] sm:$0xf]
        %v751 = vld [vmem:[#allocation2 + $0x70] sm:$0xf]
        %v752 = vld [vmem:[#allocation2 + $0x74] sm:$0xf]
        %v753 = vld [vmem:[#allocation2 + $0x78] sm:$0xf]
        %v754 = vld [vmem:[#allocation2 + $0x7c] sm:$0xf]
        %v755 = vld [vmem:[#allocation2 + $0x80] sm:$0xf]
        %v756 = vld [vmem:[#allocation2 + $0x84] sm:$0xf]
        %v757 = vld [vmem:[#allocation2 + $0x88] sm:$0xf]
        %v758 = vld [vmem:[#allocation2 + $0x8c] sm:$0xf]
        %v759 = vld [vmem:[#allocation2 + $0x90] sm:$0xf]
        %v760 = vld [vmem:[#allocation2 + $0x94] sm:$0xf]
        %v761 = vld [vmem:[#allocation2 + $0x98] sm:$0xf]
        %v762 = vld [vmem:[#allocation2 + $0x9c] sm:$0xf]
        %v763 = vld [vmem:[#allocation2 + $0xa0] sm:$0xf]
        %v764 = vld [vmem:[#allocation2 + $0xa4] sm:$0xf]
        %v765 = vld [vmem:[#allocation2 + $0xa8] sm:$0xf]
        %v766 = vld [vmem:[#allocation2 + $0xac] sm:$0xf]
        %v767 = vld [vmem:[#allocation2 + $0xb0] sm:$0xf]
        %v768 = vld [vmem:[#allocation2 + $0xb4] sm:$0xf]
        %v769 = vld [vmem:[#allocation2 + $0xb8] sm:$0xf]
        %v770 = vld [vmem:[#allocation2 + $0xbc] sm:$0xf]
        %v771 = vld [vmem:[#allocation2 + $0xc0] sm:$0xf]
        %v772 = vld [vmem:[#allocation2 + $0xc4] sm:$0xf]
        %v773 = vld [vmem:[#allocation2 + $0xc8] sm:$0xf]
        %v774 = vld [vmem:[#allocation2 + $0xcc] sm:$0xf]
        %v775 = vld [vmem:[#allocation2 + $0xd0] sm:$0xf]
        %v776 = vld [vmem:[#allocation2 + $0xd4] sm:$0xf]
        %v777 = vld [vmem:[#allocation2 + $0xd8] sm:$0xf]
        %v778 = vld [vmem:[#allocation2 + $0xdc] sm:$0xf]
        %v779 = vld [vmem:[#allocation2 + $0xe0] sm:$0xf]
        %v780 = vld [vmem:[#allocation2 + $0xe4] sm:$0xf]
        %v781 = vld [vmem:[#allocation2 + $0xe8] sm:$0xf]
        %v782 = vld [vmem:[#allocation2 + $0xec] sm:$0xf]
        %v783 = vld [vmem:[#allocation2 + $0xf0] sm:$0xf]
        %v784 = vld [vmem:[#allocation2 + $0xf4] sm:$0xf]
        %v785 = vld [vmem:[#allocation2 + $0xf8] sm:$0xf]
        %v786 = vld [vmem:[#allocation2 + $0xfc] sm:$0xf]
        %v787 = vld [vmem:[#allocation2 + $0x100] sm:$0xf]
        %v788 = vld [vmem:[#allocation2 + $0x104] sm:$0xf]
        %v789 = vld [vmem:[#allocation2 + $0x108] sm:$0xf]
        %v790 = vld [vmem:[#allocation2 + $0x10c] sm:$0xf]
        %v791 = vld [vmem:[#allocation2 + $0x110] sm:$0xf]
        %v792 = vld [vmem:[#allocation2 + $0x114] sm:$0xf]
        %v793 = vld [vmem:[#allocation2 + $0x118] sm:$0xf]
        %v794 = vld [vmem:[#allocation2 + $0x11c] sm:$0xf]
        %v795 = vld [vmem:[#allocation2 + $0x120] sm:$0xf]
        %v796 = vld [vmem:[#allocation2 + $0x124] sm:$0xf]
        %v797 = vld [vmem:[#allocation2 + $0x128] sm:$0xf]
        %v798 = vld [vmem:[#allocation2 + $0x12c] sm:$0xf]
        %v799 = vld [vmem:[#allocation2 + $0x130] sm:$0xf]
        %v800 = vld [vmem:[#allocation2 + $0x134] sm:$0xf]
        %v801 = vld [vmem:[#allocation2 + $0x138] sm:$0xf]
        %v802 = vld [vmem:[#allocation2 + $0x13c] sm:$0xf]
        %v803 = vld [vmem:[#allocation2 + $0x140] sm:$0xf]
        %v804 = vld [vmem:[#allocation2 + $0x144] sm:$0xf]
        %v805 = vld [vmem:[#allocation2 + $0x148] sm:$0xf]
        %v806 = vld [vmem:[#allocation2 + $0x14c] sm:$0xf]
        %v807 = vld [vmem:[#allocation2 + $0x150] sm:$0xf]
        %v808 = vld [vmem:[#allocation2 + $0x154] sm:$0xf]
        %v809 = vld [vmem:[#allocation2 + $0x158] sm:$0xf]
        %v810 = vld [vmem:[#allocation2 + $0x15c] sm:$0xf]
        %v811 = vld [vmem:[#allocation2 + $0x160] sm:$0xf]
        %v812 = vld [vmem:[#allocation2 + $0x164] sm:$0xf]
        %v813 = vld [vmem:[#allocation2 + $0x168] sm:$0xf]
        %v814 = vld [vmem:[#allocation2 + $0x16c] sm:$0xf]
        %v815 = vld [vmem:[#allocation2 + $0x170] sm:$0xf]
        %v816 = vld [vmem:[#allocation2 + $0x174] sm:$0xf]
        %v817 = vld [vmem:[#allocation2 + $0x178] sm:$0xf]
        %v818 = vld [vmem:[#allocation2 + $0x17c] sm:$0xf]
        %v819 = vld [vmem:[#allocation2 + $0x180] sm:$0xf]
        %v820 = vld [vmem:[#allocation2 + $0x184] sm:$0xf]
        %v821 = vld [vmem:[#allocation2 + $0x188] sm:$0xf]
        %v822 = vld [vmem:[#allocation2 + $0x18c] sm:$0xf]
        %v823 = vld [vmem:[#allocation2 + $0x190] sm:$0xf]
        %v824 = vld [vmem:[#allocation2 + $0x194] sm:$0xf]
        %v825 = vld [vmem:[#allocation2 + $0x198] sm:$0xf]
        %v826 = vld [vmem:[#allocation2 + $0x19c] sm:$0xf]
        %v827 = vld [vmem:[#allocation2 + $0x1a0] sm:$0xf]
        %v828 = vld [vmem:[#allocation2 + $0x1a4] sm:$0xf]
        %v829 = vld [vmem:[#allocation2 + $0x1a8] sm:$0xf]
        %v830 = vld [vmem:[#allocation2 + $0x1ac] sm:$0xf]
        %v831 = vld [vmem:[#allocation2 + $0x1b0] sm:$0xf]
        %v832 = vld [vmem:[#allocation2 + $0x1b4] sm:$0xf]
        %v833 = vld [vmem:[#allocation2 + $0x1b8] sm:$0xf]
        %v834 = vld [vmem:[#allocation2 + $0x1bc] sm:$0xf]
        %v835 = vld [vmem:[#allocation2 + $0x1c0] sm:$0xf]
        %v836 = vld [vmem:[#allocation2 + $0x1c4] sm:$0xf]
        %v837 = vld [vmem:[#allocation2 + $0x1c8] sm:$0xf]
        %v838 = vld [vmem:[#allocation2 + $0x1cc] sm:$0xf]
        %v839 = vld [vmem:[#allocation2 + $0x1d0] sm:$0xf]
        %v840 = vld [vmem:[#allocation2 + $0x1d4] sm:$0xf]
        %v841 = vld [vmem:[#allocation2 + $0x1d8] sm:$0xf]
        %v842 = vld [vmem:[#allocation2 + $0x1dc] sm:$0xf]
        %v843 = vld [vmem:[#allocation2 + $0x1e0] sm:$0xf]
        %v844 = vld [vmem:[#allocation2 + $0x1e4] sm:$0xf]
        %v845 = vld [vmem:[#allocation2 + $0x1e8] sm:$0xf]
        %v846 = vld [vmem:[#allocation2 + $0x1ec] sm:$0xf]
        %v847 = vld [vmem:[#allocation2 + $0x1f0] sm:$0xf]
        %v848 = vld [vmem:[#allocation2 + $0x1f4] sm:$0xf]
        %v849 = vld [vmem:[#allocation2 + $0x1f8] sm:$0xf]
        %v850 = vld [vmem:[#allocation2 + $0x1fc] sm:$0xf]
        %v1107 = vunpack.c.l.b16 %v467
        %v1108 = vunpack.c.h.b16 %v467
        %v1109 = vunpack.c.l.b16 %v468
        %v1110 = vunpack.c.h.b16 %v468
        %v1111 = vunpack.c.l.b16 %v469
        %v1112 = vunpack.c.h.b16 %v469
        %v1113 = vunpack.c.l.b16 %v470
        %v1114 = vunpack.c.h.b16 %v470
        %v1115 = vunpack.c.l.b16 %v471
        %v1116 = vunpack.c.h.b16 %v471
        %v1117 = vunpack.c.l.b16 %v472
        %v1118 = vunpack.c.h.b16 %v472
        %v1119 = vunpack.c.l.b16 %v473
        %v1120 = vunpack.c.h.b16 %v473
        %v1121 = vunpack.c.l.b16 %v474
        %v1122 = vunpack.c.h.b16 %v474
        %v1123 = vunpack.c.l.b16 %v475
        %v1124 = vunpack.c.h.b16 %v475
        %v1125 = vunpack.c.l.b16 %v476
        %v1126 = vunpack.c.h.b16 %v476
        %v1127 = vunpack.c.l.b16 %v477
        %v1128 = vunpack.c.h.b16 %v477
        %v1129 = vunpack.c.l.b16 %v478
        %v1130 = vunpack.c.h.b16 %v478
        %v1131 = vunpack.c.l.b16 %v479
        %v1132 = vunpack.c.h.b16 %v479
        %v1133 = vunpack.c.l.b16 %v480
        %v1134 = vunpack.c.h.b16 %v480
        %v1135 = vunpack.c.l.b16 %v481
        %v1136 = vunpack.c.h.b16 %v481
        %v1137 = vunpack.c.l.b16 %v482
        %v1138 = vunpack.c.h.b16 %v482
        %v1139 = vunpack.c.l.b16 %v483
        %v1140 = vunpack.c.h.b16 %v483
        %v1141 = vunpack.c.l.b16 %v484
        %v1142 = vunpack.c.h.b16 %v484
        %v1143 = vunpack.c.l.b16 %v485
        %v1144 = vunpack.c.h.b16 %v485
        %v1145 = vunpack.c.l.b16 %v486
        %v1146 = vunpack.c.h.b16 %v486
        %v1147 = vunpack.c.l.b16 %v487
        %v1148 = vunpack.c.h.b16 %v487
        %v1149 = vunpack.c.l.b16 %v488
        %v1150 = vunpack.c.h.b16 %v488
        %v1151 = vunpack.c.l.b16 %v489
        %v1152 = vunpack.c.h.b16 %v489
        %v1153 = vunpack.c.l.b16 %v490
        %v1154 = vunpack.c.h.b16 %v490
        %v1155 = vunpack.c.l.b16 %v491
        %v1156 = vunpack.c.h.b16 %v491
        %v1157 = vunpack.c.l.b16 %v492
        %v1158 = vunpack.c.h.b16 %v492
        %v1159 = vunpack.c.l.b16 %v493
        %v1160 = vunpack.c.h.b16 %v493
        %v1161 = vunpack.c.l.b16 %v494
        %v1162 = vunpack.c.h.b16 %v494
        %v1163 = vunpack.c.l.b16 %v495
        %v1164 = vunpack.c.h.b16 %v495
        %v1165 = vunpack.c.l.b16 %v496
        %v1166 = vunpack.c.h.b16 %v496
        %v1167 = vunpack.c.l.b16 %v497
        %v1168 = vunpack.c.h.b16 %v497
        %v1169 = vunpack.c.l.b16 %v498
        %v1170 = vunpack.c.h.b16 %v498
        %v1171 = vunpack.c.l.b16 %v499
        %v1172 = vunpack.c.h.b16 %v499
        %v1173 = vunpack.c.l.b16 %v500
        %v1174 = vunpack.c.h.b16 %v500
        %v1175 = vunpack.c.l.b16 %v501
        %v1176 = vunpack.c.h.b16 %v501
        %v1177 = vunpack.c.l.b16 %v502
        %v1178 = vunpack.c.h.b16 %v502
        %v1179 = vunpack.c.l.b16 %v503
        %v1180 = vunpack.c.h.b16 %v503
        %v1181 = vunpack.c.l.b16 %v504
        %v1182 = vunpack.c.h.b16 %v504
        %v1183 = vunpack.c.l.b16 %v505
        %v1184 = vunpack.c.h.b16 %v505
        %v1185 = vunpack.c.l.b16 %v506
        %v1186 = vunpack.c.h.b16 %v506
        %v1187 = vunpack.c.l.b16 %v507
        %v1188 = vunpack.c.h.b16 %v507
        %v1189 = vunpack.c.l.b16 %v508
        %v1190 = vunpack.c.h.b16 %v508
        %v1191 = vunpack.c.l.b16 %v509
        %v1192 = vunpack.c.h.b16 %v509
        %v1193 = vunpack.c.l.b16 %v510
        %v1194 = vunpack.c.h.b16 %v510
        %v1195 = vunpack.c.l.b16 %v511
        %v1196 = vunpack.c.h.b16 %v511
        %v1197 = vunpack.c.l.b16 %v512
        %v1198 = vunpack.c.h.b16 %v512
        %v1199 = vunpack.c.l.b16 %v513
        %v1200 = vunpack.c.h.b16 %v513
        %v1201 = vunpack.c.l.b16 %v514
        %v1202 = vunpack.c.h.b16 %v514
        %v1203 = vunpack.c.l.b16 %v515
        %v1204 = vunpack.c.h.b16 %v515
        %v1205 = vunpack.c.l.b16 %v516
        %v1206 = vunpack.c.h.b16 %v516
        %v1207 = vunpack.c.l.b16 %v517
        %v1208 = vunpack.c.h.b16 %v517
        %v1209 = vunpack.c.l.b16 %v518
        %v1210 = vunpack.c.h.b16 %v518
        %v1211 = vunpack.c.l.b16 %v519
        %v1212 = vunpack.c.h.b16 %v519
        %v1213 = vunpack.c.l.b16 %v520
        %v1214 = vunpack.c.h.b16 %v520
        %v1215 = vunpack.c.l.b16 %v521
        %v1216 = vunpack.c.h.b16 %v521
        %v1217 = vunpack.c.l.b16 %v522
        %v1218 = vunpack.c.h.b16 %v522
        %v1219 = vunpack.c.l.b16 %v523
        %v1220 = vunpack.c.h.b16 %v523
        %v1221 = vunpack.c.l.b16 %v524
        %v1222 = vunpack.c.h.b16 %v524
        %v1223 = vunpack.c.l.b16 %v525
        %v1224 = vunpack.c.h.b16 %v525
        %v1225 = vunpack.c.l.b16 %v526
        %v1226 = vunpack.c.h.b16 %v526
        %v1227 = vunpack.c.l.b16 %v527
        %v1228 = vunpack.c.h.b16 %v527
        %v1229 = vunpack.c.l.b16 %v528
        %v1230 = vunpack.c.h.b16 %v528
        %v1231 = vunpack.c.l.b16 %v529
        %v1232 = vunpack.c.h.b16 %v529
        %v1233 = vunpack.c.l.b16 %v530
        %v1234 = vunpack.c.h.b16 %v530
        %v1235 = vunpack.c.l.b16 %v531
        %v1236 = vunpack.c.h.b16 %v531
        %v1237 = vunpack.c.l.b16 %v532
        %v1238 = vunpack.c.h.b16 %v532
        %v1239 = vunpack.c.l.b16 %v533
        %v1240 = vunpack.c.h.b16 %v533
        %v1241 = vunpack.c.l.b16 %v534
        %v1242 = vunpack.c.h.b16 %v534
        %v1243 = vunpack.c.l.b16 %v535
        %v1244 = vunpack.c.h.b16 %v535
        %v1245 = vunpack.c.l.b16 %v536
        %v1246 = vunpack.c.h.b16 %v536
        %v1247 = vunpack.c.l.b16 %v537
        %v1248 = vunpack.c.h.b16 %v537
        %v1249 = vunpack.c.l.b16 %v538
        %v1250 = vunpack.c.h.b16 %v538
        %v1251 = vunpack.c.l.b16 %v539
        %v1252 = vunpack.c.h.b16 %v539
        %v1253 = vunpack.c.l.b16 %v540
        %v1254 = vunpack.c.h.b16 %v540
        %v1255 = vunpack.c.l.b16 %v541
        %v1256 = vunpack.c.h.b16 %v541
        %v1257 = vunpack.c.l.b16 %v542
        %v1258 = vunpack.c.h.b16 %v542
        %v1259 = vunpack.c.l.b16 %v543
        %v1260 = vunpack.c.h.b16 %v543
        %v1261 = vunpack.c.l.b16 %v544
        %v1262 = vunpack.c.h.b16 %v544
        %v1263 = vunpack.c.l.b16 %v545
        %v1264 = vunpack.c.h.b16 %v545
        %v1265 = vunpack.c.l.b16 %v546
        %v1266 = vunpack.c.h.b16 %v546
        %v1267 = vunpack.c.l.b16 %v547
        %v1268 = vunpack.c.h.b16 %v547
        %v1269 = vunpack.c.l.b16 %v548
        %v1270 = vunpack.c.h.b16 %v548
        %v1271 = vunpack.c.l.b16 %v549
        %v1272 = vunpack.c.h.b16 %v549
        %v1273 = vunpack.c.l.b16 %v550
        %v1274 = vunpack.c.h.b16 %v550
        %v1275 = vunpack.c.l.b16 %v551
        %v1276 = vunpack.c.h.b16 %v551
        %v1277 = vunpack.c.l.b16 %v552
        %v1278 = vunpack.c.h.b16 %v552
        %v1279 = vunpack.c.l.b16 %v553
        %v1280 = vunpack.c.h.b16 %v553
        %v1281 = vunpack.c.l.b16 %v554
        %v1282 = vunpack.c.h.b16 %v554
        %v1283 = vunpack.c.l.b16 %v555
        %v1284 = vunpack.c.h.b16 %v555
        %v1285 = vunpack.c.l.b16 %v556
        %v1286 = vunpack.c.h.b16 %v556
        %v1287 = vunpack.c.l.b16 %v557
        %v1288 = vunpack.c.h.b16 %v557
        %v1289 = vunpack.c.l.b16 %v558
        %v1290 = vunpack.c.h.b16 %v558
        %v1291 = vunpack.c.l.b16 %v559
        %v1292 = vunpack.c.h.b16 %v559
        %v1293 = vunpack.c.l.b16 %v560
        %v1294 = vunpack.c.h.b16 %v560
        %v1295 = vunpack.c.l.b16 %v561
        %v1296 = vunpack.c.h.b16 %v561
        %v1297 = vunpack.c.l.b16 %v562
        %v1298 = vunpack.c.h.b16 %v562
        %v1299 = vunpack.c.l.b16 %v563
        %v1300 = vunpack.c.h.b16 %v563
        %v1301 = vunpack.c.l.b16 %v564
        %v1302 = vunpack.c.h.b16 %v564
        %v1303 = vunpack.c.l.b16 %v565
        %v1304 = vunpack.c.h.b16 %v565
        %v1305 = vunpack.c.l.b16 %v566
        %v1306 = vunpack.c.h.b16 %v566
        %v1307 = vunpack.c.l.b16 %v567
        %v1308 = vunpack.c.h.b16 %v567
        %v1309 = vunpack.c.l.b16 %v568
        %v1310 = vunpack.c.h.b16 %v568
        %v1311 = vunpack.c.l.b16 %v569
        %v1312 = vunpack.c.h.b16 %v569
        %v1313 = vunpack.c.l.b16 %v570
        %v1314 = vunpack.c.h.b16 %v570
        %v1315 = vunpack.c.l.b16 %v571
        %v1316 = vunpack.c.h.b16 %v571
        %v1317 = vunpack.c.l.b16 %v572
        %v1318 = vunpack.c.h.b16 %v572
        %v1319 = vunpack.c.l.b16 %v573
        %v1320 = vunpack.c.h.b16 %v573
        %v1321 = vunpack.c.l.b16 %v574
        %v1322 = vunpack.c.h.b16 %v574
        %v1323 = vunpack.c.l.b16 %v575
        %v1324 = vunpack.c.h.b16 %v575
        %v1325 = vunpack.c.l.b16 %v576
        %v1326 = vunpack.c.h.b16 %v576
        %v1327 = vunpack.c.l.b16 %v577
        %v1328 = vunpack.c.h.b16 %v577
        %v1329 = vunpack.c.l.b16 %v578
        %v1330 = vunpack.c.h.b16 %v578
        %v1331 = vunpack.c.l.b16 %v579
        %v1332 = vunpack.c.h.b16 %v579
        %v1333 = vunpack.c.l.b16 %v580
        %v1334 = vunpack.c.h.b16 %v580
        %v1335 = vunpack.c.l.b16 %v581
        %v1336 = vunpack.c.h.b16 %v581
        %v1337 = vunpack.c.l.b16 %v582
        %v1338 = vunpack.c.h.b16 %v582
        %v1339 = vunpack.c.l.b16 %v583
        %v1340 = vunpack.c.h.b16 %v583
        %v1341 = vunpack.c.l.b16 %v584
        %v1342 = vunpack.c.h.b16 %v584
        %v1343 = vunpack.c.l.b16 %v585
        %v1344 = vunpack.c.h.b16 %v585
        %v1345 = vunpack.c.l.b16 %v586
        %v1346 = vunpack.c.h.b16 %v586
        %v1347 = vunpack.c.l.b16 %v587
        %v1348 = vunpack.c.h.b16 %v587
        %v1349 = vunpack.c.l.b16 %v588
        %v1350 = vunpack.c.h.b16 %v588
        %v1351 = vunpack.c.l.b16 %v589
        %v1352 = vunpack.c.h.b16 %v589
        %v1353 = vunpack.c.l.b16 %v590
        %v1354 = vunpack.c.h.b16 %v590
        %v1355 = vunpack.c.l.b16 %v591
        %v1356 = vunpack.c.h.b16 %v591
        %v1357 = vunpack.c.l.b16 %v592
        %v1358 = vunpack.c.h.b16 %v592
        %v1359 = vunpack.c.l.b16 %v593
        %v1360 = vunpack.c.h.b16 %v593
        %v1361 = vunpack.c.l.b16 %v594
        %v1362 = vunpack.c.h.b16 %v594
        %v1363 = vunpack.c.l.b16 %v595
        %v1364 = vunpack.c.h.b16 %v595
        %v1365 = vunpack.c.l.b16 %v596
        %v1366 = vunpack.c.h.b16 %v596
        %v1367 = vunpack.c.l.b16 %v597
        %v1368 = vunpack.c.h.b16 %v597
        %v1369 = vunpack.c.l.b16 %v598
        %v1370 = vunpack.c.h.b16 %v598
        %v1371 = vunpack.c.l.b16 %v599
        %v1372 = vunpack.c.h.b16 %v599
        %v1373 = vunpack.c.l.b16 %v600
        %v1374 = vunpack.c.h.b16 %v600
        %v1375 = vunpack.c.l.b16 %v601
        %v1376 = vunpack.c.h.b16 %v601
        %v1377 = vunpack.c.l.b16 %v602
        %v1378 = vunpack.c.h.b16 %v602
        %v1379 = vunpack.c.l.b16 %v603
        %v1380 = vunpack.c.h.b16 %v603
        %v1381 = vunpack.c.l.b16 %v604
        %v1382 = vunpack.c.h.b16 %v604
        %v1383 = vunpack.c.l.b16 %v605
        %v1384 = vunpack.c.h.b16 %v605
        %v1385 = vunpack.c.l.b16 %v606
        %v1386 = vunpack.c.h.b16 %v606
        %v1387 = vunpack.c.l.b16 %v607
        %v1388 = vunpack.c.h.b16 %v607
        %v1389 = vunpack.c.l.b16 %v608
        %v1390 = vunpack.c.h.b16 %v608
        %v1391 = vunpack.c.l.b16 %v609
        %v1392 = vunpack.c.h.b16 %v609
        %v1393 = vunpack.c.l.b16 %v610
        %v1394 = vunpack.c.h.b16 %v610
        %v1395 = vunpack.c.l.b16 %v611
        %v1396 = vunpack.c.h.b16 %v611
        %v1397 = vunpack.c.l.b16 %v612
        %v1398 = vunpack.c.h.b16 %v612
        %v1399 = vunpack.c.l.b16 %v613
        %v1400 = vunpack.c.h.b16 %v613
        %v1401 = vunpack.c.l.b16 %v614
        %v1402 = vunpack.c.h.b16 %v614
        %v1403 = vunpack.c.l.b16 %v615
        %v1404 = vunpack.c.h.b16 %v615
        %v1405 = vunpack.c.l.b16 %v616
        %v1406 = vunpack.c.h.b16 %v616
        %v1407 = vunpack.c.l.b16 %v617
        %v1408 = vunpack.c.h.b16 %v617
        %v1409 = vunpack.c.l.b16 %v618
        %v1410 = vunpack.c.h.b16 %v618
        %v1411 = vunpack.c.l.b16 %v619
        %v1412 = vunpack.c.h.b16 %v619
        %v1413 = vunpack.c.l.b16 %v620
        %v1414 = vunpack.c.h.b16 %v620
        %v1415 = vunpack.c.l.b16 %v621
        %v1416 = vunpack.c.h.b16 %v621
        %v1417 = vunpack.c.l.b16 %v622
        %v1418 = vunpack.c.h.b16 %v622
        %v1419 = vunpack.c.l.b16 %v623
        %v1420 = vunpack.c.h.b16 %v623
        %v1421 = vunpack.c.l.b16 %v624
        %v1422 = vunpack.c.h.b16 %v624
        %v1423 = vunpack.c.l.b16 %v625
        %v1424 = vunpack.c.h.b16 %v625
        %v1425 = vunpack.c.l.b16 %v626
        %v1426 = vunpack.c.h.b16 %v626
        %v1427 = vunpack.c.l.b16 %v627
        %v1428 = vunpack.c.h.b16 %v627
        %v1429 = vunpack.c.l.b16 %v628
        %v1430 = vunpack.c.h.b16 %v628
        %v1431 = vunpack.c.l.b16 %v629
        %v1432 = vunpack.c.h.b16 %v629
        %v1433 = vunpack.c.l.b16 %v630
        %v1434 = vunpack.c.h.b16 %v630
        %v1435 = vunpack.c.l.b16 %v631
        %v1436 = vunpack.c.h.b16 %v631
        %v1437 = vunpack.c.l.b16 %v632
        %v1438 = vunpack.c.h.b16 %v632
        %v1439 = vunpack.c.l.b16 %v633
        %v1440 = vunpack.c.h.b16 %v633
        %v1441 = vunpack.c.l.b16 %v634
        %v1442 = vunpack.c.h.b16 %v634
        %v1443 = vunpack.c.l.b16 %v635
        %v1444 = vunpack.c.h.b16 %v635
        %v1445 = vunpack.c.l.b16 %v636
        %v1446 = vunpack.c.h.b16 %v636
        %v1447 = vunpack.c.l.b16 %v637
        %v1448 = vunpack.c.h.b16 %v637
        %v1449 = vunpack.c.l.b16 %v638
        %v1450 = vunpack.c.h.b16 %v638
        %v1451 = vunpack.c.l.b16 %v639
        %v1452 = vunpack.c.h.b16 %v639
        %v1453 = vunpack.c.l.b16 %v640
        %v1454 = vunpack.c.h.b16 %v640
        %v1455 = vunpack.c.l.b16 %v641
        %v1456 = vunpack.c.h.b16 %v641
        %v1457 = vunpack.c.l.b16 %v642
        %v1458 = vunpack.c.h.b16 %v642
        %v1459 = vunpack.c.l.b16 %v643
        %v1460 = vunpack.c.h.b16 %v643
        %v1461 = vunpack.c.l.b16 %v644
        %v1462 = vunpack.c.h.b16 %v644
        %v1463 = vunpack.c.l.b16 %v645
        %v1464 = vunpack.c.h.b16 %v645
        %v1465 = vunpack.c.l.b16 %v646
        %v1466 = vunpack.c.h.b16 %v646
        %v1467 = vunpack.c.l.b16 %v647
        %v1468 = vunpack.c.h.b16 %v647
        %v1469 = vunpack.c.l.b16 %v648
        %v1470 = vunpack.c.h.b16 %v648
        %v1471 = vunpack.c.l.b16 %v649
        %v1472 = vunpack.c.h.b16 %v649
        %v1473 = vunpack.c.l.b16 %v650
        %v1474 = vunpack.c.h.b16 %v650
        %v1475 = vunpack.c.l.b16 %v651
        %v1476 = vunpack.c.h.b16 %v651
        %v1477 = vunpack.c.l.b16 %v652
        %v1478 = vunpack.c.h.b16 %v652
        %v1479 = vunpack.c.l.b16 %v653
        %v1480 = vunpack.c.h.b16 %v653
        %v1481 = vunpack.c.l.b16 %v654
        %v1482 = vunpack.c.h.b16 %v654
        %v1483 = vunpack.c.l.b16 %v655
        %v1484 = vunpack.c.h.b16 %v655
        %v1485 = vunpack.c.l.b16 %v656
        %v1486 = vunpack.c.h.b16 %v656
        %v1487 = vunpack.c.l.b16 %v657
        %v1488 = vunpack.c.h.b16 %v657
        %v1489 = vunpack.c.l.b16 %v658
        %v1490 = vunpack.c.h.b16 %v658
        %v1491 = vunpack.c.l.b16 %v659
        %v1492 = vunpack.c.h.b16 %v659
        %v1493 = vunpack.c.l.b16 %v660
        %v1494 = vunpack.c.h.b16 %v660
        %v1495 = vunpack.c.l.b16 %v661
        %v1496 = vunpack.c.h.b16 %v661
        %v1497 = vunpack.c.l.b16 %v662
        %v1498 = vunpack.c.h.b16 %v662
        %v1499 = vunpack.c.l.b16 %v663
        %v1500 = vunpack.c.h.b16 %v663
        %v1501 = vunpack.c.l.b16 %v664
        %v1502 = vunpack.c.h.b16 %v664
        %v1503 = vunpack.c.l.b16 %v665
        %v1504 = vunpack.c.h.b16 %v665
        %v1505 = vunpack.c.l.b16 %v666
        %v1506 = vunpack.c.h.b16 %v666
        %v1507 = vunpack.c.l.b16 %v667
        %v1508 = vunpack.c.h.b16 %v667
        %v1509 = vunpack.c.l.b16 %v668
        %v1510 = vunpack.c.h.b16 %v668
        %v1511 = vunpack.c.l.b16 %v669
        %v1512 = vunpack.c.h.b16 %v669
        %v1513 = vunpack.c.l.b16 %v670
        %v1514 = vunpack.c.h.b16 %v670
        %v1515 = vunpack.c.l.b16 %v671
        %v1516 = vunpack.c.h.b16 %v671
        %v1517 = vunpack.c.l.b16 %v672
        %v1518 = vunpack.c.h.b16 %v672
        %v1519 = vunpack.c.l.b16 %v673
        %v1520 = vunpack.c.h.b16 %v673
        %v1521 = vunpack.c.l.b16 %v674
        %v1522 = vunpack.c.h.b16 %v674
        %v1523 = vunpack.c.l.b16 %v675
        %v1524 = vunpack.c.h.b16 %v675
        %v1525 = vunpack.c.l.b16 %v676
        %v1526 = vunpack.c.h.b16 %v676
        %v1527 = vunpack.c.l.b16 %v677
        %v1528 = vunpack.c.h.b16 %v677
        %v1529 = vunpack.c.l.b16 %v678
        %v1530 = vunpack.c.h.b16 %v678
        %v1531 = vunpack.c.l.b16 %v679
        %v1532 = vunpack.c.h.b16 %v679
        %v1533 = vunpack.c.l.b16 %v680
        %v1534 = vunpack.c.h.b16 %v680
        %v1535 = vunpack.c.l.b16 %v681
        %v1536 = vunpack.c.h.b16 %v681
        %v1537 = vunpack.c.l.b16 %v682
        %v1538 = vunpack.c.h.b16 %v682
        %v1539 = vunpack.c.l.b16 %v683
        %v1540 = vunpack.c.h.b16 %v683
        %v1541 = vunpack.c.l.b16 %v684
        %v1542 = vunpack.c.h.b16 %v684
        %v1543 = vunpack.c.l.b16 %v685
        %v1544 = vunpack.c.h.b16 %v685
        %v1545 = vunpack.c.l.b16 %v686
        %v1546 = vunpack.c.h.b16 %v686
        %v1547 = vunpack.c.l.b16 %v687
        %v1548 = vunpack.c.h.b16 %v687
        %v1549 = vunpack.c.l.b16 %v688
        %v1550 = vunpack.c.h.b16 %v688
        %v1551 = vunpack.c.l.b16 %v689
        %v1552 = vunpack.c.h.b16 %v689
        %v1553 = vunpack.c.l.b16 %v690
        %v1554 = vunpack.c.h.b16 %v690
        %v1555 = vunpack.c.l.b16 %v691
        %v1556 = vunpack.c.h.b16 %v691
        %v1557 = vunpack.c.l.b16 %v692
        %v1558 = vunpack.c.h.b16 %v692
        %v1559 = vunpack.c.l.b16 %v693
        %v1560 = vunpack.c.h.b16 %v693
        %v1561 = vunpack.c.l.b16 %v694
        %v1562 = vunpack.c.h.b16 %v694
        %v1563 = vunpack.c.l.b16 %v695
        %v1564 = vunpack.c.h.b16 %v695
        %v1565 = vunpack.c.l.b16 %v696
        %v1566 = vunpack.c.h.b16 %v696
        %v1567 = vunpack.c.l.b16 %v697
        %v1568 = vunpack.c.h.b16 %v697
        %v1569 = vunpack.c.l.b16 %v698
        %v1570 = vunpack.c.h.b16 %v698
        %v1571 = vunpack.c.l.b16 %v699
        %v1572 = vunpack.c.h.b16 %v699
        %v1573 = vunpack.c.l.b16 %v700
        %v1574 = vunpack.c.h.b16 %v700
        %v1575 = vunpack.c.l.b16 %v701
        %v1576 = vunpack.c.h.b16 %v701
        %v1577 = vunpack.c.l.b16 %v702
        %v1578 = vunpack.c.h.b16 %v702
        %v1579 = vunpack.c.l.b16 %v703
        %v1580 = vunpack.c.h.b16 %v703
        %v1581 = vunpack.c.l.b16 %v704
        %v1582 = vunpack.c.h.b16 %v704
        %v1583 = vunpack.c.l.b16 %v705
        %v1584 = vunpack.c.h.b16 %v705
        %v1585 = vunpack.c.l.b16 %v706
        %v1586 = vunpack.c.h.b16 %v706
        %v1587 = vunpack.c.l.b16 %v707
        %v1588 = vunpack.c.h.b16 %v707
        %v1589 = vunpack.c.l.b16 %v708
        %v1590 = vunpack.c.h.b16 %v708
        %v1591 = vunpack.c.l.b16 %v709
        %v1592 = vunpack.c.h.b16 %v709
        %v1593 = vunpack.c.l.b16 %v710
        %v1594 = vunpack.c.h.b16 %v710
        %v1595 = vunpack.c.l.b16 %v711
        %v1596 = vunpack.c.h.b16 %v711
        %v1597 = vunpack.c.l.b16 %v712
        %v1598 = vunpack.c.h.b16 %v712
        %v1599 = vunpack.c.l.b16 %v713
        %v1600 = vunpack.c.h.b16 %v713
        %v1601 = vunpack.c.l.b16 %v714
        %v1602 = vunpack.c.h.b16 %v714
        %v1603 = vunpack.c.l.b16 %v715
        %v1604 = vunpack.c.h.b16 %v715
        %v1605 = vunpack.c.l.b16 %v716
        %v1606 = vunpack.c.h.b16 %v716
        %v1607 = vunpack.c.l.b16 %v717
        %v1608 = vunpack.c.h.b16 %v717
        %v1609 = vunpack.c.l.b16 %v718
        %v1610 = vunpack.c.h.b16 %v718
        %v1611 = vunpack.c.l.b16 %v719
        %v1612 = vunpack.c.h.b16 %v719
        %v1613 = vunpack.c.l.b16 %v720
        %v1614 = vunpack.c.h.b16 %v720
        %v1615 = vunpack.c.l.b16 %v721
        %v1616 = vunpack.c.h.b16 %v721
        %v1617 = vunpack.c.l.b16 %v722
        %v1618 = vunpack.c.h.b16 %v722
        %v1619 = vpack.c.b16 %v1115, %v1107
        %v1620 = vpack.c.b16 %v1116, %v1108
        %v1621 = vpack.c.b16 %v1117, %v1109
        %v1622 = vpack.c.b16 %v1118, %v1110
        %v1623 = vpack.c.b16 %v1119, %v1111
        %v1624 = vpack.c.b16 %v1120, %v1112
        %v1625 = vpack.c.b16 %v1121, %v1113
        %v1626 = vpack.c.b16 %v1122, %v1114
        %v1627 = vpack.c.b16 %v1131, %v1123
        %v1628 = vpack.c.b16 %v1132, %v1124
        %v1629 = vpack.c.b16 %v1133, %v1125
        %v1630 = vpack.c.b16 %v1134, %v1126
        %v1631 = vpack.c.b16 %v1135, %v1127
        %v1632 = vpack.c.b16 %v1136, %v1128
        %v1633 = vpack.c.b16 %v1137, %v1129
        %v1634 = vpack.c.b16 %v1138, %v1130
        %v1635 = vpack.c.b16 %v1147, %v1139
        %v1636 = vpack.c.b16 %v1148, %v1140
        %v1637 = vpack.c.b16 %v1149, %v1141
        %v1638 = vpack.c.b16 %v1150, %v1142
        %v1639 = vpack.c.b16 %v1151, %v1143
        %v1640 = vpack.c.b16 %v1152, %v1144
        %v1641 = vpack.c.b16 %v1153, %v1145
        %v1642 = vpack.c.b16 %v1154, %v1146
        %v1643 = vpack.c.b16 %v1163, %v1155
        %v1644 = vpack.c.b16 %v1164, %v1156
        %v1645 = vpack.c.b16 %v1165, %v1157
        %v1646 = vpack.c.b16 %v1166, %v1158
        %v1647 = vpack.c.b16 %v1167, %v1159
        %v1648 = vpack.c.b16 %v1168, %v1160
        %v1649 = vpack.c.b16 %v1169, %v1161
        %v1650 = vpack.c.b16 %v1170, %v1162
        %v1651 = vpack.c.b16 %v1179, %v1171
        %v1652 = vpack.c.b16 %v1180, %v1172
        %v1653 = vpack.c.b16 %v1181, %v1173
        %v1654 = vpack.c.b16 %v1182, %v1174
        %v1655 = vpack.c.b16 %v1183, %v1175
        %v1656 = vpack.c.b16 %v1184, %v1176
        %v1657 = vpack.c.b16 %v1185, %v1177
        %v1658 = vpack.c.b16 %v1186, %v1178
        %v1659 = vpack.c.b16 %v1195, %v1187
        %v1660 = vpack.c.b16 %v1196, %v1188
        %v1661 = vpack.c.b16 %v1197, %v1189
        %v1662 = vpack.c.b16 %v1198, %v1190
        %v1663 = vpack.c.b16 %v1199, %v1191
        %v1664 = vpack.c.b16 %v1200, %v1192
        %v1665 = vpack.c.b16 %v1201, %v1193
        %v1666 = vpack.c.b16 %v1202, %v1194
        %v1667 = vpack.c.b16 %v1211, %v1203
        %v1668 = vpack.c.b16 %v1212, %v1204
        %v1669 = vpack.c.b16 %v1213, %v1205
        %v1670 = vpack.c.b16 %v1214, %v1206
        %v1671 = vpack.c.b16 %v1215, %v1207
        %v1672 = vpack.c.b16 %v1216, %v1208
        %v1673 = vpack.c.b16 %v1217, %v1209
        %v1674 = vpack.c.b16 %v1218, %v1210
        %v1675 = vpack.c.b16 %v1227, %v1219
        %v1676 = vpack.c.b16 %v1228, %v1220
        %v1677 = vpack.c.b16 %v1229, %v1221
        %v1678 = vpack.c.b16 %v1230, %v1222
        %v1679 = vpack.c.b16 %v1231, %v1223
        %v1680 = vpack.c.b16 %v1232, %v1224
        %v1681 = vpack.c.b16 %v1233, %v1225
        %v1682 = vpack.c.b16 %v1234, %v1226
        %v1683 = vpack.c.b16 %v1243, %v1235
        %v1684 = vpack.c.b16 %v1244, %v1236
        %v1685 = vpack.c.b16 %v1245, %v1237
        %v1686 = vpack.c.b16 %v1246, %v1238
        %v1687 = vpack.c.b16 %v1247, %v1239
        %v1688 = vpack.c.b16 %v1248, %v1240
        %v1689 = vpack.c.b16 %v1249, %v1241
        %v1690 = vpack.c.b16 %v1250, %v1242
        %v1691 = vpack.c.b16 %v1259, %v1251
        %v1692 = vpack.c.b16 %v1260, %v1252
        %v1693 = vpack.c.b16 %v1261, %v1253
        %v1694 = vpack.c.b16 %v1262, %v1254
        %v1695 = vpack.c.b16 %v1263, %v1255
        %v1696 = vpack.c.b16 %v1264, %v1256
        %v1697 = vpack.c.b16 %v1265, %v1257
        %v1698 = vpack.c.b16 %v1266, %v1258
        %v1699 = vpack.c.b16 %v1275, %v1267
        %v1700 = vpack.c.b16 %v1276, %v1268
        %v1701 = vpack.c.b16 %v1277, %v1269
        %v1702 = vpack.c.b16 %v1278, %v1270
        %v1703 = vpack.c.b16 %v1279, %v1271
        %v1704 = vpack.c.b16 %v1280, %v1272
        %v1705 = vpack.c.b16 %v1281, %v1273
        %v1706 = vpack.c.b16 %v1282, %v1274
        %v1707 = vpack.c.b16 %v1291, %v1283
        %v1708 = vpack.c.b16 %v1292, %v1284
        %v1709 = vpack.c.b16 %v1293, %v1285
        %v1710 = vpack.c.b16 %v1294, %v1286
        %v1711 = vpack.c.b16 %v1295, %v1287
        %v1712 = vpack.c.b16 %v1296, %v1288
        %v1713 = vpack.c.b16 %v1297, %v1289
        %v1714 = vpack.c.b16 %v1298, %v1290
        %v1715 = vpack.c.b16 %v1307, %v1299
        %v1716 = vpack.c.b16 %v1308, %v1300
        %v1717 = vpack.c.b16 %v1309, %v1301
        %v1718 = vpack.c.b16 %v1310, %v1302
        %v1719 = vpack.c.b16 %v1311, %v1303
        %v1720 = vpack.c.b16 %v1312, %v1304
        %v1721 = vpack.c.b16 %v1313, %v1305
        %v1722 = vpack.c.b16 %v1314, %v1306
        %v1723 = vpack.c.b16 %v1323, %v1315
        %v1724 = vpack.c.b16 %v1324, %v1316
        %v1725 = vpack.c.b16 %v1325, %v1317
        %v1726 = vpack.c.b16 %v1326, %v1318
        %v1727 = vpack.c.b16 %v1327, %v1319
        %v1728 = vpack.c.b16 %v1328, %v1320
        %v1729 = vpack.c.b16 %v1329, %v1321
        %v1730 = vpack.c.b16 %v1330, %v1322
        %v1731 = vpack.c.b16 %v1339, %v1331
        %v1732 = vpack.c.b16 %v1340, %v1332
        %v1733 = vpack.c.b16 %v1341, %v1333
        %v1734 = vpack.c.b16 %v1342, %v1334
        %v1735 = vpack.c.b16 %v1343, %v1335
        %v1736 = vpack.c.b16 %v1344, %v1336
        %v1737 = vpack.c.b16 %v1345, %v1337
        %v1738 = vpack.c.b16 %v1346, %v1338
        %v1739 = vpack.c.b16 %v1355, %v1347
        %v1740 = vpack.c.b16 %v1356, %v1348
        %v1741 = vpack.c.b16 %v1357, %v1349
        %v1742 = vpack.c.b16 %v1358, %v1350
        %v1743 = vpack.c.b16 %v1359, %v1351
        %v1744 = vpack.c.b16 %v1360, %v1352
        %v1745 = vpack.c.b16 %v1361, %v1353
        %v1746 = vpack.c.b16 %v1362, %v1354
        %v1747 = vpack.c.b16 %v1371, %v1363
        %v1748 = vpack.c.b16 %v1372, %v1364
        %v1749 = vpack.c.b16 %v1373, %v1365
        %v1750 = vpack.c.b16 %v1374, %v1366
        %v1751 = vpack.c.b16 %v1375, %v1367
        %v1752 = vpack.c.b16 %v1376, %v1368
        %v1753 = vpack.c.b16 %v1377, %v1369
        %v1754 = vpack.c.b16 %v1378, %v1370
        %v1755 = vpack.c.b16 %v1387, %v1379
        %v1756 = vpack.c.b16 %v1388, %v1380
        %v1757 = vpack.c.b16 %v1389, %v1381
        %v1758 = vpack.c.b16 %v1390, %v1382
        %v1759 = vpack.c.b16 %v1391, %v1383
        %v1760 = vpack.c.b16 %v1392, %v1384
        %v1761 = vpack.c.b16 %v1393, %v1385
        %v1762 = vpack.c.b16 %v1394, %v1386
        %v1763 = vpack.c.b16 %v1403, %v1395
        %v1764 = vpack.c.b16 %v1404, %v1396
        %v1765 = vpack.c.b16 %v1405, %v1397
        %v1766 = vpack.c.b16 %v1406, %v1398
        %v1767 = vpack.c.b16 %v1407, %v1399
        %v1768 = vpack.c.b16 %v1408, %v1400
        %v1769 = vpack.c.b16 %v1409, %v1401
        %v1770 = vpack.c.b16 %v1410, %v1402
        %v1771 = vpack.c.b16 %v1419, %v1411
        %v1772 = vpack.c.b16 %v1420, %v1412
        %v1773 = vpack.c.b16 %v1421, %v1413
        %v1774 = vpack.c.b16 %v1422, %v1414
        %v1775 = vpack.c.b16 %v1423, %v1415
        %v1776 = vpack.c.b16 %v1424, %v1416
        %v1777 = vpack.c.b16 %v1425, %v1417
        %v1778 = vpack.c.b16 %v1426, %v1418
        %v1779 = vpack.c.b16 %v1435, %v1427
        %v1780 = vpack.c.b16 %v1436, %v1428
        %v1781 = vpack.c.b16 %v1437, %v1429
        %v1782 = vpack.c.b16 %v1438, %v1430
        %v1783 = vpack.c.b16 %v1439, %v1431
        %v1784 = vpack.c.b16 %v1440, %v1432
        %v1785 = vpack.c.b16 %v1441, %v1433
        %v1786 = vpack.c.b16 %v1442, %v1434
        %v1787 = vpack.c.b16 %v1451, %v1443
        %v1788 = vpack.c.b16 %v1452, %v1444
        %v1789 = vpack.c.b16 %v1453, %v1445
        %v1790 = vpack.c.b16 %v1454, %v1446
        %v1791 = vpack.c.b16 %v1455, %v1447
        %v1792 = vpack.c.b16 %v1456, %v1448
        %v1793 = vpack.c.b16 %v1457, %v1449
        %v1794 = vpack.c.b16 %v1458, %v1450
        %v1795 = vpack.c.b16 %v1467, %v1459
        %v1796 = vpack.c.b16 %v1468, %v1460
        %v1797 = vpack.c.b16 %v1469, %v1461
        %v1798 = vpack.c.b16 %v1470, %v1462
        %v1799 = vpack.c.b16 %v1471, %v1463
        %v1800 = vpack.c.b16 %v1472, %v1464
        %v1801 = vpack.c.b16 %v1473, %v1465
        %v1802 = vpack.c.b16 %v1474, %v1466
        %v1803 = vpack.c.b16 %v1483, %v1475
        %v1804 = vpack.c.b16 %v1484, %v1476
        %v1805 = vpack.c.b16 %v1485, %v1477
        %v1806 = vpack.c.b16 %v1486, %v1478
        %v1807 = vpack.c.b16 %v1487, %v1479
        %v1808 = vpack.c.b16 %v1488, %v1480
        %v1809 = vpack.c.b16 %v1489, %v1481
        %v1810 = vpack.c.b16 %v1490, %v1482
        %v1811 = vpack.c.b16 %v1499, %v1491
        %v1812 = vpack.c.b16 %v1500, %v1492
        %v1813 = vpack.c.b16 %v1501, %v1493
        %v1814 = vpack.c.b16 %v1502, %v1494
        %v1815 = vpack.c.b16 %v1503, %v1495
        %v1816 = vpack.c.b16 %v1504, %v1496
        %v1817 = vpack.c.b16 %v1505, %v1497
        %v1818 = vpack.c.b16 %v1506, %v1498
        %v1819 = vpack.c.b16 %v1515, %v1507
        %v1820 = vpack.c.b16 %v1516, %v1508
        %v1821 = vpack.c.b16 %v1517, %v1509
        %v1822 = vpack.c.b16 %v1518, %v1510
        %v1823 = vpack.c.b16 %v1519, %v1511
        %v1824 = vpack.c.b16 %v1520, %v1512
        %v1825 = vpack.c.b16 %v1521, %v1513
        %v1826 = vpack.c.b16 %v1522, %v1514
        %v1827 = vpack.c.b16 %v1531, %v1523
        %v1828 = vpack.c.b16 %v1532, %v1524
        %v1829 = vpack.c.b16 %v1533, %v1525
        %v1830 = vpack.c.b16 %v1534, %v1526
        %v1831 = vpack.c.b16 %v1535, %v1527
        %v1832 = vpack.c.b16 %v1536, %v1528
        %v1833 = vpack.c.b16 %v1537, %v1529
        %v1834 = vpack.c.b16 %v1538, %v1530
        %v1835 = vpack.c.b16 %v1547, %v1539
        %v1836 = vpack.c.b16 %v1548, %v1540
        %v1837 = vpack.c.b16 %v1549, %v1541
        %v1838 = vpack.c.b16 %v1550, %v1542
        %v1839 = vpack.c.b16 %v1551, %v1543
        %v1840 = vpack.c.b16 %v1552, %v1544
        %v1841 = vpack.c.b16 %v1553, %v1545
        %v1842 = vpack.c.b16 %v1554, %v1546
        %v1843 = vpack.c.b16 %v1563, %v1555
        %v1844 = vpack.c.b16 %v1564, %v1556
        %v1845 = vpack.c.b16 %v1565, %v1557
        %v1846 = vpack.c.b16 %v1566, %v1558
        %v1847 = vpack.c.b16 %v1567, %v1559
        %v1848 = vpack.c.b16 %v1568, %v1560
        %v1849 = vpack.c.b16 %v1569, %v1561
        %v1850 = vpack.c.b16 %v1570, %v1562
        %v1851 = vpack.c.b16 %v1579, %v1571
        %v1852 = vpack.c.b16 %v1580, %v1572
        %v1853 = vpack.c.b16 %v1581, %v1573
        %v1854 = vpack.c.b16 %v1582, %v1574
        %v1855 = vpack.c.b16 %v1583, %v1575
        %v1856 = vpack.c.b16 %v1584, %v1576
        %v1857 = vpack.c.b16 %v1585, %v1577
        %v1858 = vpack.c.b16 %v1586, %v1578
        %v1859 = vpack.c.b16 %v1595, %v1587
        %v1860 = vpack.c.b16 %v1596, %v1588
        %v1861 = vpack.c.b16 %v1597, %v1589
        %v1862 = vpack.c.b16 %v1598, %v1590
        %v1863 = vpack.c.b16 %v1599, %v1591
        %v1864 = vpack.c.b16 %v1600, %v1592
        %v1865 = vpack.c.b16 %v1601, %v1593
        %v1866 = vpack.c.b16 %v1602, %v1594
        %v1867 = vpack.c.b16 %v1611, %v1603
        %v1868 = vpack.c.b16 %v1612, %v1604
        %v1869 = vpack.c.b16 %v1613, %v1605
        %v1870 = vpack.c.b16 %v1614, %v1606
        %v1871 = vpack.c.b16 %v1615, %v1607
        %v1872 = vpack.c.b16 %v1616, %v1608
        %v1873 = vpack.c.b16 %v1617, %v1609
        %v1874 = vpack.c.b16 %v1618, %v1610
        %v2259 = vunpack.c.l.b16 %v723
        %v2260 = vunpack.c.l.b16 %v724
        %v2261 = vunpack.c.l.b16 %v725
        %v2262 = vunpack.c.l.b16 %v726
        %v2263 = vunpack.c.l.b16 %v727
        %v2264 = vunpack.c.l.b16 %v728
        %v2265 = vunpack.c.l.b16 %v729
        %v2266 = vunpack.c.l.b16 %v730
        %v2267 = vunpack.c.l.b16 %v731
        %v2268 = vunpack.c.l.b16 %v732
        %v2269 = vunpack.c.l.b16 %v733
        %v2270 = vunpack.c.l.b16 %v734
        %v2271 = vunpack.c.l.b16 %v735
        %v2272 = vunpack.c.l.b16 %v736
        %v2273 = vunpack.c.l.b16 %v737
        %v2274 = vunpack.c.l.b16 %v738
        %v2275 = vunpack.c.l.b16 %v739
        %v2276 = vunpack.c.l.b16 %v740
        %v2277 = vunpack.c.l.b16 %v741
        %v2278 = vunpack.c.l.b16 %v742
        %v2279 = vunpack.c.l.b16 %v743
        %v2280 = vunpack.c.l.b16 %v744
        %v2281 = vunpack.c.l.b16 %v745
        %v2282 = vunpack.c.l.b16 %v746
        %v2283 = vunpack.c.l.b16 %v747
        %v2284 = vunpack.c.l.b16 %v748
        %v2285 = vunpack.c.l.b16 %v749
        %v2286 = vunpack.c.l.b16 %v750
        %v2287 = vunpack.c.l.b16 %v751
        %v2288 = vunpack.c.l.b16 %v752
        %v2289 = vunpack.c.l.b16 %v753
        %v2290 = vunpack.c.l.b16 %v754
        %v2291 = vunpack.c.l.b16 %v755
        %v2292 = vunpack.c.l.b16 %v756
        %v2293 = vunpack.c.l.b16 %v757
        %v2294 = vunpack.c.l.b16 %v758
        %v2295 = vunpack.c.l.b16 %v759
        %v2296 = vunpack.c.l.b16 %v760
        %v2297 = vunpack.c.l.b16 %v761
        %v2298 = vunpack.c.l.b16 %v762
        %v2299 = vunpack.c.l.b16 %v763
        %v2300 = vunpack.c.l.b16 %v764
        %v2301 = vunpack.c.l.b16 %v765
        %v2302 = vunpack.c.l.b16 %v766
        %v2303 = vunpack.c.l.b16 %v767
        %v2304 = vunpack.c.l.b16 %v768
        %v2305 = vunpack.c.l.b16 %v769
        %v2306 = vunpack.c.l.b16 %v770
        %v2307 = vunpack.c.l.b16 %v771
        %v2308 = vunpack.c.l.b16 %v772
        %v2309 = vunpack.c.l.b16 %v773
        %v2310 = vunpack.c.l.b16 %v774
        %v2311 = vunpack.c.l.b16 %v775
        %v2312 = vunpack.c.l.b16 %v776
        %v2313 = vunpack.c.l.b16 %v777
        %v2314 = vunpack.c.l.b16 %v778
        %v2315 = vunpack.c.l.b16 %v779
        %v2316 = vunpack.c.l.b16 %v780
        %v2317 = vunpack.c.l.b16 %v781
        %v2318 = vunpack.c.l.b16 %v782
        %v2319 = vunpack.c.l.b16 %v783
        %v2320 = vunpack.c.l.b16 %v784
        %v2321 = vunpack.c.l.b16 %v785
        %v2322 = vunpack.c.l.b16 %v786
        %v2323 = vunpack.c.l.b16 %v787
        %v2324 = vunpack.c.l.b16 %v788
        %v2325 = vunpack.c.l.b16 %v789
        %v2326 = vunpack.c.l.b16 %v790
        %v2327 = vunpack.c.l.b16 %v791
        %v2328 = vunpack.c.l.b16 %v792
        %v2329 = vunpack.c.l.b16 %v793
        %v2330 = vunpack.c.l.b16 %v794
        %v2331 = vunpack.c.l.b16 %v795
        %v2332 = vunpack.c.l.b16 %v796
        %v2333 = vunpack.c.l.b16 %v797
        %v2334 = vunpack.c.l.b16 %v798
        %v2335 = vunpack.c.l.b16 %v799
        %v2336 = vunpack.c.l.b16 %v800
        %v2337 = vunpack.c.l.b16 %v801
        %v2338 = vunpack.c.l.b16 %v802
        %v2339 = vunpack.c.l.b16 %v803
        %v2340 = vunpack.c.l.b16 %v804
        %v2341 = vunpack.c.l.b16 %v805
        %v2342 = vunpack.c.l.b16 %v806
        %v2343 = vunpack.c.l.b16 %v807
        %v2344 = vunpack.c.l.b16 %v808
        %v2345 = vunpack.c.l.b16 %v809
        %v2346 = vunpack.c.l.b16 %v810
        %v2347 = vunpack.c.l.b16 %v811
        %v2348 = vunpack.c.l.b16 %v812
        %v2349 = vunpack.c.l.b16 %v813
        %v2350 = vunpack.c.l.b16 %v814
        %v2351 = vunpack.c.l.b16 %v815
        %v2352 = vunpack.c.l.b16 %v816
        %v2353 = vunpack.c.l.b16 %v817
        %v2354 = vunpack.c.l.b16 %v818
        %v2355 = vunpack.c.l.b16 %v819
        %v2356 = vunpack.c.l.b16 %v820
        %v2357 = vunpack.c.l.b16 %v821
        %v2358 = vunpack.c.l.b16 %v822
        %v2359 = vunpack.c.l.b16 %v823
        %v2360 = vunpack.c.l.b16 %v824
        %v2361 = vunpack.c.l.b16 %v825
        %v2362 = vunpack.c.l.b16 %v826
        %v2363 = vunpack.c.l.b16 %v827
        %v2364 = vunpack.c.l.b16 %v828
        %v2365 = vunpack.c.l.b16 %v829
        %v2366 = vunpack.c.l.b16 %v830
        %v2367 = vunpack.c.l.b16 %v831
        %v2368 = vunpack.c.l.b16 %v832
        %v2369 = vunpack.c.l.b16 %v833
        %v2370 = vunpack.c.l.b16 %v834
        %v2371 = vunpack.c.l.b16 %v835
        %v2372 = vunpack.c.l.b16 %v836
        %v2373 = vunpack.c.l.b16 %v837
        %v2374 = vunpack.c.l.b16 %v838
        %v2375 = vunpack.c.l.b16 %v839
        %v2376 = vunpack.c.l.b16 %v840
        %v2377 = vunpack.c.l.b16 %v841
        %v2378 = vunpack.c.l.b16 %v842
        %v2379 = vunpack.c.l.b16 %v843
        %v2380 = vunpack.c.l.b16 %v844
        %v2381 = vunpack.c.l.b16 %v845
        %v2382 = vunpack.c.l.b16 %v846
        %v2383 = vunpack.c.l.b16 %v847
        %v2384 = vunpack.c.l.b16 %v848
        %v2385 = vunpack.c.l.b16 %v849
        %v2386 = vunpack.c.l.b16 %v850
        %v2387 = vpack.c.b16 %v2260, %v2259
        %v2388 = vpack.c.b16 %v2262, %v2261
        %v2389 = vpack.c.b16 %v2264, %v2263
        %v2390 = vpack.c.b16 %v2266, %v2265
        %v2391 = vpack.c.b16 %v2268, %v2267
        %v2392 = vpack.c.b16 %v2270, %v2269
        %v2393 = vpack.c.b16 %v2272, %v2271
        %v2394 = vpack.c.b16 %v2274, %v2273
        %v2395 = vpack.c.b16 %v2276, %v2275
        %v2396 = vpack.c.b16 %v2278, %v2277
        %v2397 = vpack.c.b16 %v2280, %v2279
        %v2398 = vpack.c.b16 %v2282, %v2281
        %v2399 = vpack.c.b16 %v2284, %v2283
        %v2400 = vpack.c.b16 %v2286, %v2285
        %v2401 = vpack.c.b16 %v2288, %v2287
        %v2402 = vpack.c.b16 %v2290, %v2289
        %v2403 = vpack.c.b16 %v2292, %v2291
        %v2404 = vpack.c.b16 %v2294, %v2293
        %v2405 = vpack.c.b16 %v2296, %v2295
        %v2406 = vpack.c.b16 %v2298, %v2297
        %v2407 = vpack.c.b16 %v2300, %v2299
        %v2408 = vpack.c.b16 %v2302, %v2301
        %v2409 = vpack.c.b16 %v2304, %v2303
        %v2410 = vpack.c.b16 %v2306, %v2305
        %v2411 = vpack.c.b16 %v2308, %v2307
        %v2412 = vpack.c.b16 %v2310, %v2309
        %v2413 = vpack.c.b16 %v2312, %v2311
        %v2414 = vpack.c.b16 %v2314, %v2313
        %v2415 = vpack.c.b16 %v2316, %v2315
        %v2416 = vpack.c.b16 %v2318, %v2317
        %v2417 = vpack.c.b16 %v2320, %v2319
        %v2418 = vpack.c.b16 %v2322, %v2321
        %v2419 = vpack.c.b16 %v2324, %v2323
        %v2420 = vpack.c.b16 %v2326, %v2325
        %v2421 = vpack.c.b16 %v2328, %v2327
        %v2422 = vpack.c.b16 %v2330, %v2329
        %v2423 = vpack.c.b16 %v2332, %v2331
        %v2424 = vpack.c.b16 %v2334, %v2333
        %v2425 = vpack.c.b16 %v2336, %v2335
        %v2426 = vpack.c.b16 %v2338, %v2337
        %v2427 = vpack.c.b16 %v2340, %v2339
        %v2428 = vpack.c.b16 %v2342, %v2341
        %v2429 = vpack.c.b16 %v2344, %v2343
        %v2430 = vpack.c.b16 %v2346, %v2345
        %v2431 = vpack.c.b16 %v2348, %v2347
        %v2432 = vpack.c.b16 %v2350, %v2349
        %v2433 = vpack.c.b16 %v2352, %v2351
        %v2434 = vpack.c.b16 %v2354, %v2353
        %v2435 = vpack.c.b16 %v2356, %v2355
        %v2436 = vpack.c.b16 %v2358, %v2357
        %v2437 = vpack.c.b16 %v2360, %v2359
        %v2438 = vpack.c.b16 %v2362, %v2361
        %v2439 = vpack.c.b16 %v2364, %v2363
        %v2440 = vpack.c.b16 %v2366, %v2365
        %v2441 = vpack.c.b16 %v2368, %v2367
        %v2442 = vpack.c.b16 %v2370, %v2369
        %v2443 = vpack.c.b16 %v2372, %v2371
        %v2444 = vpack.c.b16 %v2374, %v2373
        %v2445 = vpack.c.b16 %v2376, %v2375
        %v2446 = vpack.c.b16 %v2378, %v2377
        %v2447 = vpack.c.b16 %v2380, %v2379
        %v2448 = vpack.c.b16 %v2382, %v2381
        %v2449 = vpack.c.b16 %v2384, %v2383
        %v2450 = vpack.c.b16 %v2386, %v2385
        %2515 = vmatprep.subr.bf16.mxu0 0
        %2516 = vmatpush1.bf16.msra.mxu0 %v2387
        %2517 = vmatprep.subr.bf16.mxu0 0
        %2518 = vmatpush1.bf16.msra.mxu0 %v2388
        %2519 = vmatprep.subr.bf16.mxu0 0
        %2520 = vmatpush1.bf16.msra.mxu0 %v2389
        %2521 = vmatprep.subr.bf16.mxu0 0
        %2522 = vmatpush1.bf16.msra.mxu0 %v2390
        %2523 = vmatprep.subr.bf16.mxu0 0
        %2524 = vmatpush1.bf16.msra.mxu0 %v2391
        %2525 = vmatprep.subr.bf16.mxu0 0
        %2526 = vmatpush1.bf16.msra.mxu0 %v2392
        %2527 = vmatprep.subr.bf16.mxu0 0
        %2528 = vmatpush1.bf16.msra.mxu0 %v2393
        %2529 = vmatprep.subr.bf16.mxu0 0
        %2530 = vmatpush1.bf16.msra.mxu0 %v2394
        %2531 = vmatprep.subr.bf16.mxu0 0
        %2532 = vmatpush1.bf16.msra.mxu0 %v2395
        %2533 = vmatprep.subr.bf16.mxu0 0
        %2534 = vmatpush1.bf16.msra.mxu0 %v2396
        %2535 = vmatprep.subr.bf16.mxu0 0
        %2536 = vmatpush1.bf16.msra.mxu0 %v2397
        %2537 = vmatprep.subr.bf16.mxu0 0
        %2538 = vmatpush1.bf16.msra.mxu0 %v2398
        %2539 = vmatprep.subr.bf16.mxu0 0
        %2540 = vmatpush1.bf16.msra.mxu0 %v2399
        %2541 = vmatprep.subr.bf16.mxu0 0
        %2542 = vmatpush1.bf16.msra.mxu0 %v2400
        %2543 = vmatprep.subr.bf16.mxu0 0
        %2544 = vmatpush1.bf16.msra.mxu0 %v2401
        %2545 = vmatprep.subr.bf16.mxu0 0
        %2546 = vmatpush1.bf16.msra.mxu0 %v2402
        %2547 = vmatprep.mubr.bf16.mxu0 %v1620
        %2548 = vmatmul.mubr.bf16.gmra.mrb[0].mxu0 %v1619
        %v2549 = vpop.f32.mrb[0].mxu0
        %v2550 = vadd.f32 0.0, %v2549
        %v2551 = vpop.f32.mrb[0].mxu0
        %v2552 = vpop.f32.mrb[0].mxu0
        %v2553 = vadd.f32 0.0, %v2552
        %v2554 = vpop.f32.mrb[0].mxu0
        %2555 = vmatprep.mubr.bf16.mxu0 %v1628
        %2556 = vmatmul.mubr.bf16.gmra.mrb[0].mxu0 %v1627
        %v2557 = vpop.f32.mrb[0].mxu0
        %v2558 = vadd.f32 0.0, %v2557
        %v2559 = vpop.f32.mrb[0].mxu0
        %v2560 = vpop.f32.mrb[0].mxu0
        %v2561 = vadd.f32 0.0, %v2560
        %v2562 = vpop.f32.mrb[0].mxu0
        %2563 = vmatprep.mubr.bf16.mxu0 %v1636
        %2564 = vmatmul.mubr.bf16.gmra.mrb[0].mxu0 %v1635
        %v2565 = vpop.f32.mrb[0].mxu0
        %v2566 = vadd.f32 0.0, %v2565
        %v2567 = vpop.f32.mrb[0].mxu0
        %v2568 = vpop.f32.mrb[0].mxu0
        %v2569 = vadd.f32 0.0, %v2568
        %v2570 = vpop.f32.mrb[0].mxu0
        %2571 = vmatprep.mubr.bf16.mxu0 %v1644
        %2572 = vmatmul.mubr.bf16.gmra.mrb[0].mxu0 %v1643
        %v2573 = vpop.f32.mrb[0].mxu0
        %v2574 = vadd.f32 0.0, %v2573
        %v2575 = vpop.f32.mrb[0].mxu0
        %v2576 = vpop.f32.mrb[0].mxu0
        %v2577 = vadd.f32 0.0, %v2576
        %v2578 = vpop.f32.mrb[0].mxu0
        %2579 = vmatprep.mubr.bf16.mxu0 %v1652
        %2580 = vmatmul.mubr.bf16.gmra.mrb[0].mxu0 %v1651
        %v2581 = vpop.f32.mrb[0].mxu0
        %v2582 = vadd.f32 0.0, %v2581
        %v2583 = vpop.f32.mrb[0].mxu0
        %v2584 = vpop.f32.mrb[0].mxu0
        %v2585 = vadd.f32 0.0, %v2584
        %v2586 = vpop.f32.mrb[0].mxu0
        %2587 = vmatprep.mubr.bf16.mxu0 %v1660
        %2588 = vmatmul.mubr.bf16.gmra.mrb[0].mxu0 %v1659
        %v2589 = vpop.f32.mrb[0].mxu0
        %v2590 = vadd.f32 0.0, %v2589
        %v2591 = vpop.f32.mrb[0].mxu0
        %v2592 = vpop.f32.mrb[0].mxu0
        %v2593 = vadd.f32 0.0, %v2592
        %v2594 = vpop.f32.mrb[0].mxu0
        %2595 = vmatprep.mubr.bf16.mxu0 %v1668
        %2596 = vmatmul.mubr.bf16.gmra.mrb[0].mxu0 %v1667
        %v2597 = vpop.f32.mrb[0].mxu0
        %v2598 = vadd.f32 0.0, %v2597
        %v2599 = vpop.f32.mrb[0].mxu0
        %v2600 = vpop.f32.mrb[0].mxu0
        %v2601 = vadd.f32 0.0, %v2600
        %v2602 = vpop.f32.mrb[0].mxu0
        %2603 = vmatprep.mubr.bf16.mxu0 %v1676
        %2604 = vmatmul.mubr.bf16.gmra.mrb[0].mxu0 %v1675
        %v2605 = vpop.f32.mrb[0].mxu0
        %v2606 = vadd.f32 0.0, %v2605
        %v2607 = vpop.f32.mrb[0].mxu0
        %v2608 = vpop.f32.mrb[0].mxu0
        %v2609 = vadd.f32 0.0, %v2608
        %v2610 = vpop.f32.mrb[0].mxu0
        %2611 = vmatprep.mubr.bf16.mxu0 %v1684
        %2612 = vmatmul.mubr.bf16.gmra.mrb[0].mxu0 %v1683
        %v2613 = vpop.f32.mrb[0].mxu0
        %v2614 = vadd.f32 0.0, %v2613
        %v2615 = vpop.f32.mrb[0].mxu0
        %v2616 = vpop.f32.mrb[0].mxu0
        %v2617 = vadd.f32 0.0, %v2616
        %v2618 = vpop.f32.mrb[0].mxu0
        %2619 = vmatprep.mubr.bf16.mxu0 %v1692
        %2620 = vmatmul.mubr.bf16.gmra.mrb[0].mxu0 %v1691
        %v2621 = vpop.f32.mrb[0].mxu0
        %v2622 = vadd.f32 0.0, %v2621
        %v2623 = vpop.f32.mrb[0].mxu0
        %v2624 = vpop.f32.mrb[0].mxu0
        %v2625 = vadd.f32 0.0, %v2624
        %v2626 = vpop.f32.mrb[0].mxu0
        %2627 = vmatprep.mubr.bf16.mxu0 %v1700
        %2628 = vmatmul.mubr.bf16.gmra.mrb[0].mxu0 %v1699
        %v2629 = vpop.f32.mrb[0].mxu0
        %v2630 = vadd.f32 0.0, %v2629
        %v2631 = vpop.f32.mrb[0].mxu0
        %v2632 = vpop.f32.mrb[0].mxu0
        %v2633 = vadd.f32 0.0, %v2632
        %v2634 = vpop.f32.mrb[0].mxu0
        %2635 = vmatprep.mubr.bf16.mxu0 %v1708
        %2636 = vmatmul.mubr.bf16.gmra.mrb[0].mxu0 %v1707
        %v2637 = vpop.f32.mrb[0].mxu0
        %v2638 = vadd.f32 0.0, %v2637
        %v2639 = vpop.f32.mrb[0].mxu0
        %v2640 = vpop.f32.mrb[0].mxu0
        %v2641 = vadd.f32 0.0, %v2640
        %v2642 = vpop.f32.mrb[0].mxu0
        %2643 = vmatprep.mubr.bf16.mxu0 %v1716
        %2644 = vmatmul.mubr.bf16.gmra.mrb[0].mxu0 %v1715
        %v2645 = vpop.f32.mrb[0].mxu0
        %v2646 = vadd.f32 0.0, %v2645
        %v2647 = vpop.f32.mrb[0].mxu0
        %v2648 = vpop.f32.mrb[0].mxu0
        %v2649 = vadd.f32 0.0, %v2648
        %v2650 = vpop.f32.mrb[0].mxu0
        %2651 = vmatprep.mubr.bf16.mxu0 %v1724
        %2652 = vmatmul.mubr.bf16.gmra.mrb[0].mxu0 %v1723
        %v2653 = vpop.f32.mrb[0].mxu0
        %v2654 = vadd.f32 0.0, %v2653
        %v2655 = vpop.f32.mrb[0].mxu0
        %v2656 = vpop.f32.mrb[0].mxu0
        %v2657 = vadd.f32 0.0, %v2656
        %v2658 = vpop.f32.mrb[0].mxu0
        %2659 = vmatprep.mubr.bf16.mxu0 %v1732
        %2660 = vmatmul.mubr.bf16.gmra.mrb[0].mxu0 %v1731
        %v2661 = vpop.f32.mrb[0].mxu0
        %v2662 = vadd.f32 0.0, %v2661
        %v2663 = vpop.f32.mrb[0].mxu0
        %v2664 = vpop.f32.mrb[0].mxu0
        %v2665 = vadd.f32 0.0, %v2664
        %v2666 = vpop.f32.mrb[0].mxu0
        %2667 = vmatprep.mubr.bf16.mxu0 %v1740
        %2668 = vmatmul.mubr.bf16.gmra.mrb[0].mxu0 %v1739
        %v2669 = vpop.f32.mrb[0].mxu0
        %v2670 = vadd.f32 0.0, %v2669
        %v2671 = vpop.f32.mrb[0].mxu0
        %v2672 = vpop.f32.mrb[0].mxu0
        %v2673 = vadd.f32 0.0, %v2672
        %v2674 = vpop.f32.mrb[0].mxu0
        %2675 = vmatprep.mubr.bf16.mxu0 %v1748
        %2676 = vmatmul.mubr.bf16.gmra.mrb[0].mxu0 %v1747
        %v2677 = vpop.f32.mrb[0].mxu0
        %v2678 = vadd.f32 0.0, %v2677
        %v2679 = vpop.f32.mrb[0].mxu0
        %v2680 = vpop.f32.mrb[0].mxu0
        %v2681 = vadd.f32 0.0, %v2680
        %v2682 = vpop.f32.mrb[0].mxu0
        %2683 = vmatprep.mubr.bf16.mxu0 %v1756
        %2684 = vmatmul.mubr.bf16.gmra.mrb[0].mxu0 %v1755
        %v2685 = vpop.f32.mrb[0].mxu0
        %v2686 = vadd.f32 0.0, %v2685
        %v2687 = vpop.f32.mrb[0].mxu0
        %v2688 = vpop.f32.mrb[0].mxu0
        %v2689 = vadd.f32 0.0, %v2688
        %v2690 = vpop.f32.mrb[0].mxu0
        %2691 = vmatprep.mubr.bf16.mxu0 %v1764
        %2692 = vmatmul.mubr.bf16.gmra.mrb[0].mxu0 %v1763
        %v2693 = vpop.f32.mrb[0].mxu0
        %v2694 = vadd.f32 0.0, %v2693
        %v2695 = vpop.f32.mrb[0].mxu0
        %v2696 = vpop.f32.mrb[0].mxu0
        %v2697 = vadd.f32 0.0, %v2696
        %v2698 = vpop.f32.mrb[0].mxu0
        %2699 = vmatprep.mubr.bf16.mxu0 %v1772
        %2700 = vmatmul.mubr.bf16.gmra.mrb[0].mxu0 %v1771
        %v2701 = vpop.f32.mrb[0].mxu0
        %v2702 = vadd.f32 0.0, %v2701
        %v2703 = vpop.f32.mrb[0].mxu0
        %v2704 = vpop.f32.mrb[0].mxu0
        %v2705 = vadd.f32 0.0, %v2704
        %v2706 = vpop.f32.mrb[0].mxu0
        %2707 = vmatprep.mubr.bf16.mxu0 %v1780
        %2708 = vmatmul.mubr.bf16.gmra.mrb[0].mxu0 %v1779
        %v2709 = vpop.f32.mrb[0].mxu0
        %v2710 = vadd.f32 0.0, %v2709
        %v2711 = vpop.f32.mrb[0].mxu0
        %v2712 = vpop.f32.mrb[0].mxu0
        %v2713 = vadd.f32 0.0, %v2712
        %v2714 = vpop.f32.mrb[0].mxu0
        %2715 = vmatprep.mubr.bf16.mxu0 %v1788
        %2716 = vmatmul.mubr.bf16.gmra.mrb[0].mxu0 %v1787
        %v2717 = vpop.f32.mrb[0].mxu0
        %v2718 = vadd.f32 0.0, %v2717
        %v2719 = vpop.f32.mrb[0].mxu0
        %v2720 = vpop.f32.mrb[0].mxu0
        %v2721 = vadd.f32 0.0, %v2720
        %v2722 = vpop.f32.mrb[0].mxu0
        %2723 = vmatprep.mubr.bf16.mxu0 %v1796
        %2724 = vmatmul.mubr.bf16.gmra.mrb[0].mxu0 %v1795
        %v2725 = vpop.f32.mrb[0].mxu0
        %v2726 = vadd.f32 0.0, %v2725
        %v2727 = vpop.f32.mrb[0].mxu0
        %v2728 = vpop.f32.mrb[0].mxu0
        %v2729 = vadd.f32 0.0, %v2728
        %v2730 = vpop.f32.mrb[0].mxu0
        %2731 = vmatprep.mubr.bf16.mxu0 %v1804
        %2732 = vmatmul.mubr.bf16.gmra.mrb[0].mxu0 %v1803
        %v2733 = vpop.f32.mrb[0].mxu0
        %v2734 = vadd.f32 0.0, %v2733
        %v2735 = vpop.f32.mrb[0].mxu0
        %v2736 = vpop.f32.mrb[0].mxu0
        %v2737 = vadd.f32 0.0, %v2736
        %v2738 = vpop.f32.mrb[0].mxu0
        %2739 = vmatprep.mubr.bf16.mxu0 %v1812
        %2740 = vmatmul.mubr.bf16.gmra.mrb[0].mxu0 %v1811
        %v2741 = vpop.f32.mrb[0].mxu0
        %v2742 = vadd.f32 0.0, %v2741
        %v2743 = vpop.f32.mrb[0].mxu0
        %v2744 = vpop.f32.mrb[0].mxu0
        %v2745 = vadd.f32 0.0, %v2744
        %v2746 = vpop.f32.mrb[0].mxu0
        %2747 = vmatprep.mubr.bf16.mxu0 %v1820
        %2748 = vmatmul.mubr.bf16.gmra.mrb[0].mxu0 %v1819
        %v2749 = vpop.f32.mrb[0].mxu0
        %v2750 = vadd.f32 0.0, %v2749
        %v2751 = vpop.f32.mrb[0].mxu0
        %v2752 = vpop.f32.mrb[0].mxu0
        %v2753 = vadd.f32 0.0, %v2752
        %v2754 = vpop.f32.mrb[0].mxu0
        %2755 = vmatprep.mubr.bf16.mxu0 %v1828
        %2756 = vmatmul.mubr.bf16.gmra.mrb[0].mxu0 %v1827
        %v2757 = vpop.f32.mrb[0].mxu0
        %v2758 = vadd.f32 0.0, %v2757
        %v2759 = vpop.f32.mrb[0].mxu0
        %v2760 = vpop.f32.mrb[0].mxu0
        %v2761 = vadd.f32 0.0, %v2760
        %v2762 = vpop.f32.mrb[0].mxu0
        %2763 = vmatprep.mubr.bf16.mxu0 %v1836
        %2764 = vmatmul.mubr.bf16.gmra.mrb[0].mxu0 %v1835
        %v2765 = vpop.f32.mrb[0].mxu0
        %v2766 = vadd.f32 0.0, %v2765
        %v2767 = vpop.f32.mrb[0].mxu0
        %v2768 = vpop.f32.mrb[0].mxu0
        %v2769 = vadd.f32 0.0, %v2768
        %v2770 = vpop.f32.mrb[0].mxu0
        %2771 = vmatprep.mubr.bf16.mxu0 %v1844
        %2772 = vmatmul.mubr.bf16.gmra.mrb[0].mxu0 %v1843
        %v2773 = vpop.f32.mrb[0].mxu0
        %v2774 = vadd.f32 0.0, %v2773
        %v2775 = vpop.f32.mrb[0].mxu0
        %v2776 = vpop.f32.mrb[0].mxu0
        %v2777 = vadd.f32 0.0, %v2776
        %v2778 = vpop.f32.mrb[0].mxu0
        %2779 = vmatprep.mubr.bf16.mxu0 %v1852
        %2780 = vmatmul.mubr.bf16.gmra.mrb[0].mxu0 %v1851
        %v2781 = vpop.f32.mrb[0].mxu0
        %v2782 = vadd.f32 0.0, %v2781
        %v2783 = vpop.f32.mrb[0].mxu0
        %v2784 = vpop.f32.mrb[0].mxu0
        %v2785 = vadd.f32 0.0, %v2784
        %v2786 = vpop.f32.mrb[0].mxu0
        %2787 = vmatprep.mubr.bf16.mxu0 %v1860
        %2788 = vmatmul.mubr.bf16.gmra.mrb[0].mxu0 %v1859
        %v2789 = vpop.f32.mrb[0].mxu0
        %v2790 = vadd.f32 0.0, %v2789
        %v2791 = vpop.f32.mrb[0].mxu0
        %v2792 = vpop.f32.mrb[0].mxu0
        %v2793 = vadd.f32 0.0, %v2792
        %v2794 = vpop.f32.mrb[0].mxu0
        %2795 = vmatprep.mubr.bf16.mxu0 %v1868
        %2796 = vmatmul.mubr.bf16.gmra.mrb[0].mxu0 %v1867
        %v2797 = vpop.f32.mrb[0].mxu0
        %v2798 = vadd.f32 0.0, %v2797
        %v2799 = vpop.f32.mrb[0].mxu0
        %v2800 = vpop.f32.mrb[0].mxu0
        %v2801 = vadd.f32 0.0, %v2800
        %v2802 = vpop.f32.mrb[0].mxu0
        %2803 = vdwg.mxu0
        %2804 = vmatprep.subr.bf16.mxu0 0
        %2805 = vmatpush1.bf16.msra.mxu0 %v2403
        %2806 = vmatprep.subr.bf16.mxu0 0
        %2807 = vmatpush1.bf16.msra.mxu0 %v2404
        %2808 = vmatprep.subr.bf16.mxu0 0
        %2809 = vmatpush1.bf16.msra.mxu0 %v2405
        %2810 = vmatprep.subr.bf16.mxu0 0
        %2811 = vmatpush1.bf16.msra.mxu0 %v2406
        %2812 = vmatprep.subr.bf16.mxu0 0
        %2813 = vmatpush1.bf16.msra.mxu0 %v2407
        %2814 = vmatprep.subr.bf16.mxu0 0
        %2815 = vmatpush1.bf16.msra.mxu0 %v2408
        %2816 = vmatprep.subr.bf16.mxu0 0
        %2817 = vmatpush1.bf16.msra.mxu0 %v2409
        %2818 = vmatprep.subr.bf16.mxu0 0
        %2819 = vmatpush1.bf16.msra.mxu0 %v2410
        %2820 = vmatprep.subr.bf16.mxu0 0
        %2821 = vmatpush1.bf16.msra.mxu0 %v2411
        %2822 = vmatprep.subr.bf16.mxu0 0
        %2823 = vmatpush1.bf16.msra.mxu0 %v2412
        %2824 = vmatprep.subr.bf16.mxu0 0
        %2825 = vmatpush1.bf16.msra.mxu0 %v2413
        %2826 = vmatprep.subr.bf16.mxu0 0
        %2827 = vmatpush1.bf16.msra.mxu0 %v2414
        %2828 = vmatprep.subr.bf16.mxu0 0
        %2829 = vmatpush1.bf16.msra.mxu0 %v2415
        %2830 = vmatprep.subr.bf16.mxu0 0
        %2831 = vmatpush1.bf16.msra.mxu0 %v2416
        %2832 = vmatprep.subr.bf16.mxu0 0
        %2833 = vmatpush1.bf16.msra.mxu0 %v2417
        %2834 = vmatprep.subr.bf16.mxu0 0
        %2835 = vmatpush1.bf16.msra.mxu0 %v2418
        %2836 = vmatprep.mubr.bf16.mxu0 %v1622
        %2837 = vmatmul.mubr.bf16.gmra.mrb[0].mxu0 %v1621
        %v2838 = vpop.f32.mrb[0].mxu0
        %v2839 = vadd.f32 %v2550, %v2838
        %v2840 = vpop.f32.mrb[0].mxu0
        %v2841 = vpop.f32.mrb[0].mxu0
        %v2842 = vadd.f32 %v2553, %v2841
        %v2843 = vpop.f32.mrb[0].mxu0
        %2844 = vmatprep.mubr.bf16.mxu0 %v1630
        %2845 = vmatmul.mubr.bf16.gmra.mrb[0].mxu0 %v1629
        %v2846 = vpop.f32.mrb[0].mxu0
        %v2847 = vadd.f32 %v2558, %v2846
        %v2848 = vpop.f32.mrb[0].mxu0
        %v2849 = vpop.f32.mrb[0].mxu0
        %v2850 = vadd.f32 %v2561, %v2849
        %v2851 = vpop.f32.mrb[0].mxu0
        %2852 = vmatprep.mubr.bf16.mxu0 %v1638
        %2853 = vmatmul.mubr.bf16.gmra.mrb[0].mxu0 %v1637
        %v2854 = vpop.f32.mrb[0].mxu0
        %v2855 = vadd.f32 %v2566, %v2854
        %v2856 = vpop.f32.mrb[0].mxu0
        %v2857 = vpop.f32.mrb[0].mxu0
        %v2858 = vadd.f32 %v2569, %v2857
        %v2859 = vpop.f32.mrb[0].mxu0
        %2860 = vmatprep.mubr.bf16.mxu0 %v1646
        %2861 = vmatmul.mubr.bf16.gmra.mrb[0].mxu0 %v1645
        %v2862 = vpop.f32.mrb[0].mxu0
        %v2863 = vadd.f32 %v2574, %v2862
        %v2864 = vpop.f32.mrb[0].mxu0
        %v2865 = vpop.f32.mrb[0].mxu0
        %v2866 = vadd.f32 %v2577, %v2865
        %v2867 = vpop.f32.mrb[0].mxu0
        %2868 = vmatprep.mubr.bf16.mxu0 %v1654
        %2869 = vmatmul.mubr.bf16.gmra.mrb[0].mxu0 %v1653
        %v2870 = vpop.f32.mrb[0].mxu0
        %v2871 = vadd.f32 %v2582, %v2870
        %v2872 = vpop.f32.mrb[0].mxu0
        %v2873 = vpop.f32.mrb[0].mxu0
        %v2874 = vadd.f32 %v2585, %v2873
        %v2875 = vpop.f32.mrb[0].mxu0
        %2876 = vmatprep.mubr.bf16.mxu0 %v1662
        %2877 = vmatmul.mubr.bf16.gmra.mrb[0].mxu0 %v1661
        %v2878 = vpop.f32.mrb[0].mxu0
        %v2879 = vadd.f32 %v2590, %v2878
        %v2880 = vpop.f32.mrb[0].mxu0
        %v2881 = vpop.f32.mrb[0].mxu0
        %v2882 = vadd.f32 %v2593, %v2881
        %v2883 = vpop.f32.mrb[0].mxu0
        %2884 = vmatprep.mubr.bf16.mxu0 %v1670
        %2885 = vmatmul.mubr.bf16.gmra.mrb[0].mxu0 %v1669
        %v2886 = vpop.f32.mrb[0].mxu0
        %v2887 = vadd.f32 %v2598, %v2886
        %v2888 = vpop.f32.mrb[0].mxu0
        %v2889 = vpop.f32.mrb[0].mxu0
        %v2890 = vadd.f32 %v2601, %v2889
        %v2891 = vpop.f32.mrb[0].mxu0
        %2892 = vmatprep.mubr.bf16.mxu0 %v1678
        %2893 = vmatmul.mubr.bf16.gmra.mrb[0].mxu0 %v1677
        %v2894 = vpop.f32.mrb[0].mxu0
        %v2895 = vadd.f32 %v2606, %v2894
        %v2896 = vpop.f32.mrb[0].mxu0
        %v2897 = vpop.f32.mrb[0].mxu0
        %v2898 = vadd.f32 %v2609, %v2897
        %v2899 = vpop.f32.mrb[0].mxu0
        %2900 = vmatprep.mubr.bf16.mxu0 %v1686
        %2901 = vmatmul.mubr.bf16.gmra.mrb[0].mxu0 %v1685
        %v2902 = vpop.f32.mrb[0].mxu0
        %v2903 = vadd.f32 %v2614, %v2902
        %v2904 = vpop.f32.mrb[0].mxu0
        %v2905 = vpop.f32.mrb[0].mxu0
        %v2906 = vadd.f32 %v2617, %v2905
        %v2907 = vpop.f32.mrb[0].mxu0
        %2908 = vmatprep.mubr.bf16.mxu0 %v1694
        %2909 = vmatmul.mubr.bf16.gmra.mrb[0].mxu0 %v1693
        %v2910 = vpop.f32.mrb[0].mxu0
        %v2911 = vadd.f32 %v2622, %v2910
        %v2912 = vpop.f32.mrb[0].mxu0
        %v2913 = vpop.f32.mrb[0].mxu0
        %v2914 = vadd.f32 %v2625, %v2913
        %v2915 = vpop.f32.mrb[0].mxu0
        %2916 = vmatprep.mubr.bf16.mxu0 %v1702
        %2917 = vmatmul.mubr.bf16.gmra.mrb[0].mxu0 %v1701
        %v2918 = vpop.f32.mrb[0].mxu0
        %v2919 = vadd.f32 %v2630, %v2918
        %v2920 = vpop.f32.mrb[0].mxu0
        %v2921 = vpop.f32.mrb[0].mxu0
        %v2922 = vadd.f32 %v2633, %v2921
        %v2923 = vpop.f32.mrb[0].mxu0
        %2924 = vmatprep.mubr.bf16.mxu0 %v1710
        %2925 = vmatmul.mubr.bf16.gmra.mrb[0].mxu0 %v1709
        %v2926 = vpop.f32.mrb[0].mxu0
        %v2927 = vadd.f32 %v2638, %v2926
        %v2928 = vpop.f32.mrb[0].mxu0
        %v2929 = vpop.f32.mrb[0].mxu0
        %v2930 = vadd.f32 %v2641, %v2929
        %v2931 = vpop.f32.mrb[0].mxu0
        %2932 = vmatprep.mubr.bf16.mxu0 %v1718
        %2933 = vmatmul.mubr.bf16.gmra.mrb[0].mxu0 %v1717
        %v2934 = vpop.f32.mrb[0].mxu0
        %v2935 = vadd.f32 %v2646, %v2934
        %v2936 = vpop.f32.mrb[0].mxu0
        %v2937 = vpop.f32.mrb[0].mxu0
        %v2938 = vadd.f32 %v2649, %v2937
        %v2939 = vpop.f32.mrb[0].mxu0
        %2940 = vmatprep.mubr.bf16.mxu0 %v1726
        %2941 = vmatmul.mubr.bf16.gmra.mrb[0].mxu0 %v1725
        %v2942 = vpop.f32.mrb[0].mxu0
        %v2943 = vadd.f32 %v2654, %v2942
        %v2944 = vpop.f32.mrb[0].mxu0
        %v2945 = vpop.f32.mrb[0].mxu0
        %v2946 = vadd.f32 %v2657, %v2945
        %v2947 = vpop.f32.mrb[0].mxu0
        %2948 = vmatprep.mubr.bf16.mxu0 %v1734
        %2949 = vmatmul.mubr.bf16.gmra.mrb[0].mxu0 %v1733
        %v2950 = vpop.f32.mrb[0].mxu0
        %v2951 = vadd.f32 %v2662, %v2950
        %v2952 = vpop.f32.mrb[0].mxu0
        %v2953 = vpop.f32.mrb[0].mxu0
        %v2954 = vadd.f32 %v2665, %v2953
        %v2955 = vpop.f32.mrb[0].mxu0
        %2956 = vmatprep.mubr.bf16.mxu0 %v1742
        %2957 = vmatmul.mubr.bf16.gmra.mrb[0].mxu0 %v1741
        %v2958 = vpop.f32.mrb[0].mxu0
        %v2959 = vadd.f32 %v2670, %v2958
        %v2960 = vpop.f32.mrb[0].mxu0
        %v2961 = vpop.f32.mrb[0].mxu0
        %v2962 = vadd.f32 %v2673, %v2961
        %v2963 = vpop.f32.mrb[0].mxu0
        %2964 = vmatprep.mubr.bf16.mxu0 %v1750
        %2965 = vmatmul.mubr.bf16.gmra.mrb[0].mxu0 %v1749
        %v2966 = vpop.f32.mrb[0].mxu0
        %v2967 = vadd.f32 %v2678, %v2966
        %v2968 = vpop.f32.mrb[0].mxu0
        %v2969 = vpop.f32.mrb[0].mxu0
        %v2970 = vadd.f32 %v2681, %v2969
        %v2971 = vpop.f32.mrb[0].mxu0
        %2972 = vmatprep.mubr.bf16.mxu0 %v1758
        %2973 = vmatmul.mubr.bf16.gmra.mrb[0].mxu0 %v1757
        %v2974 = vpop.f32.mrb[0].mxu0
        %v2975 = vadd.f32 %v2686, %v2974
        %v2976 = vpop.f32.mrb[0].mxu0
        %v2977 = vpop.f32.mrb[0].mxu0
        %v2978 = vadd.f32 %v2689, %v2977
        %v2979 = vpop.f32.mrb[0].mxu0
        %2980 = vmatprep.mubr.bf16.mxu0 %v1766
        %2981 = vmatmul.mubr.bf16.gmra.mrb[0].mxu0 %v1765
        %v2982 = vpop.f32.mrb[0].mxu0
        %v2983 = vadd.f32 %v2694, %v2982
        %v2984 = vpop.f32.mrb[0].mxu0
        %v2985 = vpop.f32.mrb[0].mxu0
        %v2986 = vadd.f32 %v2697, %v2985
        %v2987 = vpop.f32.mrb[0].mxu0
        %2988 = vmatprep.mubr.bf16.mxu0 %v1774
        %2989 = vmatmul.mubr.bf16.gmra.mrb[0].mxu0 %v1773
        %v2990 = vpop.f32.mrb[0].mxu0
        %v2991 = vadd.f32 %v2702, %v2990
        %v2992 = vpop.f32.mrb[0].mxu0
        %v2993 = vpop.f32.mrb[0].mxu0
        %v2994 = vadd.f32 %v2705, %v2993
        %v2995 = vpop.f32.mrb[0].mxu0
        %2996 = vmatprep.mubr.bf16.mxu0 %v1782
        %2997 = vmatmul.mubr.bf16.gmra.mrb[0].mxu0 %v1781
        %v2998 = vpop.f32.mrb[0].mxu0
        %v2999 = vadd.f32 %v2710, %v2998
        %v3000 = vpop.f32.mrb[0].mxu0
        %v3001 = vpop.f32.mrb[0].mxu0
        %v3002 = vadd.f32 %v2713, %v3001
        %v3003 = vpop.f32.mrb[0].mxu0
        %3004 = vmatprep.mubr.bf16.mxu0 %v1790
        %3005 = vmatmul.mubr.bf16.gmra.mrb[0].mxu0 %v1789
        %v3006 = vpop.f32.mrb[0].mxu0
        %v3007 = vadd.f32 %v2718, %v3006
        %v3008 = vpop.f32.mrb[0].mxu0
        %v3009 = vpop.f32.mrb[0].mxu0
        %v3010 = vadd.f32 %v2721, %v3009
        %v3011 = vpop.f32.mrb[0].mxu0
        %3012 = vmatprep.mubr.bf16.mxu0 %v1798
        %3013 = vmatmul.mubr.bf16.gmra.mrb[0].mxu0 %v1797
        %v3014 = vpop.f32.mrb[0].mxu0
        %v3015 = vadd.f32 %v2726, %v3014
        %v3016 = vpop.f32.mrb[0].mxu0
        %v3017 = vpop.f32.mrb[0].mxu0
        %v3018 = vadd.f32 %v2729, %v3017
        %v3019 = vpop.f32.mrb[0].mxu0
        %3020 = vmatprep.mubr.bf16.mxu0 %v1806
        %3021 = vmatmul.mubr.bf16.gmra.mrb[0].mxu0 %v1805
        %v3022 = vpop.f32.mrb[0].mxu0
        %v3023 = vadd.f32 %v2734, %v3022
        %v3024 = vpop.f32.mrb[0].mxu0
        %v3025 = vpop.f32.mrb[0].mxu0
        %v3026 = vadd.f32 %v2737, %v3025
        %v3027 = vpop.f32.mrb[0].mxu0
        %3028 = vmatprep.mubr.bf16.mxu0 %v1814
        %3029 = vmatmul.mubr.bf16.gmra.mrb[0].mxu0 %v1813
        %v3030 = vpop.f32.mrb[0].mxu0
        %v3031 = vadd.f32 %v2742, %v3030
        %v3032 = vpop.f32.mrb[0].mxu0
        %v3033 = vpop.f32.mrb[0].mxu0
        %v3034 = vadd.f32 %v2745, %v3033
        %v3035 = vpop.f32.mrb[0].mxu0
        %3036 = vmatprep.mubr.bf16.mxu0 %v1822
        %3037 = vmatmul.mubr.bf16.gmra.mrb[0].mxu0 %v1821
        %v3038 = vpop.f32.mrb[0].mxu0
        %v3039 = vadd.f32 %v2750, %v3038
        %v3040 = vpop.f32.mrb[0].mxu0
        %v3041 = vpop.f32.mrb[0].mxu0
        %v3042 = vadd.f32 %v2753, %v3041
        %v3043 = vpop.f32.mrb[0].mxu0
        %3044 = vmatprep.mubr.bf16.mxu0 %v1830
        %3045 = vmatmul.mubr.bf16.gmra.mrb[0].mxu0 %v1829
        %v3046 = vpop.f32.mrb[0].mxu0
        %v3047 = vadd.f32 %v2758, %v3046
        %v3048 = vpop.f32.mrb[0].mxu0
        %v3049 = vpop.f32.mrb[0].mxu0
        %v3050 = vadd.f32 %v2761, %v3049
        %v3051 = vpop.f32.mrb[0].mxu0
        %3052 = vmatprep.mubr.bf16.mxu0 %v1838
        %3053 = vmatmul.mubr.bf16.gmra.mrb[0].mxu0 %v1837
        %v3054 = vpop.f32.mrb[0].mxu0
        %v3055 = vadd.f32 %v2766, %v3054
        %v3056 = vpop.f32.mrb[0].mxu0
        %v3057 = vpop.f32.mrb[0].mxu0
        %v3058 = vadd.f32 %v2769, %v3057
        %v3059 = vpop.f32.mrb[0].mxu0
        %3060 = vmatprep.mubr.bf16.mxu0 %v1846
        %3061 = vmatmul.mubr.bf16.gmra.mrb[0].mxu0 %v1845
        %v3062 = vpop.f32.mrb[0].mxu0
        %v3063 = vadd.f32 %v2774, %v3062
        %v3064 = vpop.f32.mrb[0].mxu0
        %v3065 = vpop.f32.mrb[0].mxu0
        %v3066 = vadd.f32 %v2777, %v3065
        %v3067 = vpop.f32.mrb[0].mxu0
        %3068 = vmatprep.mubr.bf16.mxu0 %v1854
        %3069 = vmatmul.mubr.bf16.gmra.mrb[0].mxu0 %v1853
        %v3070 = vpop.f32.mrb[0].mxu0
        %v3071 = vadd.f32 %v2782, %v3070
        %v3072 = vpop.f32.mrb[0].mxu0
        %v3073 = vpop.f32.mrb[0].mxu0
        %v3074 = vadd.f32 %v2785, %v3073
        %v3075 = vpop.f32.mrb[0].mxu0
        %3076 = vmatprep.mubr.bf16.mxu0 %v1862
        %3077 = vmatmul.mubr.bf16.gmra.mrb[0].mxu0 %v1861
        %v3078 = vpop.f32.mrb[0].mxu0
        %v3079 = vadd.f32 %v2790, %v3078
        %v3080 = vpop.f32.mrb[0].mxu0
        %v3081 = vpop.f32.mrb[0].mxu0
        %v3082 = vadd.f32 %v2793, %v3081
        %v3083 = vpop.f32.mrb[0].mxu0
        %3084 = vmatprep.mubr.bf16.mxu0 %v1870
        %3085 = vmatmul.mubr.bf16.gmra.mrb[0].mxu0 %v1869
        %v3086 = vpop.f32.mrb[0].mxu0
        %v3087 = vadd.f32 %v2798, %v3086
        %v3088 = vpop.f32.mrb[0].mxu0
        %v3089 = vpop.f32.mrb[0].mxu0
        %v3090 = vadd.f32 %v2801, %v3089
        %v3091 = vpop.f32.mrb[0].mxu0
        %3092 = vdwg.mxu0
        %3093 = vmatprep.subr.bf16.mxu0 0
        %3094 = vmatpush1.bf16.msra.mxu0 %v2419
        %3095 = vmatprep.subr.bf16.mxu0 0
        %3096 = vmatpush1.bf16.msra.mxu0 %v2420
        %3097 = vmatprep.subr.bf16.mxu0 0
        %3098 = vmatpush1.bf16.msra.mxu0 %v2421
        %3099 = vmatprep.subr.bf16.mxu0 0
        %3100 = vmatpush1.bf16.msra.mxu0 %v2422
        %3101 = vmatprep.subr.bf16.mxu0 0
        %3102 = vmatpush1.bf16.msra.mxu0 %v2423
        %3103 = vmatprep.subr.bf16.mxu0 0
        %3104 = vmatpush1.bf16.msra.mxu0 %v2424
        %3105 = vmatprep.subr.bf16.mxu0 0
        %3106 = vmatpush1.bf16.msra.mxu0 %v2425
        %3107 = vmatprep.subr.bf16.mxu0 0
        %3108 = vmatpush1.bf16.msra.mxu0 %v2426
        %3109 = vmatprep.subr.bf16.mxu0 0
        %3110 = vmatpush1.bf16.msra.mxu0 %v2427
        %3111 = vmatprep.subr.bf16.mxu0 0
        %3112 = vmatpush1.bf16.msra.mxu0 %v2428
        %3113 = vmatprep.subr.bf16.mxu0 0
        %3114 = vmatpush1.bf16.msra.mxu0 %v2429
        %3115 = vmatprep.subr.bf16.mxu0 0
        %3116 = vmatpush1.bf16.msra.mxu0 %v2430
        %3117 = vmatprep.subr.bf16.mxu0 0
        %3118 = vmatpush1.bf16.msra.mxu0 %v2431
        %3119 = vmatprep.subr.bf16.mxu0 0
        %3120 = vmatpush1.bf16.msra.mxu0 %v2432
        %3121 = vmatprep.subr.bf16.mxu0 0
        %3122 = vmatpush1.bf16.msra.mxu0 %v2433
        %3123 = vmatprep.subr.bf16.mxu0 0
        %3124 = vmatpush1.bf16.msra.mxu0 %v2434
        %3125 = vmatprep.mubr.bf16.mxu0 %v1624
        %3126 = vmatmul.mubr.bf16.gmra.mrb[0].mxu0 %v1623
        %v3127 = vpop.f32.mrb[0].mxu0
        %v3128 = vadd.f32 %v2839, %v3127
        %v3129 = vpop.f32.mrb[0].mxu0
        %v3130 = vpop.f32.mrb[0].mxu0
        %v3131 = vadd.f32 %v2842, %v3130
        %v3132 = vpop.f32.mrb[0].mxu0
        %3133 = vmatprep.mubr.bf16.mxu0 %v1632
        %3134 = vmatmul.mubr.bf16.gmra.mrb[0].mxu0 %v1631
        %v3135 = vpop.f32.mrb[0].mxu0
        %v3136 = vadd.f32 %v2847, %v3135
        %v3137 = vpop.f32.mrb[0].mxu0
        %v3138 = vpop.f32.mrb[0].mxu0
        %v3139 = vadd.f32 %v2850, %v3138
        %v3140 = vpop.f32.mrb[0].mxu0
        %3141 = vmatprep.mubr.bf16.mxu0 %v1640
        %3142 = vmatmul.mubr.bf16.gmra.mrb[0].mxu0 %v1639
        %v3143 = vpop.f32.mrb[0].mxu0
        %v3144 = vadd.f32 %v2855, %v3143
        %v3145 = vpop.f32.mrb[0].mxu0
        %v3146 = vpop.f32.mrb[0].mxu0
        %v3147 = vadd.f32 %v2858, %v3146
        %v3148 = vpop.f32.mrb[0].mxu0
        %3149 = vmatprep.mubr.bf16.mxu0 %v1648
        %3150 = vmatmul.mubr.bf16.gmra.mrb[0].mxu0 %v1647
        %v3151 = vpop.f32.mrb[0].mxu0
        %v3152 = vadd.f32 %v2863, %v3151
        %v3153 = vpop.f32.mrb[0].mxu0
        %v3154 = vpop.f32.mrb[0].mxu0
        %v3155 = vadd.f32 %v2866, %v3154
        %v3156 = vpop.f32.mrb[0].mxu0
        %3157 = vmatprep.mubr.bf16.mxu0 %v1656
        %3158 = vmatmul.mubr.bf16.gmra.mrb[0].mxu0 %v1655
        %v3159 = vpop.f32.mrb[0].mxu0
        %v3160 = vadd.f32 %v2871, %v3159
        %v3161 = vpop.f32.mrb[0].mxu0
        %v3162 = vpop.f32.mrb[0].mxu0
        %v3163 = vadd.f32 %v2874, %v3162
        %v3164 = vpop.f32.mrb[0].mxu0
        %3165 = vmatprep.mubr.bf16.mxu0 %v1664
        %3166 = vmatmul.mubr.bf16.gmra.mrb[0].mxu0 %v1663
        %v3167 = vpop.f32.mrb[0].mxu0
        %v3168 = vadd.f32 %v2879, %v3167
        %v3169 = vpop.f32.mrb[0].mxu0
        %v3170 = vpop.f32.mrb[0].mxu0
        %v3171 = vadd.f32 %v2882, %v3170
        %v3172 = vpop.f32.mrb[0].mxu0
        %3173 = vmatprep.mubr.bf16.mxu0 %v1672
        %3174 = vmatmul.mubr.bf16.gmra.mrb[0].mxu0 %v1671
        %v3175 = vpop.f32.mrb[0].mxu0
        %v3176 = vadd.f32 %v2887, %v3175
        %v3177 = vpop.f32.mrb[0].mxu0
        %v3178 = vpop.f32.mrb[0].mxu0
        %v3179 = vadd.f32 %v2890, %v3178
        %v3180 = vpop.f32.mrb[0].mxu0
        %3181 = vmatprep.mubr.bf16.mxu0 %v1680
        %3182 = vmatmul.mubr.bf16.gmra.mrb[0].mxu0 %v1679
        %v3183 = vpop.f32.mrb[0].mxu0
        %v3184 = vadd.f32 %v2895, %v3183
        %v3185 = vpop.f32.mrb[0].mxu0
        %v3186 = vpop.f32.mrb[0].mxu0
        %v3187 = vadd.f32 %v2898, %v3186
        %v3188 = vpop.f32.mrb[0].mxu0
        %3189 = vmatprep.mubr.bf16.mxu0 %v1688
        %3190 = vmatmul.mubr.bf16.gmra.mrb[0].mxu0 %v1687
        %v3191 = vpop.f32.mrb[0].mxu0
        %v3192 = vadd.f32 %v2903, %v3191
        %v3193 = vpop.f32.mrb[0].mxu0
        %v3194 = vpop.f32.mrb[0].mxu0
        %v3195 = vadd.f32 %v2906, %v3194
        %v3196 = vpop.f32.mrb[0].mxu0
        %3197 = vmatprep.mubr.bf16.mxu0 %v1696
        %3198 = vmatmul.mubr.bf16.gmra.mrb[0].mxu0 %v1695
        %v3199 = vpop.f32.mrb[0].mxu0
        %v3200 = vadd.f32 %v2911, %v3199
        %v3201 = vpop.f32.mrb[0].mxu0
        %v3202 = vpop.f32.mrb[0].mxu0
        %v3203 = vadd.f32 %v2914, %v3202
        %v3204 = vpop.f32.mrb[0].mxu0
        %3205 = vmatprep.mubr.bf16.mxu0 %v1704
        %3206 = vmatmul.mubr.bf16.gmra.mrb[0].mxu0 %v1703
        %v3207 = vpop.f32.mrb[0].mxu0
        %v3208 = vadd.f32 %v2919, %v3207
        %v3209 = vpop.f32.mrb[0].mxu0
        %v3210 = vpop.f32.mrb[0].mxu0
        %v3211 = vadd.f32 %v2922, %v3210
        %v3212 = vpop.f32.mrb[0].mxu0
        %3213 = vmatprep.mubr.bf16.mxu0 %v1712
        %3214 = vmatmul.mubr.bf16.gmra.mrb[0].mxu0 %v1711
        %v3215 = vpop.f32.mrb[0].mxu0
        %v3216 = vadd.f32 %v2927, %v3215
        %v3217 = vpop.f32.mrb[0].mxu0
        %v3218 = vpop.f32.mrb[0].mxu0
        %v3219 = vadd.f32 %v2930, %v3218
        %v3220 = vpop.f32.mrb[0].mxu0
        %3221 = vmatprep.mubr.bf16.mxu0 %v1720
        %3222 = vmatmul.mubr.bf16.gmra.mrb[0].mxu0 %v1719
        %v3223 = vpop.f32.mrb[0].mxu0
        %v3224 = vadd.f32 %v2935, %v3223
        %v3225 = vpop.f32.mrb[0].mxu0
        %v3226 = vpop.f32.mrb[0].mxu0
        %v3227 = vadd.f32 %v2938, %v3226
        %v3228 = vpop.f32.mrb[0].mxu0
        %3229 = vmatprep.mubr.bf16.mxu0 %v1728
        %3230 = vmatmul.mubr.bf16.gmra.mrb[0].mxu0 %v1727
        %v3231 = vpop.f32.mrb[0].mxu0
        %v3232 = vadd.f32 %v2943, %v3231
        %v3233 = vpop.f32.mrb[0].mxu0
        %v3234 = vpop.f32.mrb[0].mxu0
        %v3235 = vadd.f32 %v2946, %v3234
        %v3236 = vpop.f32.mrb[0].mxu0
        %3237 = vmatprep.mubr.bf16.mxu0 %v1736
        %3238 = vmatmul.mubr.bf16.gmra.mrb[0].mxu0 %v1735
        %v3239 = vpop.f32.mrb[0].mxu0
        %v3240 = vadd.f32 %v2951, %v3239
        %v3241 = vpop.f32.mrb[0].mxu0
        %v3242 = vpop.f32.mrb[0].mxu0
        %v3243 = vadd.f32 %v2954, %v3242
        %v3244 = vpop.f32.mrb[0].mxu0
        %3245 = vmatprep.mubr.bf16.mxu0 %v1744
        %3246 = vmatmul.mubr.bf16.gmra.mrb[0].mxu0 %v1743
        %v3247 = vpop.f32.mrb[0].mxu0
        %v3248 = vadd.f32 %v2959, %v3247
        %v3249 = vpop.f32.mrb[0].mxu0
        %v3250 = vpop.f32.mrb[0].mxu0
        %v3251 = vadd.f32 %v2962, %v3250
        %v3252 = vpop.f32.mrb[0].mxu0
        %3253 = vmatprep.mubr.bf16.mxu0 %v1752
        %3254 = vmatmul.mubr.bf16.gmra.mrb[0].mxu0 %v1751
        %v3255 = vpop.f32.mrb[0].mxu0
        %v3256 = vadd.f32 %v2967, %v3255
        %v3257 = vpop.f32.mrb[0].mxu0
        %v3258 = vpop.f32.mrb[0].mxu0
        %v3259 = vadd.f32 %v2970, %v3258
        %v3260 = vpop.f32.mrb[0].mxu0
        %3261 = vmatprep.mubr.bf16.mxu0 %v1760
        %3262 = vmatmul.mubr.bf16.gmra.mrb[0].mxu0 %v1759
        %v3263 = vpop.f32.mrb[0].mxu0
        %v3264 = vadd.f32 %v2975, %v3263
        %v3265 = vpop.f32.mrb[0].mxu0
        %v3266 = vpop.f32.mrb[0].mxu0
        %v3267 = vadd.f32 %v2978, %v3266
        %v3268 = vpop.f32.mrb[0].mxu0
        %3269 = vmatprep.mubr.bf16.mxu0 %v1768
        %3270 = vmatmul.mubr.bf16.gmra.mrb[0].mxu0 %v1767
        %v3271 = vpop.f32.mrb[0].mxu0
        %v3272 = vadd.f32 %v2983, %v3271
        %v3273 = vpop.f32.mrb[0].mxu0
        %v3274 = vpop.f32.mrb[0].mxu0
        %v3275 = vadd.f32 %v2986, %v3274
        %v3276 = vpop.f32.mrb[0].mxu0
        %3277 = vmatprep.mubr.bf16.mxu0 %v1776
        %3278 = vmatmul.mubr.bf16.gmra.mrb[0].mxu0 %v1775
        %v3279 = vpop.f32.mrb[0].mxu0
        %v3280 = vadd.f32 %v2991, %v3279
        %v3281 = vpop.f32.mrb[0].mxu0
        %v3282 = vpop.f32.mrb[0].mxu0
        %v3283 = vadd.f32 %v2994, %v3282
        %v3284 = vpop.f32.mrb[0].mxu0
        %3285 = vmatprep.mubr.bf16.mxu0 %v1784
        %3286 = vmatmul.mubr.bf16.gmra.mrb[0].mxu0 %v1783
        %v3287 = vpop.f32.mrb[0].mxu0
        %v3288 = vadd.f32 %v2999, %v3287
        %v3289 = vpop.f32.mrb[0].mxu0
        %v3290 = vpop.f32.mrb[0].mxu0
        %v3291 = vadd.f32 %v3002, %v3290
        %v3292 = vpop.f32.mrb[0].mxu0
        %3293 = vmatprep.mubr.bf16.mxu0 %v1792
        %3294 = vmatmul.mubr.bf16.gmra.mrb[0].mxu0 %v1791
        %v3295 = vpop.f32.mrb[0].mxu0
        %v3296 = vadd.f32 %v3007, %v3295
        %v3297 = vpop.f32.mrb[0].mxu0
        %v3298 = vpop.f32.mrb[0].mxu0
        %v3299 = vadd.f32 %v3010, %v3298
        %v3300 = vpop.f32.mrb[0].mxu0
        %3301 = vmatprep.mubr.bf16.mxu0 %v1800
        %3302 = vmatmul.mubr.bf16.gmra.mrb[0].mxu0 %v1799
        %v3303 = vpop.f32.mrb[0].mxu0
        %v3304 = vadd.f32 %v3015, %v3303
        %v3305 = vpop.f32.mrb[0].mxu0
        %v3306 = vpop.f32.mrb[0].mxu0
        %v3307 = vadd.f32 %v3018, %v3306
        %v3308 = vpop.f32.mrb[0].mxu0
        %3309 = vmatprep.mubr.bf16.mxu0 %v1808
        %3310 = vmatmul.mubr.bf16.gmra.mrb[0].mxu0 %v1807
        %v3311 = vpop.f32.mrb[0].mxu0
        %v3312 = vadd.f32 %v3023, %v3311
        %v3313 = vpop.f32.mrb[0].mxu0
        %v3314 = vpop.f32.mrb[0].mxu0
        %v3315 = vadd.f32 %v3026, %v3314
        %v3316 = vpop.f32.mrb[0].mxu0
        %3317 = vmatprep.mubr.bf16.mxu0 %v1816
        %3318 = vmatmul.mubr.bf16.gmra.mrb[0].mxu0 %v1815
        %v3319 = vpop.f32.mrb[0].mxu0
        %v3320 = vadd.f32 %v3031, %v3319
        %v3321 = vpop.f32.mrb[0].mxu0
        %v3322 = vpop.f32.mrb[0].mxu0
        %v3323 = vadd.f32 %v3034, %v3322
        %v3324 = vpop.f32.mrb[0].mxu0
        %3325 = vmatprep.mubr.bf16.mxu0 %v1824
        %3326 = vmatmul.mubr.bf16.gmra.mrb[0].mxu0 %v1823
        %v3327 = vpop.f32.mrb[0].mxu0
        %v3328 = vadd.f32 %v3039, %v3327
        %v3329 = vpop.f32.mrb[0].mxu0
        %v3330 = vpop.f32.mrb[0].mxu0
        %v3331 = vadd.f32 %v3042, %v3330
        %v3332 = vpop.f32.mrb[0].mxu0
        %3333 = vmatprep.mubr.bf16.mxu0 %v1832
        %3334 = vmatmul.mubr.bf16.gmra.mrb[0].mxu0 %v1831
        %v3335 = vpop.f32.mrb[0].mxu0
        %v3336 = vadd.f32 %v3047, %v3335
        %v3337 = vpop.f32.mrb[0].mxu0
        %v3338 = vpop.f32.mrb[0].mxu0
        %v3339 = vadd.f32 %v3050, %v3338
        %v3340 = vpop.f32.mrb[0].mxu0
        %3341 = vmatprep.mubr.bf16.mxu0 %v1840
        %3342 = vmatmul.mubr.bf16.gmra.mrb[0].mxu0 %v1839
        %v3343 = vpop.f32.mrb[0].mxu0
        %v3344 = vadd.f32 %v3055, %v3343
        %v3345 = vpop.f32.mrb[0].mxu0
        %v3346 = vpop.f32.mrb[0].mxu0
        %v3347 = vadd.f32 %v3058, %v3346
        %v3348 = vpop.f32.mrb[0].mxu0
        %3349 = vmatprep.mubr.bf16.mxu0 %v1848
        %3350 = vmatmul.mubr.bf16.gmra.mrb[0].mxu0 %v1847
        %v3351 = vpop.f32.mrb[0].mxu0
        %v3352 = vadd.f32 %v3063, %v3351
        %v3353 = vpop.f32.mrb[0].mxu0
        %v3354 = vpop.f32.mrb[0].mxu0
        %v3355 = vadd.f32 %v3066, %v3354
        %v3356 = vpop.f32.mrb[0].mxu0
        %3357 = vmatprep.mubr.bf16.mxu0 %v1856
        %3358 = vmatmul.mubr.bf16.gmra.mrb[0].mxu0 %v1855
        %v3359 = vpop.f32.mrb[0].mxu0
        %v3360 = vadd.f32 %v3071, %v3359
        %v3361 = vpop.f32.mrb[0].mxu0
        %v3362 = vpop.f32.mrb[0].mxu0
        %v3363 = vadd.f32 %v3074, %v3362
        %v3364 = vpop.f32.mrb[0].mxu0
        %3365 = vmatprep.mubr.bf16.mxu0 %v1864
        %3366 = vmatmul.mubr.bf16.gmra.mrb[0].mxu0 %v1863
        %v3367 = vpop.f32.mrb[0].mxu0
        %v3368 = vadd.f32 %v3079, %v3367
        %v3369 = vpop.f32.mrb[0].mxu0
        %v3370 = vpop.f32.mrb[0].mxu0
        %v3371 = vadd.f32 %v3082, %v3370
        %v3372 = vpop.f32.mrb[0].mxu0
        %3373 = vmatprep.mubr.bf16.mxu0 %v1872
        %3374 = vmatmul.mubr.bf16.gmra.mrb[0].mxu0 %v1871
        %v3375 = vpop.f32.mrb[0].mxu0
        %v3376 = vadd.f32 %v3087, %v3375
        %v3377 = vpop.f32.mrb[0].mxu0
        %v3378 = vpop.f32.mrb[0].mxu0
        %v3379 = vadd.f32 %v3090, %v3378
        %v3380 = vpop.f32.mrb[0].mxu0
        %3381 = vdwg.mxu0
        %3382 = vmatprep.subr.bf16.mxu0 0
        %3383 = vmatpush1.bf16.msra.mxu0 %v2435
        %3384 = vmatprep.subr.bf16.mxu0 0
        %3385 = vmatpush1.bf16.msra.mxu0 %v2436
        %3386 = vmatprep.subr.bf16.mxu0 0
        %3387 = vmatpush1.bf16.msra.mxu0 %v2437
        %3388 = vmatprep.subr.bf16.mxu0 0
        %3389 = vmatpush1.bf16.msra.mxu0 %v2438
        %3390 = vmatprep.subr.bf16.mxu0 0
        %3391 = vmatpush1.bf16.msra.mxu0 %v2439
        %3392 = vmatprep.subr.bf16.mxu0 0
        %3393 = vmatpush1.bf16.msra.mxu0 %v2440
        %3394 = vmatprep.subr.bf16.mxu0 0
        %3395 = vmatpush1.bf16.msra.mxu0 %v2441
        %3396 = vmatprep.subr.bf16.mxu0 0
        %3397 = vmatpush1.bf16.msra.mxu0 %v2442
        %3398 = vmatprep.subr.bf16.mxu0 0
        %3399 = vmatpush1.bf16.msra.mxu0 %v2443
        %3400 = vmatprep.subr.bf16.mxu0 0
        %3401 = vmatpush1.bf16.msra.mxu0 %v2444
        %3402 = vmatprep.subr.bf16.mxu0 0
        %3403 = vmatpush1.bf16.msra.mxu0 %v2445
        %3404 = vmatprep.subr.bf16.mxu0 0
        %3405 = vmatpush1.bf16.msra.mxu0 %v2446
        %3406 = vmatprep.subr.bf16.mxu0 0
        %3407 = vmatpush1.bf16.msra.mxu0 %v2447
        %3408 = vmatprep.subr.bf16.mxu0 0
        %3409 = vmatpush1.bf16.msra.mxu0 %v2448
        %3410 = vmatprep.subr.bf16.mxu0 0
        %3411 = vmatpush1.bf16.msra.mxu0 %v2449
        %3412 = vmatprep.subr.bf16.mxu0 0
        %3413 = vmatpush1.bf16.msra.mxu0 %v2450
        %3414 = vmatprep.mubr.bf16.mxu0 %v1626
        %3415 = vmatmul.mubr.bf16.gmra.mrb[0].mxu0 %v1625
        %v3416 = vpop.f32.mrb[0].mxu0
        %v3417 = vadd.f32 %v3128, %v3416
        %v3418 = vpop.f32.mrb[0].mxu0
        %v3419 = vpop.f32.mrb[0].mxu0
        %v3420 = vadd.f32 %v3131, %v3419
        %v3421 = vpop.f32.mrb[0].mxu0
        %3422 = vmatprep.mubr.bf16.mxu0 %v1634
        %3423 = vmatmul.mubr.bf16.gmra.mrb[0].mxu0 %v1633
        %v3424 = vpop.f32.mrb[0].mxu0
        %v3425 = vadd.f32 %v3136, %v3424
        %v3426 = vpop.f32.mrb[0].mxu0
        %v3427 = vpop.f32.mrb[0].mxu0
        %v3428 = vadd.f32 %v3139, %v3427
        %v3429 = vpop.f32.mrb[0].mxu0
        %3430 = vmatprep.mubr.bf16.mxu0 %v1642
        %3431 = vmatmul.mubr.bf16.gmra.mrb[0].mxu0 %v1641
        %v3432 = vpop.f32.mrb[0].mxu0
        %v3433 = vadd.f32 %v3144, %v3432
        %v3434 = vpop.f32.mrb[0].mxu0
        %v3435 = vpop.f32.mrb[0].mxu0
        %v3436 = vadd.f32 %v3147, %v3435
        %v3437 = vpop.f32.mrb[0].mxu0
        %3438 = vmatprep.mubr.bf16.mxu0 %v1650
        %3439 = vmatmul.mubr.bf16.gmra.mrb[0].mxu0 %v1649
        %v3440 = vpop.f32.mrb[0].mxu0
        %v3441 = vadd.f32 %v3152, %v3440
        %v3442 = vpop.f32.mrb[0].mxu0
        %v3443 = vpop.f32.mrb[0].mxu0
        %v3444 = vadd.f32 %v3155, %v3443
        %v3445 = vpop.f32.mrb[0].mxu0
        %3446 = vmatprep.mubr.bf16.mxu0 %v1658
        %3447 = vmatmul.mubr.bf16.gmra.mrb[0].mxu0 %v1657
        %v3448 = vpop.f32.mrb[0].mxu0
        %v3449 = vadd.f32 %v3160, %v3448
        %v3450 = vpop.f32.mrb[0].mxu0
        %v3451 = vpop.f32.mrb[0].mxu0
        %v3452 = vadd.f32 %v3163, %v3451
        %v3453 = vpop.f32.mrb[0].mxu0
        %3454 = vmatprep.mubr.bf16.mxu0 %v1666
        %3455 = vmatmul.mubr.bf16.gmra.mrb[0].mxu0 %v1665
        %v3456 = vpop.f32.mrb[0].mxu0
        %v3457 = vadd.f32 %v3168, %v3456
        %v3458 = vpop.f32.mrb[0].mxu0
        %v3459 = vpop.f32.mrb[0].mxu0
        %v3460 = vadd.f32 %v3171, %v3459
        %v3461 = vpop.f32.mrb[0].mxu0
        %3462 = vmatprep.mubr.bf16.mxu0 %v1674
        %3463 = vmatmul.mubr.bf16.gmra.mrb[0].mxu0 %v1673
        %v3464 = vpop.f32.mrb[0].mxu0
        %v3465 = vadd.f32 %v3176, %v3464
        %v3466 = vpop.f32.mrb[0].mxu0
        %v3467 = vpop.f32.mrb[0].mxu0
        %v3468 = vadd.f32 %v3179, %v3467
        %v3469 = vpop.f32.mrb[0].mxu0
        %3470 = vmatprep.mubr.bf16.mxu0 %v1682
        %3471 = vmatmul.mubr.bf16.gmra.mrb[0].mxu0 %v1681
        %v3472 = vpop.f32.mrb[0].mxu0
        %v3473 = vadd.f32 %v3184, %v3472
        %v3474 = vpop.f32.mrb[0].mxu0
        %v3475 = vpop.f32.mrb[0].mxu0
        %v3476 = vadd.f32 %v3187, %v3475
        %v3477 = vpop.f32.mrb[0].mxu0
        %3478 = vmatprep.mubr.bf16.mxu0 %v1690
        %3479 = vmatmul.mubr.bf16.gmra.mrb[0].mxu0 %v1689
        %v3480 = vpop.f32.mrb[0].mxu0
        %v3481 = vadd.f32 %v3192, %v3480
        %v3482 = vpop.f32.mrb[0].mxu0
        %v3483 = vpop.f32.mrb[0].mxu0
        %v3484 = vadd.f32 %v3195, %v3483
        %v3485 = vpop.f32.mrb[0].mxu0
        %3486 = vmatprep.mubr.bf16.mxu0 %v1698
        %3487 = vmatmul.mubr.bf16.gmra.mrb[0].mxu0 %v1697
        %v3488 = vpop.f32.mrb[0].mxu0
        %v3489 = vadd.f32 %v3200, %v3488
        %v3490 = vpop.f32.mrb[0].mxu0
        %v3491 = vpop.f32.mrb[0].mxu0
        %v3492 = vadd.f32 %v3203, %v3491
        %v3493 = vpop.f32.mrb[0].mxu0
        %3494 = vmatprep.mubr.bf16.mxu0 %v1706
        %3495 = vmatmul.mubr.bf16.gmra.mrb[0].mxu0 %v1705
        %v3496 = vpop.f32.mrb[0].mxu0
        %v3497 = vadd.f32 %v3208, %v3496
        %v3498 = vpop.f32.mrb[0].mxu0
        %v3499 = vpop.f32.mrb[0].mxu0
        %v3500 = vadd.f32 %v3211, %v3499
        %v3501 = vpop.f32.mrb[0].mxu0
        %3502 = vmatprep.mubr.bf16.mxu0 %v1714
        %3503 = vmatmul.mubr.bf16.gmra.mrb[0].mxu0 %v1713
        %v3504 = vpop.f32.mrb[0].mxu0
        %v3505 = vadd.f32 %v3216, %v3504
        %v3506 = vpop.f32.mrb[0].mxu0
        %v3507 = vpop.f32.mrb[0].mxu0
        %v3508 = vadd.f32 %v3219, %v3507
        %v3509 = vpop.f32.mrb[0].mxu0
        %3510 = vmatprep.mubr.bf16.mxu0 %v1722
        %3511 = vmatmul.mubr.bf16.gmra.mrb[0].mxu0 %v1721
        %v3512 = vpop.f32.mrb[0].mxu0
        %v3513 = vadd.f32 %v3224, %v3512
        %v3514 = vpop.f32.mrb[0].mxu0
        %v3515 = vpop.f32.mrb[0].mxu0
        %v3516 = vadd.f32 %v3227, %v3515
        %v3517 = vpop.f32.mrb[0].mxu0
        %3518 = vmatprep.mubr.bf16.mxu0 %v1730
        %3519 = vmatmul.mubr.bf16.gmra.mrb[0].mxu0 %v1729
        %v3520 = vpop.f32.mrb[0].mxu0
        %v3521 = vadd.f32 %v3232, %v3520
        %v3522 = vpop.f32.mrb[0].mxu0
        %v3523 = vpop.f32.mrb[0].mxu0
        %v3524 = vadd.f32 %v3235, %v3523
        %v3525 = vpop.f32.mrb[0].mxu0
        %3526 = vmatprep.mubr.bf16.mxu0 %v1738
        %3527 = vmatmul.mubr.bf16.gmra.mrb[0].mxu0 %v1737
        %v3528 = vpop.f32.mrb[0].mxu0
        %v3529 = vadd.f32 %v3240, %v3528
        %v3530 = vpop.f32.mrb[0].mxu0
        %v3531 = vpop.f32.mrb[0].mxu0
        %v3532 = vadd.f32 %v3243, %v3531
        %v3533 = vpop.f32.mrb[0].mxu0
        %3534 = vmatprep.mubr.bf16.mxu0 %v1746
        %3535 = vmatmul.mubr.bf16.gmra.mrb[0].mxu0 %v1745
        %v3536 = vpop.f32.mrb[0].mxu0
        %v3537 = vadd.f32 %v3248, %v3536
        %v3538 = vpop.f32.mrb[0].mxu0
        %v3539 = vpop.f32.mrb[0].mxu0
        %v3540 = vadd.f32 %v3251, %v3539
        %v3541 = vpop.f32.mrb[0].mxu0
        %3542 = vmatprep.mubr.bf16.mxu0 %v1754
        %3543 = vmatmul.mubr.bf16.gmra.mrb[0].mxu0 %v1753
        %v3544 = vpop.f32.mrb[0].mxu0
        %v3545 = vadd.f32 %v3256, %v3544
        %v3546 = vpop.f32.mrb[0].mxu0
        %v3547 = vpop.f32.mrb[0].mxu0
        %v3548 = vadd.f32 %v3259, %v3547
        %v3549 = vpop.f32.mrb[0].mxu0
        %3550 = vmatprep.mubr.bf16.mxu0 %v1762
        %3551 = vmatmul.mubr.bf16.gmra.mrb[0].mxu0 %v1761
        %v3552 = vpop.f32.mrb[0].mxu0
        %v3553 = vadd.f32 %v3264, %v3552
        %v3554 = vpop.f32.mrb[0].mxu0
        %v3555 = vpop.f32.mrb[0].mxu0
        %v3556 = vadd.f32 %v3267, %v3555
        %v3557 = vpop.f32.mrb[0].mxu0
        %3558 = vmatprep.mubr.bf16.mxu0 %v1770
        %3559 = vmatmul.mubr.bf16.gmra.mrb[0].mxu0 %v1769
        %v3560 = vpop.f32.mrb[0].mxu0
        %v3561 = vadd.f32 %v3272, %v3560
        %v3562 = vpop.f32.mrb[0].mxu0
        %v3563 = vpop.f32.mrb[0].mxu0
        %v3564 = vadd.f32 %v3275, %v3563
        %v3565 = vpop.f32.mrb[0].mxu0
        %3566 = vmatprep.mubr.bf16.mxu0 %v1778
        %3567 = vmatmul.mubr.bf16.gmra.mrb[0].mxu0 %v1777
        %v3568 = vpop.f32.mrb[0].mxu0
        %v3569 = vadd.f32 %v3280, %v3568
        %v3570 = vpop.f32.mrb[0].mxu0
        %v3571 = vpop.f32.mrb[0].mxu0
        %v3572 = vadd.f32 %v3283, %v3571
        %v3573 = vpop.f32.mrb[0].mxu0
        %3574 = vmatprep.mubr.bf16.mxu0 %v1786
        %3575 = vmatmul.mubr.bf16.gmra.mrb[0].mxu0 %v1785
        %v3576 = vpop.f32.mrb[0].mxu0
        %v3577 = vadd.f32 %v3288, %v3576
        %v3578 = vpop.f32.mrb[0].mxu0
        %v3579 = vpop.f32.mrb[0].mxu0
        %v3580 = vadd.f32 %v3291, %v3579
        %v3581 = vpop.f32.mrb[0].mxu0
        %3582 = vmatprep.mubr.bf16.mxu0 %v1794
        %3583 = vmatmul.mubr.bf16.gmra.mrb[0].mxu0 %v1793
        %v3584 = vpop.f32.mrb[0].mxu0
        %v3585 = vadd.f32 %v3296, %v3584
        %v3586 = vpop.f32.mrb[0].mxu0
        %v3587 = vpop.f32.mrb[0].mxu0
        %v3588 = vadd.f32 %v3299, %v3587
        %v3589 = vpop.f32.mrb[0].mxu0
        %3590 = vmatprep.mubr.bf16.mxu0 %v1802
        %3591 = vmatmul.mubr.bf16.gmra.mrb[0].mxu0 %v1801
        %v3592 = vpop.f32.mrb[0].mxu0
        %v3593 = vadd.f32 %v3304, %v3592
        %v3594 = vpop.f32.mrb[0].mxu0
        %v3595 = vpop.f32.mrb[0].mxu0
        %v3596 = vadd.f32 %v3307, %v3595
        %v3597 = vpop.f32.mrb[0].mxu0
        %3598 = vmatprep.mubr.bf16.mxu0 %v1810
        %3599 = vmatmul.mubr.bf16.gmra.mrb[0].mxu0 %v1809
        %v3600 = vpop.f32.mrb[0].mxu0
        %v3601 = vadd.f32 %v3312, %v3600
        %v3602 = vpop.f32.mrb[0].mxu0
        %v3603 = vpop.f32.mrb[0].mxu0
        %v3604 = vadd.f32 %v3315, %v3603
        %v3605 = vpop.f32.mrb[0].mxu0
        %3606 = vmatprep.mubr.bf16.mxu0 %v1818
        %3607 = vmatmul.mubr.bf16.gmra.mrb[0].mxu0 %v1817
        %v3608 = vpop.f32.mrb[0].mxu0
        %v3609 = vadd.f32 %v3320, %v3608
        %v3610 = vpop.f32.mrb[0].mxu0
        %v3611 = vpop.f32.mrb[0].mxu0
        %v3612 = vadd.f32 %v3323, %v3611
        %v3613 = vpop.f32.mrb[0].mxu0
        %3614 = vmatprep.mubr.bf16.mxu0 %v1826
        %3615 = vmatmul.mubr.bf16.gmra.mrb[0].mxu0 %v1825
        %v3616 = vpop.f32.mrb[0].mxu0
        %v3617 = vadd.f32 %v3328, %v3616
        %v3618 = vpop.f32.mrb[0].mxu0
        %v3619 = vpop.f32.mrb[0].mxu0
        %v3620 = vadd.f32 %v3331, %v3619
        %v3621 = vpop.f32.mrb[0].mxu0
        %3622 = vmatprep.mubr.bf16.mxu0 %v1834
        %3623 = vmatmul.mubr.bf16.gmra.mrb[0].mxu0 %v1833
        %v3624 = vpop.f32.mrb[0].mxu0
        %v3625 = vadd.f32 %v3336, %v3624
        %v3626 = vpop.f32.mrb[0].mxu0
        %v3627 = vpop.f32.mrb[0].mxu0
        %v3628 = vadd.f32 %v3339, %v3627
        %v3629 = vpop.f32.mrb[0].mxu0
        %3630 = vmatprep.mubr.bf16.mxu0 %v1842
        %3631 = vmatmul.mubr.bf16.gmra.mrb[0].mxu0 %v1841
        %v3632 = vpop.f32.mrb[0].mxu0
        %v3633 = vadd.f32 %v3344, %v3632
        %v3634 = vpop.f32.mrb[0].mxu0
        %v3635 = vpop.f32.mrb[0].mxu0
        %v3636 = vadd.f32 %v3347, %v3635
        %v3637 = vpop.f32.mrb[0].mxu0
        %3638 = vmatprep.mubr.bf16.mxu0 %v1850
        %3639 = vmatmul.mubr.bf16.gmra.mrb[0].mxu0 %v1849
        %v3640 = vpop.f32.mrb[0].mxu0
        %v3641 = vadd.f32 %v3352, %v3640
        %v3642 = vpop.f32.mrb[0].mxu0
        %v3643 = vpop.f32.mrb[0].mxu0
        %v3644 = vadd.f32 %v3355, %v3643
        %v3645 = vpop.f32.mrb[0].mxu0
        %3646 = vmatprep.mubr.bf16.mxu0 %v1858
        %3647 = vmatmul.mubr.bf16.gmra.mrb[0].mxu0 %v1857
        %v3648 = vpop.f32.mrb[0].mxu0
        %v3649 = vadd.f32 %v3360, %v3648
        %v3650 = vpop.f32.mrb[0].mxu0
        %v3651 = vpop.f32.mrb[0].mxu0
        %v3652 = vadd.f32 %v3363, %v3651
        %v3653 = vpop.f32.mrb[0].mxu0
        %3654 = vmatprep.mubr.bf16.mxu0 %v1866
        %3655 = vmatmul.mubr.bf16.gmra.mrb[0].mxu0 %v1865
        %v3656 = vpop.f32.mrb[0].mxu0
        %v3657 = vadd.f32 %v3368, %v3656
        %v3658 = vpop.f32.mrb[0].mxu0
        %v3659 = vpop.f32.mrb[0].mxu0
        %v3660 = vadd.f32 %v3371, %v3659
        %v3661 = vpop.f32.mrb[0].mxu0
        %3662 = vmatprep.mubr.bf16.mxu0 %v1874
        %3663 = vmatmul.mubr.bf16.gmra.mrb[0].mxu0 %v1873
        %v3664 = vpop.f32.mrb[0].mxu0
        %v3665 = vadd.f32 %v3376, %v3664
        %v3666 = vpop.f32.mrb[0].mxu0
        %v3667 = vpop.f32.mrb[0].mxu0
        %v3668 = vadd.f32 %v3379, %v3667
        %v3669 = vpop.f32.mrb[0].mxu0
        %3670 = vdwg.mxu0
        %v3671 = vadd.f32 %v403, %v3417
        %v3672 = vadd.f32 %v404, %v3420
        %v3673 = vadd.f32 %v405, %v3425
        %v3674 = vadd.f32 %v406, %v3428
        %v3675 = vadd.f32 %v407, %v3433
        %v3676 = vadd.f32 %v408, %v3436
        %v3677 = vadd.f32 %v409, %v3441
        %v3678 = vadd.f32 %v410, %v3444
        %v3679 = vadd.f32 %v411, %v3449
        %v3680 = vadd.f32 %v412, %v3452
        %v3681 = vadd.f32 %v413, %v3457
        %v3682 = vadd.f32 %v414, %v3460
        %v3683 = vadd.f32 %v415, %v3465
        %v3684 = vadd.f32 %v416, %v3468
        %v3685 = vadd.f32 %v417, %v3473
        %v3686 = vadd.f32 %v418, %v3476
        %v3687 = vadd.f32 %v419, %v3481
        %v3688 = vadd.f32 %v420, %v3484
        %v3689 = vadd.f32 %v421, %v3489
        %v3690 = vadd.f32 %v422, %v3492
        %v3691 = vadd.f32 %v423, %v3497
        %v3692 = vadd.f32 %v424, %v3500
        %v3693 = vadd.f32 %v425, %v3505
        %v3694 = vadd.f32 %v426, %v3508
        %v3695 = vadd.f32 %v427, %v3513
        %v3696 = vadd.f32 %v428, %v3516
        %v3697 = vadd.f32 %v429, %v3521
        %v3698 = vadd.f32 %v430, %v3524
        %v3699 = vadd.f32 %v431, %v3529
        %v3700 = vadd.f32 %v432, %v3532
        %v3701 = vadd.f32 %v433, %v3537
        %v3702 = vadd.f32 %v434, %v3540
        %v3703 = vadd.f32 %v435, %v3545
        %v3704 = vadd.f32 %v436, %v3548
        %v3705 = vadd.f32 %v437, %v3553
        %v3706 = vadd.f32 %v438, %v3556
        %v3707 = vadd.f32 %v439, %v3561
        %v3708 = vadd.f32 %v440, %v3564
        %v3709 = vadd.f32 %v441, %v3569
        %v3710 = vadd.f32 %v442, %v3572
        %v3711 = vadd.f32 %v443, %v3577
        %v3712 = vadd.f32 %v444, %v3580
        %v3713 = vadd.f32 %v445, %v3585
        %v3714 = vadd.f32 %v446, %v3588
        %v3715 = vadd.f32 %v447, %v3593
        %v3716 = vadd.f32 %v448, %v3596
        %v3717 = vadd.f32 %v449, %v3601
        %v3718 = vadd.f32 %v450, %v3604
        %v3719 = vadd.f32 %v451, %v3609
        %v3720 = vadd.f32 %v452, %v3612
        %v3721 = vadd.f32 %v453, %v3617
        %v3722 = vadd.f32 %v454, %v3620
        %v3723 = vadd.f32 %v455, %v3625
        %v3724 = vadd.f32 %v456, %v3628
        %v3725 = vadd.f32 %v457, %v3633
        %v3726 = vadd.f32 %v458, %v3636
        %v3727 = vadd.f32 %v459, %v3641
        %v3728 = vadd.f32 %v460, %v3644
        %v3729 = vadd.f32 %v461, %v3649
        %v3730 = vadd.f32 %v462, %v3652
        %v3731 = vadd.f32 %v463, %v3657
        %v3732 = vadd.f32 %v464, %v3660
        %v3733 = vadd.f32 %v465, %v3665
        %v3734 = vadd.f32 %v466, %v3668
        %3735 = vst [vmem:[%s323] sm:$0xff] %v3671
        %3736 = vst [vmem:[%s323 + $0x8] sm:$0xff] %v3672
        %3737 = vst [vmem:[%s323 + $0x10] sm:$0xff] %v3673
        %3738 = vst [vmem:[%s323 + $0x18] sm:$0xff] %v3674
        %3739 = vst [vmem:[%s323 + $0x20] sm:$0xff] %v3675
        %3740 = vst [vmem:[%s323 + $0x28] sm:$0xff] %v3676
        %3741 = vst [vmem:[%s323 + $0x30] sm:$0xff] %v3677
        %3742 = vst [vmem:[%s323 + $0x38] sm:$0xff] %v3678
        %3743 = vst [vmem:[%s323 + $0x40] sm:$0xff] %v3679
        %3744 = vst [vmem:[%s323 + $0x48] sm:$0xff] %v3680
        %3745 = vst [vmem:[%s323 + $0x50] sm:$0xff] %v3681
        %3746 = vst [vmem:[%s323 + $0x58] sm:$0xff] %v3682
        %3747 = vst [vmem:[%s323 + $0x60] sm:$0xff] %v3683
        %3748 = vst [vmem:[%s323 + $0x68] sm:$0xff] %v3684
        %3749 = vst [vmem:[%s323 + $0x70] sm:$0xff] %v3685
        %3750 = vst [vmem:[%s323 + $0x78] sm:$0xff] %v3686
        %3751 = vst [vmem:[%s323 + $0x80] sm:$0xff] %v3687
        %3752 = vst [vmem:[%s323 + $0x88] sm:$0xff] %v3688
        %3753 = vst [vmem:[%s323 + $0x90] sm:$0xff] %v3689
        %3754 = vst [vmem:[%s323 + $0x98] sm:$0xff] %v3690
        %3755 = vst [vmem:[%s323 + $0xa0] sm:$0xff] %v3691
        %3756 = vst [vmem:[%s323 + $0xa8] sm:$0xff] %v3692
        %3757 = vst [vmem:[%s323 + $0xb0] sm:$0xff] %v3693
        %3758 = vst [vmem:[%s323 + $0xb8] sm:$0xff] %v3694
        %3759 = vst [vmem:[%s323 + $0xc0] sm:$0xff] %v3695
        %3760 = vst [vmem:[%s323 + $0xc8] sm:$0xff] %v3696
        %3761 = vst [vmem:[%s323 + $0xd0] sm:$0xff] %v3697
        %3762 = vst [vmem:[%s323 + $0xd8] sm:$0xff] %v3698
        %3763 = vst [vmem:[%s323 + $0xe0] sm:$0xff] %v3699
        %3764 = vst [vmem:[%s323 + $0xe8] sm:$0xff] %v3700
        %3765 = vst [vmem:[%s323 + $0xf0] sm:$0xff] %v3701
        %3766 = vst [vmem:[%s323 + $0xf8] sm:$0xff] %v3702
        %3767 = vst [vmem:[%s323 + $0x100] sm:$0xff] %v3703
        %3768 = vst [vmem:[%s323 + $0x108] sm:$0xff] %v3704
        %3769 = vst [vmem:[%s323 + $0x110] sm:$0xff] %v3705
        %3770 = vst [vmem:[%s323 + $0x118] sm:$0xff] %v3706
        %3771 = vst [vmem:[%s323 + $0x120] sm:$0xff] %v3707
        %3772 = vst [vmem:[%s323 + $0x128] sm:$0xff] %v3708
        %3773 = vst [vmem:[%s323 + $0x130] sm:$0xff] %v3709
        %3774 = vst [vmem:[%s323 + $0x138] sm:$0xff] %v3710
        %3775 = vst [vmem:[%s323 + $0x140] sm:$0xff] %v3711
        %3776 = vst [vmem:[%s323 + $0x148] sm:$0xff] %v3712
        %3777 = vst [vmem:[%s323 + $0x150] sm:$0xff] %v3713
        %3778 = vst [vmem:[%s323 + $0x158] sm:$0xff] %v3714
        %3779 = vst [vmem:[%s323 + $0x160] sm:$0xff] %v3715
        %3780 = vst [vmem:[%s323 + $0x168] sm:$0xff] %v3716
        %3781 = vst [vmem:[%s323 + $0x170] sm:$0xff] %v3717
        %3782 = vst [vmem:[%s323 + $0x178] sm:$0xff] %v3718
        %3783 = vst [vmem:[%s323 + $0x180] sm:$0xff] %v3719
        %3784 = vst [vmem:[%s323 + $0x188] sm:$0xff] %v3720
        %3785 = vst [vmem:[%s323 + $0x190] sm:$0xff] %v3721
        %3786 = vst [vmem:[%s323 + $0x198] sm:$0xff] %v3722
        %3787 = vst [vmem:[%s323 + $0x1a0] sm:$0xff] %v3723
        %3788 = vst [vmem:[%s323 + $0x1a8] sm:$0xff] %v3724
        %3789 = vst [vmem:[%s323 + $0x1b0] sm:$0xff] %v3725
        %3790 = vst [vmem:[%s323 + $0x1b8] sm:$0xff] %v3726
        %3791 = vst [vmem:[%s323 + $0x1c0] sm:$0xff] %v3727
        %3792 = vst [vmem:[%s323 + $0x1c8] sm:$0xff] %v3728
        %3793 = vst [vmem:[%s323 + $0x1d0] sm:$0xff] %v3729
        %3794 = vst [vmem:[%s323 + $0x1d8] sm:$0xff] %v3730
        %3795 = vst [vmem:[%s323 + $0x1e0] sm:$0xff] %v3731
        %3796 = vst [vmem:[%s323 + $0x1e8] sm:$0xff] %v3732
        %3797 = vst [vmem:[%s323 + $0x1f0] sm:$0xff] %v3733
        %3798 = vst [vmem:[%s323 + $0x1f8] sm:$0xff] %v3734
        // Predicated region
        $region61: #{tpu_custom_call.1} parent=39 // pred_check
          %p3799 = pneg %p335
        $region62: #{tpu_custom_call.1} parent=39 // pred_check_branch
          %3801 = sbr.rel (%p3799) target = $region64
        $region63: #{tpu_custom_call.1} parent=39 // pred_region
          %v3802 = vld [vmem:[%s331] sm:$0xff]
          %v3803 = vld [vmem:[%s331 + $0x8] sm:$0xff]
          %v3804 = vld [vmem:[%s331 + $0x10] sm:$0xff]
          %v3805 = vld [vmem:[%s331 + $0x18] sm:$0xff]
          %v3806 = vld [vmem:[%s331 + $0x20] sm:$0xff]
          %v3807 = vld [vmem:[%s331 + $0x28] sm:$0xff]
          %v3808 = vld [vmem:[%s331 + $0x30] sm:$0xff]
          %v3809 = vld [vmem:[%s331 + $0x38] sm:$0xff]
          %v3810 = vld [vmem:[%s331 + $0x40] sm:$0xff]
          %v3811 = vld [vmem:[%s331 + $0x48] sm:$0xff]
          %v3812 = vld [vmem:[%s331 + $0x50] sm:$0xff]
          %v3813 = vld [vmem:[%s331 + $0x58] sm:$0xff]
          %v3814 = vld [vmem:[%s331 + $0x60] sm:$0xff]
          %v3815 = vld [vmem:[%s331 + $0x68] sm:$0xff]
          %v3816 = vld [vmem:[%s331 + $0x70] sm:$0xff]
          %v3817 = vld [vmem:[%s331 + $0x78] sm:$0xff]
          %v3818 = vld [vmem:[%s331 + $0x80] sm:$0xff]
          %v3819 = vld [vmem:[%s331 + $0x88] sm:$0xff]
          %v3820 = vld [vmem:[%s331 + $0x90] sm:$0xff]
          %v3821 = vld [vmem:[%s331 + $0x98] sm:$0xff]
          %v3822 = vld [vmem:[%s331 + $0xa0] sm:$0xff]
          %v3823 = vld [vmem:[%s331 + $0xa8] sm:$0xff]
          %v3824 = vld [vmem:[%s331 + $0xb0] sm:$0xff]
          %v3825 = vld [vmem:[%s331 + $0xb8] sm:$0xff]
          %v3826 = vld [vmem:[%s331 + $0xc0] sm:$0xff]
          %v3827 = vld [vmem:[%s331 + $0xc8] sm:$0xff]
          %v3828 = vld [vmem:[%s331 + $0xd0] sm:$0xff]
          %v3829 = vld [vmem:[%s331 + $0xd8] sm:$0xff]
          %v3830 = vld [vmem:[%s331 + $0xe0] sm:$0xff]
          %v3831 = vld [vmem:[%s331 + $0xe8] sm:$0xff]
          %v3832 = vld [vmem:[%s331 + $0xf0] sm:$0xff]
          %v3833 = vld [vmem:[%s331 + $0xf8] sm:$0xff]
          %v3834 = vld [vmem:[%s331 + $0x100] sm:$0xff]
          %v3835 = vld [vmem:[%s331 + $0x108] sm:$0xff]
          %v3836 = vld [vmem:[%s331 + $0x110] sm:$0xff]
          %v3837 = vld [vmem:[%s331 + $0x118] sm:$0xff]
          %v3838 = vld [vmem:[%s331 + $0x120] sm:$0xff]
          %v3839 = vld [vmem:[%s331 + $0x128] sm:$0xff]
          %v3840 = vld [vmem:[%s331 + $0x130] sm:$0xff]
          %v3841 = vld [vmem:[%s331 + $0x138] sm:$0xff]
          %v3842 = vld [vmem:[%s331 + $0x140] sm:$0xff]
          %v3843 = vld [vmem:[%s331 + $0x148] sm:$0xff]
          %v3844 = vld [vmem:[%s331 + $0x150] sm:$0xff]
          %v3845 = vld [vmem:[%s331 + $0x158] sm:$0xff]
          %v3846 = vld [vmem:[%s331 + $0x160] sm:$0xff]
          %v3847 = vld [vmem:[%s331 + $0x168] sm:$0xff]
          %v3848 = vld [vmem:[%s331 + $0x170] sm:$0xff]
          %v3849 = vld [vmem:[%s331 + $0x178] sm:$0xff]
          %v3850 = vld [vmem:[%s331 + $0x180] sm:$0xff]
          %v3851 = vld [vmem:[%s331 + $0x188] sm:$0xff]
          %v3852 = vld [vmem:[%s331 + $0x190] sm:$0xff]
          %v3853 = vld [vmem:[%s331 + $0x198] sm:$0xff]
          %v3854 = vld [vmem:[%s331 + $0x1a0] sm:$0xff]
          %v3855 = vld [vmem:[%s331 + $0x1a8] sm:$0xff]
          %v3856 = vld [vmem:[%s331 + $0x1b0] sm:$0xff]
          %v3857 = vld [vmem:[%s331 + $0x1b8] sm:$0xff]
          %v3858 = vld [vmem:[%s331 + $0x1c0] sm:$0xff]
          %v3859 = vld [vmem:[%s331 + $0x1c8] sm:$0xff]
          %v3860 = vld [vmem:[%s331 + $0x1d0] sm:$0xff]
          %v3861 = vld [vmem:[%s331 + $0x1d8] sm:$0xff]
          %v3862 = vld [vmem:[%s331 + $0x1e0] sm:$0xff]
          %v3863 = vld [vmem:[%s331 + $0x1e8] sm:$0xff]
          %v3864 = vld [vmem:[%s331 + $0x1f0] sm:$0xff]
          %v3865 = vld [vmem:[%s331 + $0x1f8] sm:$0xff]
          %v3866 = vld [vmem:[%s323] sm:$0xff]
          %v3867 = vld [vmem:[%s323 + $0x8] sm:$0xff]
          %v3868 = vld [vmem:[%s323 + $0x10] sm:$0xff]
          %v3869 = vld [vmem:[%s323 + $0x18] sm:$0xff]
          %v3870 = vld [vmem:[%s323 + $0x20] sm:$0xff]
          %v3871 = vld [vmem:[%s323 + $0x28] sm:$0xff]
          %v3872 = vld [vmem:[%s323 + $0x30] sm:$0xff]
          %v3873 = vld [vmem:[%s323 + $0x38] sm:$0xff]
          %v3874 = vld [vmem:[%s323 + $0x40] sm:$0xff]
          %v3875 = vld [vmem:[%s323 + $0x48] sm:$0xff]
          %v3876 = vld [vmem:[%s323 + $0x50] sm:$0xff]
          %v3877 = vld [vmem:[%s323 + $0x58] sm:$0xff]
          %v3878 = vld [vmem:[%s323 + $0x60] sm:$0xff]
          %v3879 = vld [vmem:[%s323 + $0x68] sm:$0xff]
          %v3880 = vld [vmem:[%s323 + $0x70] sm:$0xff]
          %v3881 = vld [vmem:[%s323 + $0x78] sm:$0xff]
          %v3882 = vld [vmem:[%s323 + $0x80] sm:$0xff]
          %v3883 = vld [vmem:[%s323 + $0x88] sm:$0xff]
          %v3884 = vld [vmem:[%s323 + $0x90] sm:$0xff]
          %v3885 = vld [vmem:[%s323 + $0x98] sm:$0xff]
          %v3886 = vld [vmem:[%s323 + $0xa0] sm:$0xff]
          %v3887 = vld [vmem:[%s323 + $0xa8] sm:$0xff]
          %v3888 = vld [vmem:[%s323 + $0xb0] sm:$0xff]
          %v3889 = vld [vmem:[%s323 + $0xb8] sm:$0xff]
          %v3890 = vld [vmem:[%s323 + $0xc0] sm:$0xff]
          %v3891 = vld [vmem:[%s323 + $0xc8] sm:$0xff]
          %v3892 = vld [vmem:[%s323 + $0xd0] sm:$0xff]
          %v3893 = vld [vmem:[%s323 + $0xd8] sm:$0xff]
          %v3894 = vld [vmem:[%s323 + $0xe0] sm:$0xff]
          %v3895 = vld [vmem:[%s323 + $0xe8] sm:$0xff]
          %v3896 = vld [vmem:[%s323 + $0xf0] sm:$0xff]
          %v3897 = vld [vmem:[%s323 + $0xf8] sm:$0xff]
          %v3898 = vld [vmem:[%s323 + $0x100] sm:$0xff]
          %v3899 = vld [vmem:[%s323 + $0x108] sm:$0xff]
          %v3900 = vld [vmem:[%s323 + $0x110] sm:$0xff]
          %v3901 = vld [vmem:[%s323 + $0x118] sm:$0xff]
          %v3902 = vld [vmem:[%s323 + $0x120] sm:$0xff]
          %v3903 = vld [vmem:[%s323 + $0x128] sm:$0xff]
          %v3904 = vld [vmem:[%s323 + $0x130] sm:$0xff]
          %v3905 = vld [vmem:[%s323 + $0x138] sm:$0xff]
          %v3906 = vld [vmem:[%s323 + $0x140] sm:$0xff]
          %v3907 = vld [vmem:[%s323 + $0x148] sm:$0xff]
          %v3908 = vld [vmem:[%s323 + $0x150] sm:$0xff]
          %v3909 = vld [vmem:[%s323 + $0x158] sm:$0xff]
          %v3910 = vld [vmem:[%s323 + $0x160] sm:$0xff]
          %v3911 = vld [vmem:[%s323 + $0x168] sm:$0xff]
          %v3912 = vld [vmem:[%s323 + $0x170] sm:$0xff]
          %v3913 = vld [vmem:[%s323 + $0x178] sm:$0xff]
          %v3914 = vld [vmem:[%s323 + $0x180] sm:$0xff]
          %v3915 = vld [vmem:[%s323 + $0x188] sm:$0xff]
          %v3916 = vld [vmem:[%s323 + $0x190] sm:$0xff]
          %v3917 = vld [vmem:[%s323 + $0x198] sm:$0xff]
          %v3918 = vld [vmem:[%s323 + $0x1a0] sm:$0xff]
          %v3919 = vld [vmem:[%s323 + $0x1a8] sm:$0xff]
          %v3920 = vld [vmem:[%s323 + $0x1b0] sm:$0xff]
          %v3921 = vld [vmem:[%s323 + $0x1b8] sm:$0xff]
          %v3922 = vld [vmem:[%s323 + $0x1c0] sm:$0xff]
          %v3923 = vld [vmem:[%s323 + $0x1c8] sm:$0xff]
          %v3924 = vld [vmem:[%s323 + $0x1d0] sm:$0xff]
          %v3925 = vld [vmem:[%s323 + $0x1d8] sm:$0xff]
          %v3926 = vld [vmem:[%s323 + $0x1e0] sm:$0xff]
          %v3927 = vld [vmem:[%s323 + $0x1e8] sm:$0xff]
          %v3928 = vld [vmem:[%s323 + $0x1f0] sm:$0xff]
          %v3929 = vld [vmem:[%s323 + $0x1f8] sm:$0xff]
          %3931 = vset.pattern.permute.xlu0 0
          %3932 = vperm.xlu0 %3931, %v3802
          %v3933 = vpop.permute.xlu0 %3932
          %3936 = vset.pattern.permute.xlu0 0
          %3937 = vperm.xlu0 %3936, %v3803
          %v3938 = vpop.permute.xlu0 %3937
          %3941 = vset.pattern.permute.xlu0 0
          %3942 = vperm.xlu0 %3941, %v3804
          %v3943 = vpop.permute.xlu0 %3942
          %3946 = vset.pattern.permute.xlu0 0
          %3947 = vperm.xlu0 %3946, %v3805
          %v3948 = vpop.permute.xlu0 %3947
          %3951 = vset.pattern.permute.xlu0 0
          %3952 = vperm.xlu0 %3951, %v3806
          %v3953 = vpop.permute.xlu0 %3952
          %3956 = vset.pattern.permute.xlu0 0
          %3957 = vperm.xlu0 %3956, %v3807
          %v3958 = vpop.permute.xlu0 %3957
          %3961 = vset.pattern.permute.xlu0 0
          %3962 = vperm.xlu0 %3961, %v3808
          %v3963 = vpop.permute.xlu0 %3962
          %3966 = vset.pattern.permute.xlu0 0
          %3967 = vperm.xlu0 %3966, %v3809
          %v3968 = vpop.permute.xlu0 %3967
          %3971 = vset.pattern.permute.xlu0 0
          %3972 = vperm.xlu0 %3971, %v3810
          %v3973 = vpop.permute.xlu0 %3972
          %3976 = vset.pattern.permute.xlu0 0
          %3977 = vperm.xlu0 %3976, %v3811
          %v3978 = vpop.permute.xlu0 %3977
          %3981 = vset.pattern.permute.xlu0 0
          %3982 = vperm.xlu0 %3981, %v3812
          %v3983 = vpop.permute.xlu0 %3982
          %3986 = vset.pattern.permute.xlu0 0
          %3987 = vperm.xlu0 %3986, %v3813
          %v3988 = vpop.permute.xlu0 %3987
          %3991 = vset.pattern.permute.xlu0 0
          %3992 = vperm.xlu0 %3991, %v3814
          %v3993 = vpop.permute.xlu0 %3992
          %3996 = vset.pattern.permute.xlu0 0
          %3997 = vperm.xlu0 %3996, %v3815
          %v3998 = vpop.permute.xlu0 %3997
          %4001 = vset.pattern.permute.xlu0 0
          %4002 = vperm.xlu0 %4001, %v3816
          %v4003 = vpop.permute.xlu0 %4002
          %4006 = vset.pattern.permute.xlu0 0
          %4007 = vperm.xlu0 %4006, %v3817
          %v4008 = vpop.permute.xlu0 %4007
          %4011 = vset.pattern.permute.xlu0 0
          %4012 = vperm.xlu0 %4011, %v3818
          %v4013 = vpop.permute.xlu0 %4012
          %4016 = vset.pattern.permute.xlu0 0
          %4017 = vperm.xlu0 %4016, %v3819
          %v4018 = vpop.permute.xlu0 %4017
          %4021 = vset.pattern.permute.xlu0 0
          %4022 = vperm.xlu0 %4021, %v3820
          %v4023 = vpop.permute.xlu0 %4022
          %4026 = vset.pattern.permute.xlu0 0
          %4027 = vperm.xlu0 %4026, %v3821
          %v4028 = vpop.permute.xlu0 %4027
          %4031 = vset.pattern.permute.xlu0 0
          %4032 = vperm.xlu0 %4031, %v3822
          %v4033 = vpop.permute.xlu0 %4032
          %4036 = vset.pattern.permute.xlu0 0
          %4037 = vperm.xlu0 %4036, %v3823
          %v4038 = vpop.permute.xlu0 %4037
          %4041 = vset.pattern.permute.xlu0 0
          %4042 = vperm.xlu0 %4041, %v3824
          %v4043 = vpop.permute.xlu0 %4042
          %4046 = vset.pattern.permute.xlu0 0
          %4047 = vperm.xlu0 %4046, %v3825
          %v4048 = vpop.permute.xlu0 %4047
          %4051 = vset.pattern.permute.xlu0 0
          %4052 = vperm.xlu0 %4051, %v3826
          %v4053 = vpop.permute.xlu0 %4052
          %4056 = vset.pattern.permute.xlu0 0
          %4057 = vperm.xlu0 %4056, %v3827
          %v4058 = vpop.permute.xlu0 %4057
          %4061 = vset.pattern.permute.xlu0 0
          %4062 = vperm.xlu0 %4061, %v3828
          %v4063 = vpop.permute.xlu0 %4062
          %4066 = vset.pattern.permute.xlu0 0
          %4067 = vperm.xlu0 %4066, %v3829
          %v4068 = vpop.permute.xlu0 %4067
          %4071 = vset.pattern.permute.xlu0 0
          %4072 = vperm.xlu0 %4071, %v3830
          %v4073 = vpop.permute.xlu0 %4072
          %4076 = vset.pattern.permute.xlu0 0
          %4077 = vperm.xlu0 %4076, %v3831
          %v4078 = vpop.permute.xlu0 %4077
          %4081 = vset.pattern.permute.xlu0 0
          %4082 = vperm.xlu0 %4081, %v3832
          %v4083 = vpop.permute.xlu0 %4082
          %4086 = vset.pattern.permute.xlu0 0
          %4087 = vperm.xlu0 %4086, %v3833
          %v4088 = vpop.permute.xlu0 %4087
          %4091 = vset.pattern.permute.xlu0 0
          %4092 = vperm.xlu0 %4091, %v3834
          %v4093 = vpop.permute.xlu0 %4092
          %4096 = vset.pattern.permute.xlu0 0
          %4097 = vperm.xlu0 %4096, %v3835
          %v4098 = vpop.permute.xlu0 %4097
          %4101 = vset.pattern.permute.xlu0 0
          %4102 = vperm.xlu0 %4101, %v3836
          %v4103 = vpop.permute.xlu0 %4102
          %4106 = vset.pattern.permute.xlu0 0
          %4107 = vperm.xlu0 %4106, %v3837
          %v4108 = vpop.permute.xlu0 %4107
          %4111 = vset.pattern.permute.xlu0 0
          %4112 = vperm.xlu0 %4111, %v3838
          %v4113 = vpop.permute.xlu0 %4112
          %4116 = vset.pattern.permute.xlu0 0
          %4117 = vperm.xlu0 %4116, %v3839
          %v4118 = vpop.permute.xlu0 %4117
          %4121 = vset.pattern.permute.xlu0 0
          %4122 = vperm.xlu0 %4121, %v3840
          %v4123 = vpop.permute.xlu0 %4122
          %4126 = vset.pattern.permute.xlu0 0
          %4127 = vperm.xlu0 %4126, %v3841
          %v4128 = vpop.permute.xlu0 %4127
          %4131 = vset.pattern.permute.xlu0 0
          %4132 = vperm.xlu0 %4131, %v3842
          %v4133 = vpop.permute.xlu0 %4132
          %4136 = vset.pattern.permute.xlu0 0
          %4137 = vperm.xlu0 %4136, %v3843
          %v4138 = vpop.permute.xlu0 %4137
          %4141 = vset.pattern.permute.xlu0 0
          %4142 = vperm.xlu0 %4141, %v3844
          %v4143 = vpop.permute.xlu0 %4142
          %4146 = vset.pattern.permute.xlu0 0
          %4147 = vperm.xlu0 %4146, %v3845
          %v4148 = vpop.permute.xlu0 %4147
          %4151 = vset.pattern.permute.xlu0 0
          %4152 = vperm.xlu0 %4151, %v3846
          %v4153 = vpop.permute.xlu0 %4152
          %4156 = vset.pattern.permute.xlu0 0
          %4157 = vperm.xlu0 %4156, %v3847
          %v4158 = vpop.permute.xlu0 %4157
          %4161 = vset.pattern.permute.xlu0 0
          %4162 = vperm.xlu0 %4161, %v3848
          %v4163 = vpop.permute.xlu0 %4162
          %4166 = vset.pattern.permute.xlu0 0
          %4167 = vperm.xlu0 %4166, %v3849
          %v4168 = vpop.permute.xlu0 %4167
          %4171 = vset.pattern.permute.xlu0 0
          %4172 = vperm.xlu0 %4171, %v3850
          %v4173 = vpop.permute.xlu0 %4172
          %4176 = vset.pattern.permute.xlu0 0
          %4177 = vperm.xlu0 %4176, %v3851
          %v4178 = vpop.permute.xlu0 %4177
          %4181 = vset.pattern.permute.xlu0 0
          %4182 = vperm.xlu0 %4181, %v3852
          %v4183 = vpop.permute.xlu0 %4182
          %4186 = vset.pattern.permute.xlu0 0
          %4187 = vperm.xlu0 %4186, %v3853
          %v4188 = vpop.permute.xlu0 %4187
          %4191 = vset.pattern.permute.xlu0 0
          %4192 = vperm.xlu0 %4191, %v3854
          %v4193 = vpop.permute.xlu0 %4192
          %4196 = vset.pattern.permute.xlu0 0
          %4197 = vperm.xlu0 %4196, %v3855
          %v4198 = vpop.permute.xlu0 %4197
          %4201 = vset.pattern.permute.xlu0 0
          %4202 = vperm.xlu0 %4201, %v3856
          %v4203 = vpop.permute.xlu0 %4202
          %4206 = vset.pattern.permute.xlu0 0
          %4207 = vperm.xlu0 %4206, %v3857
          %v4208 = vpop.permute.xlu0 %4207
          %4211 = vset.pattern.permute.xlu0 0
          %4212 = vperm.xlu0 %4211, %v3858
          %v4213 = vpop.permute.xlu0 %4212
          %4216 = vset.pattern.permute.xlu0 0
          %4217 = vperm.xlu0 %4216, %v3859
          %v4218 = vpop.permute.xlu0 %4217
          %4221 = vset.pattern.permute.xlu0 0
          %4222 = vperm.xlu0 %4221, %v3860
          %v4223 = vpop.permute.xlu0 %4222
          %4226 = vset.pattern.permute.xlu0 0
          %4227 = vperm.xlu0 %4226, %v3861
          %v4228 = vpop.permute.xlu0 %4227
          %4231 = vset.pattern.permute.xlu0 0
          %4232 = vperm.xlu0 %4231, %v3862
          %v4233 = vpop.permute.xlu0 %4232
          %4236 = vset.pattern.permute.xlu0 0
          %4237 = vperm.xlu0 %4236, %v3863
          %v4238 = vpop.permute.xlu0 %4237
          %4241 = vset.pattern.permute.xlu0 0
          %4242 = vperm.xlu0 %4241, %v3864
          %v4243 = vpop.permute.xlu0 %4242
          %4246 = vset.pattern.permute.xlu0 0
          %4247 = vperm.xlu0 %4246, %v3865
          %v4248 = vpop.permute.xlu0 %4247
          %v4250 = vmul.f32 %v3933, %v3866
          %v4251 = vmul.f32 %v3938, %v3867
          %v4252 = vmul.f32 %v3943, %v3868
          %v4253 = vmul.f32 %v3948, %v3869
          %v4254 = vmul.f32 %v3953, %v3870
          %v4255 = vmul.f32 %v3958, %v3871
          %v4256 = vmul.f32 %v3963, %v3872
          %v4257 = vmul.f32 %v3968, %v3873
          %v4258 = vmul.f32 %v3973, %v3874
          %v4259 = vmul.f32 %v3978, %v3875
          %v4260 = vmul.f32 %v3983, %v3876
          %v4261 = vmul.f32 %v3988, %v3877
          %v4262 = vmul.f32 %v3993, %v3878
          %v4263 = vmul.f32 %v3998, %v3879
          %v4264 = vmul.f32 %v4003, %v3880
          %v4265 = vmul.f32 %v4008, %v3881
          %v4266 = vmul.f32 %v4013, %v3882
          %v4267 = vmul.f32 %v4018, %v3883
          %v4268 = vmul.f32 %v4023, %v3884
          %v4269 = vmul.f32 %v4028, %v3885
          %v4270 = vmul.f32 %v4033, %v3886
          %v4271 = vmul.f32 %v4038, %v3887
          %v4272 = vmul.f32 %v4043, %v3888
          %v4273 = vmul.f32 %v4048, %v3889
          %v4274 = vmul.f32 %v4053, %v3890
          %v4275 = vmul.f32 %v4058, %v3891
          %v4276 = vmul.f32 %v4063, %v3892
          %v4277 = vmul.f32 %v4068, %v3893
          %v4278 = vmul.f32 %v4073, %v3894
          %v4279 = vmul.f32 %v4078, %v3895
          %v4280 = vmul.f32 %v4083, %v3896
          %v4281 = vmul.f32 %v4088, %v3897
          %v4282 = vmul.f32 %v4093, %v3898
          %v4283 = vmul.f32 %v4098, %v3899
          %v4284 = vmul.f32 %v4103, %v3900
          %v4285 = vmul.f32 %v4108, %v3901
          %v4286 = vmul.f32 %v4113, %v3902
          %v4287 = vmul.f32 %v4118, %v3903
          %v4288 = vmul.f32 %v4123, %v3904
          %v4289 = vmul.f32 %v4128, %v3905
          %v4290 = vmul.f32 %v4133, %v3906
          %v4291 = vmul.f32 %v4138, %v3907
          %v4292 = vmul.f32 %v4143, %v3908
          %v4293 = vmul.f32 %v4148, %v3909
          %v4294 = vmul.f32 %v4153, %v3910
          %v4295 = vmul.f32 %v4158, %v3911
          %v4296 = vmul.f32 %v4163, %v3912
          %v4297 = vmul.f32 %v4168, %v3913
          %v4298 = vmul.f32 %v4173, %v3914
          %v4299 = vmul.f32 %v4178, %v3915
          %v4300 = vmul.f32 %v4183, %v3916
          %v4301 = vmul.f32 %v4188, %v3917
          %v4302 = vmul.f32 %v4193, %v3918
          %v4303 = vmul.f32 %v4198, %v3919
          %v4304 = vmul.f32 %v4203, %v3920
          %v4305 = vmul.f32 %v4208, %v3921
          %v4306 = vmul.f32 %v4213, %v3922
          %v4307 = vmul.f32 %v4218, %v3923
          %v4308 = vmul.f32 %v4223, %v3924
          %v4309 = vmul.f32 %v4228, %v3925
          %v4310 = vmul.f32 %v4233, %v3926
          %v4311 = vmul.f32 %v4238, %v3927
          %v4312 = vmul.f32 %v4243, %v3928
          %v4313 = vmul.f32 %v4248, %v3929
          %v4314 = vld [vmem:[#allocation7] sm:$0x1]
          %v4316 = vlaneseq
          %v4317 = vshrl.u32 %v4316, 7
          %v4318 = vsub.s32 0, %v4317
          %v4319 = vrot.slane %v4314, %v4318
          %v4321 = vadd.f32 %v4250, %v4319
          %v4322 = vadd.f32 %v4251, %v4319
          %v4323 = vadd.f32 %v4252, %v4319
          %v4324 = vadd.f32 %v4253, %v4319
          %v4325 = vadd.f32 %v4254, %v4319
          %v4326 = vadd.f32 %v4255, %v4319
          %v4327 = vadd.f32 %v4256, %v4319
          %v4328 = vadd.f32 %v4257, %v4319
          %v4329 = vadd.f32 %v4258, %v4319
          %v4330 = vadd.f32 %v4259, %v4319
          %v4331 = vadd.f32 %v4260, %v4319
          %v4332 = vadd.f32 %v4261, %v4319
          %v4333 = vadd.f32 %v4262, %v4319
          %v4334 = vadd.f32 %v4263, %v4319
          %v4335 = vadd.f32 %v4264, %v4319
          %v4336 = vadd.f32 %v4265, %v4319
          %v4337 = vadd.f32 %v4266, %v4319
          %v4338 = vadd.f32 %v4267, %v4319
          %v4339 = vadd.f32 %v4268, %v4319
          %v4340 = vadd.f32 %v4269, %v4319
          %v4341 = vadd.f32 %v4270, %v4319
          %v4342 = vadd.f32 %v4271, %v4319
          %v4343 = vadd.f32 %v4272, %v4319
          %v4344 = vadd.f32 %v4273, %v4319
          %v4345 = vadd.f32 %v4274, %v4319
          %v4346 = vadd.f32 %v4275, %v4319
          %v4347 = vadd.f32 %v4276, %v4319
          %v4348 = vadd.f32 %v4277, %v4319
          %v4349 = vadd.f32 %v4278, %v4319
          %v4350 = vadd.f32 %v4279, %v4319
          %v4351 = vadd.f32 %v4280, %v4319
          %v4352 = vadd.f32 %v4281, %v4319
          %v4353 = vadd.f32 %v4282, %v4319
          %v4354 = vadd.f32 %v4283, %v4319
          %v4355 = vadd.f32 %v4284, %v4319
          %v4356 = vadd.f32 %v4285, %v4319
          %v4357 = vadd.f32 %v4286, %v4319
          %v4358 = vadd.f32 %v4287, %v4319
          %v4359 = vadd.f32 %v4288, %v4319
          %v4360 = vadd.f32 %v4289, %v4319
          %v4361 = vadd.f32 %v4290, %v4319
          %v4362 = vadd.f32 %v4291, %v4319
          %v4363 = vadd.f32 %v4292, %v4319
          %v4364 = vadd.f32 %v4293, %v4319
          %v4365 = vadd.f32 %v4294, %v4319
          %v4366 = vadd.f32 %v4295, %v4319
          %v4367 = vadd.f32 %v4296, %v4319
          %v4368 = vadd.f32 %v4297, %v4319
          %v4369 = vadd.f32 %v4298, %v4319
          %v4370 = vadd.f32 %v4299, %v4319
          %v4371 = vadd.f32 %v4300, %v4319
          %v4372 = vadd.f32 %v4301, %v4319
          %v4373 = vadd.f32 %v4302, %v4319
          %v4374 = vadd.f32 %v4303, %v4319
          %v4375 = vadd.f32 %v4304, %v4319
          %v4376 = vadd.f32 %v4305, %v4319
          %v4377 = vadd.f32 %v4306, %v4319
          %v4378 = vadd.f32 %v4307, %v4319
          %v4379 = vadd.f32 %v4308, %v4319
          %v4380 = vadd.f32 %v4309, %v4319
          %v4381 = vadd.f32 %v4310, %v4319
          %v4382 = vadd.f32 %v4311, %v4319
          %v4383 = vadd.f32 %v4312, %v4319
          %v4384 = vadd.f32 %v4313, %v4319
          %v4385 = vmax.f32 %v4321, 0.0
          %v4386 = vmax.f32 %v4322, 0.0
          %v4387 = vmax.f32 %v4323, 0.0
          %v4388 = vmax.f32 %v4324, 0.0
          %v4389 = vmax.f32 %v4325, 0.0
          %v4390 = vmax.f32 %v4326, 0.0
          %v4391 = vmax.f32 %v4327, 0.0
          %v4392 = vmax.f32 %v4328, 0.0
          %v4393 = vmax.f32 %v4329, 0.0
          %v4394 = vmax.f32 %v4330, 0.0
          %v4395 = vmax.f32 %v4331, 0.0
          %v4396 = vmax.f32 %v4332, 0.0
          %v4397 = vmax.f32 %v4333, 0.0
          %v4398 = vmax.f32 %v4334, 0.0
          %v4399 = vmax.f32 %v4335, 0.0
          %v4400 = vmax.f32 %v4336, 0.0
          %v4401 = vmax.f32 %v4337, 0.0
          %v4402 = vmax.f32 %v4338, 0.0
          %v4403 = vmax.f32 %v4339, 0.0
          %v4404 = vmax.f32 %v4340, 0.0
          %v4405 = vmax.f32 %v4341, 0.0
          %v4406 = vmax.f32 %v4342, 0.0
          %v4407 = vmax.f32 %v4343, 0.0
          %v4408 = vmax.f32 %v4344, 0.0
          %v4409 = vmax.f32 %v4345, 0.0
          %v4410 = vmax.f32 %v4346, 0.0
          %v4411 = vmax.f32 %v4347, 0.0
          %v4412 = vmax.f32 %v4348, 0.0
          %v4413 = vmax.f32 %v4349, 0.0
          %v4414 = vmax.f32 %v4350, 0.0
          %v4415 = vmax.f32 %v4351, 0.0
          %v4416 = vmax.f32 %v4352, 0.0
          %v4417 = vmax.f32 %v4353, 0.0
          %v4418 = vmax.f32 %v4354, 0.0
          %v4419 = vmax.f32 %v4355, 0.0
          %v4420 = vmax.f32 %v4356, 0.0
          %v4421 = vmax.f32 %v4357, 0.0
          %v4422 = vmax.f32 %v4358, 0.0
          %v4423 = vmax.f32 %v4359, 0.0
          %v4424 = vmax.f32 %v4360, 0.0
          %v4425 = vmax.f32 %v4361, 0.0
          %v4426 = vmax.f32 %v4362, 0.0
          %v4427 = vmax.f32 %v4363, 0.0
          %v4428 = vmax.f32 %v4364, 0.0
          %v4429 = vmax.f32 %v4365, 0.0
          %v4430 = vmax.f32 %v4366, 0.0
          %v4431 = vmax.f32 %v4367, 0.0
          %v4432 = vmax.f32 %v4368, 0.0
          %v4433 = vmax.f32 %v4369, 0.0
          %v4434 = vmax.f32 %v4370, 0.0
          %v4435 = vmax.f32 %v4371, 0.0
          %v4436 = vmax.f32 %v4372, 0.0
          %v4437 = vmax.f32 %v4373, 0.0
          %v4438 = vmax.f32 %v4374, 0.0
          %v4439 = vmax.f32 %v4375, 0.0
          %v4440 = vmax.f32 %v4376, 0.0
          %v4441 = vmax.f32 %v4377, 0.0
          %v4442 = vmax.f32 %v4378, 0.0
          %v4443 = vmax.f32 %v4379, 0.0
          %v4444 = vmax.f32 %v4380, 0.0
          %v4445 = vmax.f32 %v4381, 0.0
          %v4446 = vmax.f32 %v4382, 0.0
          %v4447 = vmax.f32 %v4383, 0.0
          %v4448 = vmax.f32 %v4384, 0.0
          %v4449 = vld [vmem:[#allocation8] sm:$0x1]
          %v4451 = vlaneseq
          %v4452 = vshrl.u32 %v4451, 7
          %v4453 = vsub.s32 0, %v4452
          %v4454 = vrot.slane %v4449, %v4453
          %v4456 = vmul.f32 %v4385, %v4454
          %v4457 = vmul.f32 %v4386, %v4454
          %v4458 = vmul.f32 %v4387, %v4454
          %v4459 = vmul.f32 %v4388, %v4454
          %v4460 = vmul.f32 %v4389, %v4454
          %v4461 = vmul.f32 %v4390, %v4454
          %v4462 = vmul.f32 %v4391, %v4454
          %v4463 = vmul.f32 %v4392, %v4454
          %v4464 = vmul.f32 %v4393, %v4454
          %v4465 = vmul.f32 %v4394, %v4454
          %v4466 = vmul.f32 %v4395, %v4454
          %v4467 = vmul.f32 %v4396, %v4454
          %v4468 = vmul.f32 %v4397, %v4454
          %v4469 = vmul.f32 %v4398, %v4454
          %v4470 = vmul.f32 %v4399, %v4454
          %v4471 = vmul.f32 %v4400, %v4454
          %v4472 = vmul.f32 %v4401, %v4454
          %v4473 = vmul.f32 %v4402, %v4454
          %v4474 = vmul.f32 %v4403, %v4454
          %v4475 = vmul.f32 %v4404, %v4454
          %v4476 = vmul.f32 %v4405, %v4454
          %v4477 = vmul.f32 %v4406, %v4454
          %v4478 = vmul.f32 %v4407, %v4454
          %v4479 = vmul.f32 %v4408, %v4454
          %v4480 = vmul.f32 %v4409, %v4454
          %v4481 = vmul.f32 %v4410, %v4454
          %v4482 = vmul.f32 %v4411, %v4454
          %v4483 = vmul.f32 %v4412, %v4454
          %v4484 = vmul.f32 %v4413, %v4454
          %v4485 = vmul.f32 %v4414, %v4454
          %v4486 = vmul.f32 %v4415, %v4454
          %v4487 = vmul.f32 %v4416, %v4454
          %v4488 = vmul.f32 %v4417, %v4454
          %v4489 = vmul.f32 %v4418, %v4454
          %v4490 = vmul.f32 %v4419, %v4454
          %v4491 = vmul.f32 %v4420, %v4454
          %v4492 = vmul.f32 %v4421, %v4454
          %v4493 = vmul.f32 %v4422, %v4454
          %v4494 = vmul.f32 %v4423, %v4454
          %v4495 = vmul.f32 %v4424, %v4454
          %v4496 = vmul.f32 %v4425, %v4454
          %v4497 = vmul.f32 %v4426, %v4454
          %v4498 = vmul.f32 %v4427, %v4454
          %v4499 = vmul.f32 %v4428, %v4454
          %v4500 = vmul.f32 %v4429, %v4454
          %v4501 = vmul.f32 %v4430, %v4454
          %v4502 = vmul.f32 %v4431, %v4454
          %v4503 = vmul.f32 %v4432, %v4454
          %v4504 = vmul.f32 %v4433, %v4454
          %v4505 = vmul.f32 %v4434, %v4454
          %v4506 = vmul.f32 %v4435, %v4454
          %v4507 = vmul.f32 %v4436, %v4454
          %v4508 = vmul.f32 %v4437, %v4454
          %v4509 = vmul.f32 %v4438, %v4454
          %v4510 = vmul.f32 %v4439, %v4454
          %v4511 = vmul.f32 %v4440, %v4454
          %v4512 = vmul.f32 %v4441, %v4454
          %v4513 = vmul.f32 %v4442, %v4454
          %v4514 = vmul.f32 %v4443, %v4454
          %v4515 = vmul.f32 %v4444, %v4454
          %v4516 = vmul.f32 %v4445, %v4454
          %v4517 = vmul.f32 %v4446, %v4454
          %v4518 = vmul.f32 %v4447, %v4454
          %v4519 = vmul.f32 %v4448, %v4454
          %4520 = vadd.xlane.f32.xlu0 %v4456
          %v4521 = vpop.xlane.xlu0 %4520
          %4522 = vadd.xlane.f32.xlu0 %v4457
          %v4523 = vpop.xlane.xlu0 %4522
          %4524 = vadd.xlane.f32.xlu0 %v4458
          %v4525 = vpop.xlane.xlu0 %4524
          %4526 = vadd.xlane.f32.xlu0 %v4459
          %v4527 = vpop.xlane.xlu0 %4526
          %4528 = vadd.xlane.f32.xlu0 %v4460
          %v4529 = vpop.xlane.xlu0 %4528
          %4530 = vadd.xlane.f32.xlu0 %v4461
          %v4531 = vpop.xlane.xlu0 %4530
          %4532 = vadd.xlane.f32.xlu0 %v4462
          %v4533 = vpop.xlane.xlu0 %4532
          %4534 = vadd.xlane.f32.xlu0 %v4463
          %v4535 = vpop.xlane.xlu0 %4534
          %4536 = vadd.xlane.f32.xlu0 %v4464
          %v4537 = vpop.xlane.xlu0 %4536
          %4538 = vadd.xlane.f32.xlu0 %v4465
          %v4539 = vpop.xlane.xlu0 %4538
          %4540 = vadd.xlane.f32.xlu0 %v4466
          %v4541 = vpop.xlane.xlu0 %4540
          %4542 = vadd.xlane.f32.xlu0 %v4467
          %v4543 = vpop.xlane.xlu0 %4542
          %4544 = vadd.xlane.f32.xlu0 %v4468
          %v4545 = vpop.xlane.xlu0 %4544
          %4546 = vadd.xlane.f32.xlu0 %v4469
          %v4547 = vpop.xlane.xlu0 %4546
          %4548 = vadd.xlane.f32.xlu0 %v4470
          %v4549 = vpop.xlane.xlu0 %4548
          %4550 = vadd.xlane.f32.xlu0 %v4471
          %v4551 = vpop.xlane.xlu0 %4550
          %4552 = vadd.xlane.f32.xlu0 %v4472
          %v4553 = vpop.xlane.xlu0 %4552
          %4554 = vadd.xlane.f32.xlu0 %v4473
          %v4555 = vpop.xlane.xlu0 %4554
          %4556 = vadd.xlane.f32.xlu0 %v4474
          %v4557 = vpop.xlane.xlu0 %4556
          %4558 = vadd.xlane.f32.xlu0 %v4475
          %v4559 = vpop.xlane.xlu0 %4558
          %4560 = vadd.xlane.f32.xlu0 %v4476
          %v4561 = vpop.xlane.xlu0 %4560
          %4562 = vadd.xlane.f32.xlu0 %v4477
          %v4563 = vpop.xlane.xlu0 %4562
          %4564 = vadd.xlane.f32.xlu0 %v4478
          %v4565 = vpop.xlane.xlu0 %4564
          %4566 = vadd.xlane.f32.xlu0 %v4479
          %v4567 = vpop.xlane.xlu0 %4566
          %4568 = vadd.xlane.f32.xlu0 %v4480
          %v4569 = vpop.xlane.xlu0 %4568
          %4570 = vadd.xlane.f32.xlu0 %v4481
          %v4571 = vpop.xlane.xlu0 %4570
          %4572 = vadd.xlane.f32.xlu0 %v4482
          %v4573 = vpop.xlane.xlu0 %4572
          %4574 = vadd.xlane.f32.xlu0 %v4483
          %v4575 = vpop.xlane.xlu0 %4574
          %4576 = vadd.xlane.f32.xlu0 %v4484
          %v4577 = vpop.xlane.xlu0 %4576
          %4578 = vadd.xlane.f32.xlu0 %v4485
          %v4579 = vpop.xlane.xlu0 %4578
          %4580 = vadd.xlane.f32.xlu0 %v4486
          %v4581 = vpop.xlane.xlu0 %4580
          %4582 = vadd.xlane.f32.xlu0 %v4487
          %v4583 = vpop.xlane.xlu0 %4582
          %4584 = vadd.xlane.f32.xlu0 %v4488
          %v4585 = vpop.xlane.xlu0 %4584
          %4586 = vadd.xlane.f32.xlu0 %v4489
          %v4587 = vpop.xlane.xlu0 %4586
          %4588 = vadd.xlane.f32.xlu0 %v4490
          %v4589 = vpop.xlane.xlu0 %4588
          %4590 = vadd.xlane.f32.xlu0 %v4491
          %v4591 = vpop.xlane.xlu0 %4590
          %4592 = vadd.xlane.f32.xlu0 %v4492
          %v4593 = vpop.xlane.xlu0 %4592
          %4594 = vadd.xlane.f32.xlu0 %v4493
          %v4595 = vpop.xlane.xlu0 %4594
          %4596 = vadd.xlane.f32.xlu0 %v4494
          %v4597 = vpop.xlane.xlu0 %4596
          %4598 = vadd.xlane.f32.xlu0 %v4495
          %v4599 = vpop.xlane.xlu0 %4598
          %4600 = vadd.xlane.f32.xlu0 %v4496
          %v4601 = vpop.xlane.xlu0 %4600
          %4602 = vadd.xlane.f32.xlu0 %v4497
          %v4603 = vpop.xlane.xlu0 %4602
          %4604 = vadd.xlane.f32.xlu0 %v4498
          %v4605 = vpop.xlane.xlu0 %4604
          %4606 = vadd.xlane.f32.xlu0 %v4499
          %v4607 = vpop.xlane.xlu0 %4606
          %4608 = vadd.xlane.f32.xlu0 %v4500
          %v4609 = vpop.xlane.xlu0 %4608
          %4610 = vadd.xlane.f32.xlu0 %v4501
          %v4611 = vpop.xlane.xlu0 %4610
          %4612 = vadd.xlane.f32.xlu0 %v4502
          %v4613 = vpop.xlane.xlu0 %4612
          %4614 = vadd.xlane.f32.xlu0 %v4503
          %v4615 = vpop.xlane.xlu0 %4614
          %4616 = vadd.xlane.f32.xlu0 %v4504
          %v4617 = vpop.xlane.xlu0 %4616
          %4618 = vadd.xlane.f32.xlu0 %v4505
          %v4619 = vpop.xlane.xlu0 %4618
          %4620 = vadd.xlane.f32.xlu0 %v4506
          %v4621 = vpop.xlane.xlu0 %4620
          %4622 = vadd.xlane.f32.xlu0 %v4507
          %v4623 = vpop.xlane.xlu0 %4622
          %4624 = vadd.xlane.f32.xlu0 %v4508
          %v4625 = vpop.xlane.xlu0 %4624
          %4626 = vadd.xlane.f32.xlu0 %v4509
          %v4627 = vpop.xlane.xlu0 %4626
          %4628 = vadd.xlane.f32.xlu0 %v4510
          %v4629 = vpop.xlane.xlu0 %4628
          %4630 = vadd.xlane.f32.xlu0 %v4511
          %v4631 = vpop.xlane.xlu0 %4630
          %4632 = vadd.xlane.f32.xlu0 %v4512
          %v4633 = vpop.xlane.xlu0 %4632
          %4634 = vadd.xlane.f32.xlu0 %v4513
          %v4635 = vpop.xlane.xlu0 %4634
          %4636 = vadd.xlane.f32.xlu0 %v4514
          %v4637 = vpop.xlane.xlu0 %4636
          %4638 = vadd.xlane.f32.xlu0 %v4515
          %v4639 = vpop.xlane.xlu0 %4638
          %4640 = vadd.xlane.f32.xlu0 %v4516
          %v4641 = vpop.xlane.xlu0 %4640
          %4642 = vadd.xlane.f32.xlu0 %v4517
          %v4643 = vpop.xlane.xlu0 %4642
          %4644 = vadd.xlane.f32.xlu0 %v4518
          %v4645 = vpop.xlane.xlu0 %4644
          %4646 = vadd.xlane.f32.xlu0 %v4519
          %v4647 = vpop.xlane.xlu0 %4646
          %v4648 = vtanh.pop %v4521
          %v4649 = vtanh.pop %v4523
          %v4650 = vtanh.pop %v4525
          %v4651 = vtanh.pop %v4527
          %v4652 = vtanh.pop %v4529
          %v4653 = vtanh.pop %v4531
          %v4654 = vtanh.pop %v4533
          %v4655 = vtanh.pop %v4535
          %v4656 = vtanh.pop %v4537
          %v4657 = vtanh.pop %v4539
          %v4658 = vtanh.pop %v4541
          %v4659 = vtanh.pop %v4543
          %v4660 = vtanh.pop %v4545
          %v4661 = vtanh.pop %v4547
          %v4662 = vtanh.pop %v4549
          %v4663 = vtanh.pop %v4551
          %v4664 = vtanh.pop %v4553
          %v4665 = vtanh.pop %v4555
          %v4666 = vtanh.pop %v4557
          %v4667 = vtanh.pop %v4559
          %v4668 = vtanh.pop %v4561
          %v4669 = vtanh.pop %v4563
          %v4670 = vtanh.pop %v4565
          %v4671 = vtanh.pop %v4567
          %v4672 = vtanh.pop %v4569
          %v4673 = vtanh.pop %v4571
          %v4674 = vtanh.pop %v4573
          %v4675 = vtanh.pop %v4575
          %v4676 = vtanh.pop %v4577
          %v4677 = vtanh.pop %v4579
          %v4678 = vtanh.pop %v4581
          %v4679 = vtanh.pop %v4583
          %v4680 = vtanh.pop %v4585
          %v4681 = vtanh.pop %v4587
          %v4682 = vtanh.pop %v4589
          %v4683 = vtanh.pop %v4591
          %v4684 = vtanh.pop %v4593
          %v4685 = vtanh.pop %v4595
          %v4686 = vtanh.pop %v4597
          %v4687 = vtanh.pop %v4599
          %v4688 = vtanh.pop %v4601
          %v4689 = vtanh.pop %v4603
          %v4690 = vtanh.pop %v4605
          %v4691 = vtanh.pop %v4607
          %v4692 = vtanh.pop %v4609
          %v4693 = vtanh.pop %v4611
          %v4694 = vtanh.pop %v4613
          %v4695 = vtanh.pop %v4615
          %v4696 = vtanh.pop %v4617
          %v4697 = vtanh.pop %v4619
          %v4698 = vtanh.pop %v4621
          %v4699 = vtanh.pop %v4623
          %v4700 = vtanh.pop %v4625
          %v4701 = vtanh.pop %v4627
          %v4702 = vtanh.pop %v4629
          %v4703 = vtanh.pop %v4631
          %v4704 = vtanh.pop %v4633
          %v4705 = vtanh.pop %v4635
          %v4706 = vtanh.pop %v4637
          %v4707 = vtanh.pop %v4639
          %v4708 = vtanh.pop %v4641
          %v4709 = vtanh.pop %v4643
          %v4710 = vtanh.pop %v4645
          %v4711 = vtanh.pop %v4647
          %v4712 = vlaneseq
          %v4713 = vand.u32 %v4712, 127
          %vm4714 = vcmp.eq.s32.totalorder %v4713, 127
          %v4715 = vmul.f32 %v4385, %v4648
          %v4716 = vmul.f32 %v4386, %v4649
          %v4717 = vmul.f32 %v4387, %v4650
          %v4718 = vmul.f32 %v4388, %v4651
          %v4719 = vmul.f32 %v4389, %v4652
          %v4720 = vmul.f32 %v4390, %v4653
          %v4721 = vmul.f32 %v4391, %v4654
          %v4722 = vmul.f32 %v4392, %v4655
          %v4723 = vmul.f32 %v4393, %v4656
          %v4724 = vmul.f32 %v4394, %v4657
          %v4725 = vmul.f32 %v4395, %v4658
          %v4726 = vmul.f32 %v4396, %v4659
          %v4727 = vmul.f32 %v4397, %v4660
          %v4728 = vmul.f32 %v4398, %v4661
          %v4729 = vmul.f32 %v4399, %v4662
          %v4730 = vmul.f32 %v4400, %v4663
          %v4731 = vmul.f32 %v4401, %v4664
          %v4732 = vmul.f32 %v4402, %v4665
          %v4733 = vmul.f32 %v4403, %v4666
          %v4734 = vmul.f32 %v4404, %v4667
          %v4735 = vmul.f32 %v4405, %v4668
          %v4736 = vmul.f32 %v4406, %v4669
          %v4737 = vmul.f32 %v4407, %v4670
          %v4738 = vmul.f32 %v4408, %v4671
          %v4739 = vmul.f32 %v4409, %v4672
          %v4740 = vmul.f32 %v4410, %v4673
          %v4741 = vmul.f32 %v4411, %v4674
          %v4742 = vmul.f32 %v4412, %v4675
          %v4743 = vmul.f32 %v4413, %v4676
          %v4744 = vmul.f32 %v4414, %v4677
          %v4745 = vmul.f32 %v4415, %v4678
          %v4746 = vmul.f32 %v4416, %v4679
          %v4747 = vmul.f32 %v4417, %v4680
          %v4748 = vmul.f32 %v4418, %v4681
          %v4749 = vmul.f32 %v4419, %v4682
          %v4750 = vmul.f32 %v4420, %v4683
          %v4751 = vmul.f32 %v4421, %v4684
          %v4752 = vmul.f32 %v4422, %v4685
          %v4753 = vmul.f32 %v4423, %v4686
          %v4754 = vmul.f32 %v4424, %v4687
          %v4755 = vmul.f32 %v4425, %v4688
          %v4756 = vmul.f32 %v4426, %v4689
          %v4757 = vmul.f32 %v4427, %v4690
          %v4758 = vmul.f32 %v4428, %v4691
          %v4759 = vmul.f32 %v4429, %v4692
          %v4760 = vmul.f32 %v4430, %v4693
          %v4761 = vmul.f32 %v4431, %v4694
          %v4762 = vmul.f32 %v4432, %v4695
          %v4763 = vmul.f32 %v4433, %v4696
          %v4764 = vmul.f32 %v4434, %v4697
          %v4765 = vmul.f32 %v4435, %v4698
          %v4766 = vmul.f32 %v4436, %v4699
          %v4767 = vmul.f32 %v4437, %v4700
          %v4768 = vmul.f32 %v4438, %v4701
          %v4769 = vmul.f32 %v4439, %v4702
          %v4770 = vmul.f32 %v4440, %v4703
          %v4771 = vmul.f32 %v4441, %v4704
          %v4772 = vmul.f32 %v4442, %v4705
          %v4773 = vmul.f32 %v4443, %v4706
          %v4774 = vmul.f32 %v4444, %v4707
          %v4775 = vmul.f32 %v4445, %v4708
          %v4776 = vmul.f32 %v4446, %v4709
          %v4777 = vmul.f32 %v4447, %v4710
          %v4778 = vmul.f32 %v4448, %v4711
          %v4779 = vsel %vm4714, %v4648, %v4715
          %v4780 = vsel %vm4714, %v4649, %v4716
          %v4781 = vsel %vm4714, %v4650, %v4717
          %v4782 = vsel %vm4714, %v4651, %v4718
          %v4783 = vsel %vm4714, %v4652, %v4719
          %v4784 = vsel %vm4714, %v4653, %v4720
          %v4785 = vsel %vm4714, %v4654, %v4721
          %v4786 = vsel %vm4714, %v4655, %v4722
          %v4787 = vsel %vm4714, %v4656, %v4723
          %v4788 = vsel %vm4714, %v4657, %v4724
          %v4789 = vsel %vm4714, %v4658, %v4725
          %v4790 = vsel %vm4714, %v4659, %v4726
          %v4791 = vsel %vm4714, %v4660, %v4727
          %v4792 = vsel %vm4714, %v4661, %v4728
          %v4793 = vsel %vm4714, %v4662, %v4729
          %v4794 = vsel %vm4714, %v4663, %v4730
          %v4795 = vsel %vm4714, %v4664, %v4731
          %v4796 = vsel %vm4714, %v4665, %v4732
          %v4797 = vsel %vm4714, %v4666, %v4733
          %v4798 = vsel %vm4714, %v4667, %v4734
          %v4799 = vsel %vm4714, %v4668, %v4735
          %v4800 = vsel %vm4714, %v4669, %v4736
          %v4801 = vsel %vm4714, %v4670, %v4737
          %v4802 = vsel %vm4714, %v4671, %v4738
          %v4803 = vsel %vm4714, %v4672, %v4739
          %v4804 = vsel %vm4714, %v4673, %v4740
          %v4805 = vsel %vm4714, %v4674, %v4741
          %v4806 = vsel %vm4714, %v4675, %v4742
          %v4807 = vsel %vm4714, %v4676, %v4743
          %v4808 = vsel %vm4714, %v4677, %v4744
          %v4809 = vsel %vm4714, %v4678, %v4745
          %v4810 = vsel %vm4714, %v4679, %v4746
          %v4811 = vsel %vm4714, %v4680, %v4747
          %v4812 = vsel %vm4714, %v4681, %v4748
          %v4813 = vsel %vm4714, %v4682, %v4749
          %v4814 = vsel %vm4714, %v4683, %v4750
          %v4815 = vsel %vm4714, %v4684, %v4751
          %v4816 = vsel %vm4714, %v4685, %v4752
          %v4817 = vsel %vm4714, %v4686, %v4753
          %v4818 = vsel %vm4714, %v4687, %v4754
          %v4819 = vsel %vm4714, %v4688, %v4755
          %v4820 = vsel %vm4714, %v4689, %v4756
          %v4821 = vsel %vm4714, %v4690, %v4757
          %v4822 = vsel %vm4714, %v4691, %v4758
          %v4823 = vsel %vm4714, %v4692, %v4759
          %v4824 = vsel %vm4714, %v4693, %v4760
          %v4825 = vsel %vm4714, %v4694, %v4761
          %v4826 = vsel %vm4714, %v4695, %v4762
          %v4827 = vsel %vm4714, %v4696, %v4763
          %v4828 = vsel %vm4714, %v4697, %v4764
          %v4829 = vsel %vm4714, %v4698, %v4765
          %v4830 = vsel %vm4714, %v4699, %v4766
          %v4831 = vsel %vm4714, %v4700, %v4767
          %v4832 = vsel %vm4714, %v4701, %v4768
          %v4833 = vsel %vm4714, %v4702, %v4769
          %v4834 = vsel %vm4714, %v4703, %v4770
          %v4835 = vsel %vm4714, %v4704, %v4771
          %v4836 = vsel %vm4714, %v4705, %v4772
          %v4837 = vsel %vm4714, %v4706, %v4773
          %v4838 = vsel %vm4714, %v4707, %v4774
          %v4839 = vsel %vm4714, %v4708, %v4775
          %v4840 = vsel %vm4714, %v4709, %v4776
          %v4841 = vsel %vm4714, %v4710, %v4777
          %v4842 = vsel %vm4714, %v4711, %v4778
          %4843 = vst [vmem:[%s323] sm:$0xff] %v4779
          %4844 = vst [vmem:[%s323 + $0x8] sm:$0xff] %v4780
          %4845 = vst [vmem:[%s323 + $0x10] sm:$0xff] %v4781
          %4846 = vst [vmem:[%s323 + $0x18] sm:$0xff] %v4782
          %4847 = vst [vmem:[%s323 + $0x20] sm:$0xff] %v4783
          %4848 = vst [vmem:[%s323 + $0x28] sm:$0xff] %v4784
          %4849 = vst [vmem:[%s323 + $0x30] sm:$0xff] %v4785
          %4850 = vst [vmem:[%s323 + $0x38] sm:$0xff] %v4786
          %4851 = vst [vmem:[%s323 + $0x40] sm:$0xff] %v4787
          %4852 = vst [vmem:[%s323 + $0x48] sm:$0xff] %v4788
          %4853 = vst [vmem:[%s323 + $0x50] sm:$0xff] %v4789
          %4854 = vst [vmem:[%s323 + $0x58] sm:$0xff] %v4790
          %4855 = vst [vmem:[%s323 + $0x60] sm:$0xff] %v4791
          %4856 = vst [vmem:[%s323 + $0x68] sm:$0xff] %v4792
          %4857 = vst [vmem:[%s323 + $0x70] sm:$0xff] %v4793
          %4858 = vst [vmem:[%s323 + $0x78] sm:$0xff] %v4794
          %4859 = vst [vmem:[%s323 + $0x80] sm:$0xff] %v4795
          %4860 = vst [vmem:[%s323 + $0x88] sm:$0xff] %v4796
          %4861 = vst [vmem:[%s323 + $0x90] sm:$0xff] %v4797
          %4862 = vst [vmem:[%s323 + $0x98] sm:$0xff] %v4798
          %4863 = vst [vmem:[%s323 + $0xa0] sm:$0xff] %v4799
          %4864 = vst [vmem:[%s323 + $0xa8] sm:$0xff] %v4800
          %4865 = vst [vmem:[%s323 + $0xb0] sm:$0xff] %v4801
          %4866 = vst [vmem:[%s323 + $0xb8] sm:$0xff] %v4802
          %4867 = vst [vmem:[%s323 + $0xc0] sm:$0xff] %v4803
          %4868 = vst [vmem:[%s323 + $0xc8] sm:$0xff] %v4804
          %4869 = vst [vmem:[%s323 + $0xd0] sm:$0xff] %v4805
          %4870 = vst [vmem:[%s323 + $0xd8] sm:$0xff] %v4806
          %4871 = vst [vmem:[%s323 + $0xe0] sm:$0xff] %v4807
          %4872 = vst [vmem:[%s323 + $0xe8] sm:$0xff] %v4808
          %4873 = vst [vmem:[%s323 + $0xf0] sm:$0xff] %v4809
          %4874 = vst [vmem:[%s323 + $0xf8] sm:$0xff] %v4810
          %4875 = vst [vmem:[%s323 + $0x100] sm:$0xff] %v4811
          %4876 = vst [vmem:[%s323 + $0x108] sm:$0xff] %v4812
          %4877 = vst [vmem:[%s323 + $0x110] sm:$0xff] %v4813
          %4878 = vst [vmem:[%s323 + $0x118] sm:$0xff] %v4814
          %4879 = vst [vmem:[%s323 + $0x120] sm:$0xff] %v4815
          %4880 = vst [vmem:[%s323 + $0x128] sm:$0xff] %v4816
          %4881 = vst [vmem:[%s323 + $0x130] sm:$0xff] %v4817
          %4882 = vst [vmem:[%s323 + $0x138] sm:$0xff] %v4818
          %4883 = vst [vmem:[%s323 + $0x140] sm:$0xff] %v4819
          %4884 = vst [vmem:[%s323 + $0x148] sm:$0xff] %v4820
          %4885 = vst [vmem:[%s323 + $0x150] sm:$0xff] %v4821
          %4886 = vst [vmem:[%s323 + $0x158] sm:$0xff] %v4822
          %4887 = vst [vmem:[%s323 + $0x160] sm:$0xff] %v4823
          %4888 = vst [vmem:[%s323 + $0x168] sm:$0xff] %v4824
          %4889 = vst [vmem:[%s323 + $0x170] sm:$0xff] %v4825
          %4890 = vst [vmem:[%s323 + $0x178] sm:$0xff] %v4826
          %4891 = vst [vmem:[%s323 + $0x180] sm:$0xff] %v4827
          %4892 = vst [vmem:[%s323 + $0x188] sm:$0xff] %v4828
          %4893 = vst [vmem:[%s323 + $0x190] sm:$0xff] %v4829
          %4894 = vst [vmem:[%s323 + $0x198] sm:$0xff] %v4830
          %4895 = vst [vmem:[%s323 + $0x1a0] sm:$0xff] %v4831
          %4896 = vst [vmem:[%s323 + $0x1a8] sm:$0xff] %v4832
          %4897 = vst [vmem:[%s323 + $0x1b0] sm:$0xff] %v4833
          %4898 = vst [vmem:[%s323 + $0x1b8] sm:$0xff] %v4834
          %4899 = vst [vmem:[%s323 + $0x1c0] sm:$0xff] %v4835
          %4900 = vst [vmem:[%s323 + $0x1c8] sm:$0xff] %v4836
          %4901 = vst [vmem:[%s323 + $0x1d0] sm:$0xff] %v4837
          %4902 = vst [vmem:[%s323 + $0x1d8] sm:$0xff] %v4838
          %4903 = vst [vmem:[%s323 + $0x1e0] sm:$0xff] %v4839
          %4904 = vst [vmem:[%s323 + $0x1e8] sm:$0xff] %v4840
          %4905 = vst [vmem:[%s323 + $0x1f0] sm:$0xff] %v4841
          %4906 = vst [vmem:[%s323 + $0x1f8] sm:$0xff] %v4842
        $region64: #{tpu_custom_call.1} parent=39 // pred_fallthru
          _
        %s4907 = sand.u32 %s166, 1
        %s4908 = scalar_lea.sflag [#allocation4], %s4907
        %s4909 = sand.u32 %s166, 1
        %s4910 = smul.addr %s4909, 512
        %s4911 = scalar_lea.vmem [#allocation10], %s4910
        // Predicated region
        $region65: #{tpu_custom_call.1} parent=39 // pred_check
          %p4912 = pneg %p176
        $region66: #{tpu_custom_call.1} parent=39 // pred_check_branch
          %4914 = sbr.rel (%p4912) target = $region68
        $region67: #{tpu_custom_call.1} parent=39 // pred_region
          %s4915 = smul.u32 64, %s28
          %s4917 = ssub.s32 8192, 8192
          %4918 = vsyncadd %s4908, %s4917
          %s4919 = smul.addr %s4915, 128
          %s4920 = scalar_lea.hbm %s5, %s4919
          %s4921 = sshll.u32 %s4911, 4
          %s4922 = int_to_ptr.vmem [resolvable:$true] %s4921
          %4927 = dma.vmem_to_hbm [thread:$0]  %s4922, 8192, %s4920, %s4908, 128, 128, 8
        $region68: #{tpu_custom_call.1} parent=39 // pred_fallthru
          _
      $region40: #{tpu_custom_call.1} parent=5 // pred_fallthru
        _
      %p4928 = scmp.le.s32.totalorder 2, %s19
      // Predicated region
      $region69: #{tpu_custom_call.1} parent=5 // pred_check
        %p4929 = pneg %p4928
      $region70: #{tpu_custom_call.1} parent=5 // pred_check_branch
        %4931 = sbr.rel (%p4929) target = $region72
      $region71: #{tpu_custom_call.1} parent=5 // pred_region
        %s4932 = ssub.s32 %s19, 2
        // Predicated region
        $region73: #{tpu_custom_call.1} parent=71 // pred_check
          %p4933 = pneg %p182
        $region74: #{tpu_custom_call.1} parent=71 // pred_check_branch
          %4935 = sbr.rel (%p4933) target = $region76
        $region75: #{tpu_custom_call.1} parent=71 // pred_region
          %s4936 = sand.u32 %s167, 1
          %s4937 = scalar_lea.sflag [#allocation4], %s4936
          %s4938 = sand.u32 %s167, 1
          %s4939 = smul.addr %s4938, 512
          %s4940 = scalar_lea.vmem [#allocation10], %s4939
          %4941 = dma.done %s4937, 8192
        $region76: #{tpu_custom_call.1} parent=71 // pred_fallthru
          _
      $region72: #{tpu_custom_call.1} parent=5 // pred_fallthru
        _
    $region6: #{tpu_custom_call.1} parent=1 // loop_footer
      %s23 = sadd.s32 1, %s19
    $region7: #{tpu_custom_call.1} parent=1 // loop_footer_branch
      %18 = sbr.rel target = $region3
    $region8: #{tpu_custom_call.1} parent=1 // loop_exit
      _
    %4942 = vsyncpa [#allocation3], 1
    %s4943 = scalar_lea.sflag [#allocation3], 1
    %4944 = vsyncpa %s4943, 1
    %4945 = vsyncpa [#allocation6], 1
    %s4946 = scalar_lea.sflag [#allocation6], 1
    %4947 = vsyncpa %s4946, 1
    %4948 = vsyncpa [#allocation9], 1
    %4949 = vsyncpa [#allocation4], 1
    %s4950 = scalar_lea.sflag [#allocation4], 1
    %4951 = vsyncpa %s4950, 1

</llo_original>
